<compile_context>
chip_gen: v5e
topology: v5e:2x2
jax: 0.10.0
libtpu: 0.0.40
codegen_flags: <defaults>
</compile_context>

<pallas_src>
import functools

import numpy as np
import jax
import jax.numpy as jnp
from jax import lax
from jax.experimental import pallas as pl
from jax.experimental.pallas import tpu as pltpu


def _round_up(n, m):
    return ((n + m - 1) // m) * m


def _pick_nb(N, HW, min_lanes=512, max_lanes=2048):
    """Images per grid step: lane-width >= min_lanes when possible, capped so the
    25-tap im2col temporary stays VMEM-friendly (v7x), and Nb | N."""
    nb_max = max(1, min(N, max_lanes // max(HW, 1)))
    nb_min = min(nb_max, max(1, -(-min_lanes // max(HW, 1))))
    for nb in range(nb_min, nb_max + 1):          # smallest Nb that is wide enough
        if N % nb == 0:                            # -> most grid steps (megacore)
            return nb
    for nb in range(nb_min - 1, 0, -1):            # fall back: widest that divides N
        if N % nb == 0:
            return nb
    return 1


def _make_masks(Nb, H, W):
    """(25, Nb*H*W) float 1/0: validity of tap (dy,dx) in -2..2 for every lane.
    Also prevents cross-image bleed when Nb images share the lane axis."""
    HW = H * W
    l = np.arange(Nb * HW)
    h = (l % HW) // W
    w = l % W
    rows = []
    for dy in range(-2, 3):
        for dx in range(-2, 3):
            rows.append((h + dy >= 0) & (h + dy < H) & (w + dx >= 0) & (w + dx < W))
    return np.stack(rows, axis=0).astype(np.float32)


# ----------------------------------------------------------------------------
# Fused Pallas kernel: whole Inception-A block for Nb batch images per step
# ----------------------------------------------------------------------------
def _inception_a_kernel(x_ref, mask_ref, wstem_ref, bstem_ref, w3_ref, w5_ref,
                        wp_ref, btail_ref, o_ref, bufx, buf2, buf3, *,
                        Nb, H, W, bo, bo_p, bo2_p, halo):
    HW = H * W
    L = Nb * HW
    Cin = x_ref.shape[1]
    cdt = bufx.dtype                                # compute dtype (f32 or bf16)
    width = 2 * halo + L

    # Zero ONLY the halo strips (multiply-masked conv taps read into them).
    # Tiny (a few vregs) and unconditional -> safe on any core / start step.
    for buf, c in ((bufx, Cin), (buf2, bo_p), (buf3, bo2_p)):
        buf[:, 0:halo] = jnp.zeros((c, halo), cdt)
        buf[:, halo + L:width] = jnp.zeros((c, halo), cdt)

    def mrow(dy, dx):                               # precomputed validity row
        idx = (dy + 2) * 5 + (dx + 2)
        return mask_ref[idx:idx + 1, :]             # (1, L), 1.0 valid / 0.0 invalid

    # ---- stage the Nb input images side by side on the lane axis -------------
    for j in range(Nb):
        bufx[:, halo + j * HW: halo + (j + 1) * HW] = x_ref[j].astype(cdt)
    x_flat = bufx[:, halo:halo + L]                 # (Cin, L)

    # ---- stem: the three leading 1x1 convs (+BN+ReLU) fused into one matmul --
    z = jnp.dot(wstem_ref[...], x_flat, preferred_element_type=jnp.float32)
    z = jnp.maximum(z + bstem_ref[...], 0.0)        # (bo + bo_p + bo2_p, L) f32
    y1 = z[0:bo]                                    # branch1 output
    buf2[:, halo:halo + L] = z[bo:bo + bo_p].astype(cdt)            # branch2 1x1
    buf3[:, halo:halo + L] = z[bo + bo_p:bo + bo_p + bo2_p].astype(cdt)  # branch3 1x1
    btail = btail_ref[...]                          # (3*bo, 1) f32

    def im2col(buf, c, K):
        # (K*K*c, L) patch matrix for a stride-1 'same' KxK conv.
        # Taps are static slices of the halo buffer; invalid lanes are zeroed by
        # the precomputed mask (halo strips are already zero, rest is finite).
        p = (K - 1) // 2
        cols = []
        for dy in range(-p, p + 1):
            for dx in range(-p, p + 1):
                s = halo + dy * W + dx
                cols.append(buf[0:c, s:s + L] * mrow(dy, dx))
        return jnp.concatenate(cols, axis=0)        # sublane-aligned concat

    # ---- branch2: 3x3 conv (+BN+ReLU) via one im2col matmul ------------------
    y2 = jnp.dot(w3_ref[...], im2col(buf2, bo_p, 3),
                 preferred_element_type=jnp.float32)
    y2 = jnp.maximum(y2 + btail[0:bo], 0.0)

    # ---- branch3: 5x5 conv (+BN+ReLU) via one im2col matmul ------------------
    y3 = jnp.dot(w5_ref[...], im2col(buf3, bo2_p, 5),
                 preferred_element_type=jnp.float32)
    y3 = jnp.maximum(y3 + btail[bo:2 * bo], 0.0)

    # ---- branch4: 3x3/s1/p1 max-pool, then 1x1 conv (+BN+ReLU) ---------------
    pooled = x_flat
    for dy in range(-1, 2):
        for dx in range(-1, 2):
            if dy == 0 and dx == 0:
                continue
            s = halo + dy * W + dx
            tap = bufx[:, s:s + L]
            pooled = jnp.maximum(pooled,
                                 jnp.where(mrow(dy, dx) > 0, tap, -jnp.inf))
    y4 = jnp.dot(wp_ref[...], pooled, preferred_element_type=jnp.float32)
    y4 = jnp.maximum(y4 + btail[2 * bo:3 * bo], 0.0)

    # ---- channel concat expressed as direct, aligned slice stores ------------
    for cb, y in ((0, y1), (bo, y2), (2 * bo, y3), (3 * bo, y4)):
        yc = y.astype(o_ref.dtype)                  # (bo, L)
        for j in range(Nb):
            o_ref[j, cb:cb + bo, :] = yc[:, j * HW:(j + 1) * HW]


# ----------------------------------------------------------------------------
# Parameter construction and packing into kernel-ready matrices (runs ONCE)
# ----------------------------------------------------------------------------
def _fold_bn(conv_bias, gamma, beta, running_mean, running_var, eps=1e-5):
    scale = gamma / jnp.sqrt(running_var + eps)
    bias = (conv_bias - running_mean) * scale + beta
    return scale.astype(jnp.float32), bias.astype(jnp.float32)


def make_conv(key, K, cin, cout):
    kw, kb = jax.random.split(key)
    # weight in HWIO; PyTorch stores OIHW - same values, different layout.
    w = jax.random.normal(kw, (K, K, cin, cout), jnp.float32) * 0.1
    b = jax.random.normal(kb, (cout,), jnp.float32) * 0.1
    gamma = jnp.ones((cout,), jnp.float32)
    beta = jnp.zeros((cout,), jnp.float32)
    rmean = jnp.zeros((cout,), jnp.float32)
    rvar = jnp.ones((cout,), jnp.float32)
    scale, bias = _fold_bn(b, gamma, beta, rmean, rvar)
    return {"w": w, "scale": scale, "bias": bias}


def init_inception_a(key, in_channels, out_channels=128):
    assert out_channels % 4 == 0
    bo = out_channels // 4
    ks = jax.random.split(key, 6)
    return {
        "b1_1x1": make_conv(ks[0], 1, in_channels, bo),
        "b2_1x1": make_conv(ks[1], 1, in_channels, bo),
        "b2_3x3": make_conv(ks[2], 3, bo, bo),
        "b3_1x1": make_conv(ks[3], 1, in_channels, bo // 2),
        "b3_5x5": make_conv(ks[4], 5, bo // 2, bo),
        "b4_1x1": make_conv(ks[5], 1, in_channels, bo),
    }


def pack_inception_params(params, compute_dtype=jnp.float32):
    """Fold BN scale into the weights, reshape to (Cout, K*K*Cin) matmul matrices
    and cast to the matmul operand dtype.  Call ONCE at init (hoisted out of the
    forward pass)."""
    p1, p2a, p2b = params["b1_1x1"], params["b2_1x1"], params["b2_3x3"]
    p3a, p3b, p4 = params["b3_1x1"], params["b3_5x5"], params["b4_1x1"]
    bo = p1["w"].shape[-1]
    bo2 = p3a["w"].shape[-1]
    bo_p = _round_up(bo, 8)      # intermediate channel counts padded to 8 so the
    bo2_p = _round_up(bo2, 8)    # in-kernel im2col concat stays sublane-aligned

    def prep_w(p, cin_pad=None):
        w = p["w"] * p["scale"]                      # fold BN scale (HWIO * Cout)
        K, _, cin, cout = w.shape
        w = jnp.transpose(w, (3, 0, 1, 2))           # (Cout, K, K, Cin)
        if cin_pad is not None and cin_pad > cin:
            w = jnp.pad(w, ((0, 0), (0, 0), (0, 0), (0, cin_pad - cin)))
        return w.reshape(cout, -1)

    def pad_rows(a, n):
        extra = n - a.shape[0]
        if extra == 0:
            return a
        return jnp.pad(a, ((0, extra),) + ((0, 0),) * (a.ndim - 1))

    wstem = jnp.concatenate([prep_w(p1),
                             pad_rows(prep_w(p2a), bo_p),
                             pad_rows(prep_w(p3a), bo2_p)], axis=0)
    bstem = jnp.concatenate([p1["bias"],
                             pad_rows(p2a["bias"], bo_p),
                             pad_rows(p3a["bias"], bo2_p)])[:, None]
    w3 = prep_w(p2b, cin_pad=bo_p)                   # (bo, 9*bo_p)
    w5 = prep_w(p3b, cin_pad=bo2_p)                  # (bo, 25*bo2_p)
    wp = prep_w(p4)                                  # (bo, Cin)
    btail = jnp.concatenate([p2b["bias"], p3b["bias"], p4["bias"]])[:, None]
    return dict(wstem=wstem.astype(compute_dtype), bstem=bstem.astype(jnp.float32),
                w3=w3.astype(compute_dtype), w5=w5.astype(compute_dtype),
                wp=wp.astype(compute_dtype), btail=btail.astype(jnp.float32))


# ----------------------------------------------------------------------------
# Forward pass (accepts / returns NCHW like the PyTorch module)
# ----------------------------------------------------------------------------
def inception_block_a(packed, x_nchw):
    N, Cin, H, W = x_nchw.shape
    HW = H * W
    wstem, bstem = packed["wstem"], packed["bstem"]
    w3, w5, wp, btail = packed["w3"], packed["w5"], packed["wp"], packed["btail"]
    compute_dtype = wstem.dtype

    bo = wp.shape[0]
    bo_p = w3.shape[1] // 9
    bo2_p = w5.shape[1] // 25
    assert wstem.shape[0] == bo + bo_p + bo2_p
    cout = 4 * bo

    Nb = _pick_nb(N, HW)                             # images per grid step
    G = N // Nb
    L = Nb * HW
    halo = _round_up(2 * W + 2, 128)                 # covers the 5x5 conv's shifts

    # trace-time constant: tap-validity masks, shared by every grid step
    mask = jnp.asarray(_make_masks(Nb, H, W).astype(
        np.dtype(jnp.dtype(compute_dtype).name)))    # (25, L)

    x = x_nchw.reshape(N, Cin, HW)                   # free reshape, stays NCHW

    kernel = functools.partial(_inception_a_kernel, Nb=Nb, H=H, W=W, bo=bo,
                               bo_p=bo_p, bo2_p=bo2_p, halo=halo)

    def _full(a):
        nd = a.ndim
        return pl.BlockSpec(a.shape, lambda n: (0,) * nd)   # fetched once

    out = pl.pallas_call(
        kernel,
        out_shape=jax.ShapeDtypeStruct((N, cout, HW), x_nchw.dtype),
        grid_spec=pltpu.PrefetchScalarGridSpec(
            num_scalar_prefetch=0,
            grid=(G,),
            in_specs=[
                pl.BlockSpec((Nb, Cin, HW), lambda n: (n, 0, 0)),
                _full(mask), _full(wstem), _full(bstem),
                _full(w3), _full(w5), _full(wp), _full(btail),
            ],
            out_specs=pl.BlockSpec((Nb, cout, HW), lambda n: (n, 0, 0)),
            scratch_shapes=[
                pltpu.VMEM((Cin, 2 * halo + L), compute_dtype),    # x / pool taps
                pltpu.VMEM((bo_p, 2 * halo + L), compute_dtype),   # branch2 1x1
                pltpu.VMEM((bo2_p, 2 * halo + L), compute_dtype),  # branch3 1x1
            ],
        ),
        compiler_params=pltpu.CompilerParams(
            dimension_semantics=("parallel",)),
    )(x, mask, wstem, bstem, w3, w5, wp, btail)
    return out.reshape(N, cout, H, W)


# ----------------------------------------------------------------------------
# Pure-JAX reference (correctness check for the Pallas kernel)
# ----------------------------------------------------------------------------
def _ref_conv_bn_relu(x, w, scale, bias, K):
    pad = (K - 1) // 2
    y = lax.conv_general_dilated(
        x, w, window_strides=(1, 1), padding=[(pad, pad), (pad, pad)],
        dimension_numbers=("NHWC", "HWIO", "NHWC"))
    return jnp.maximum(y * scale + bias, 0.0)


def inception_block_a_ref(params, x_nchw):
    x = jnp.transpose(x_nchw, (0, 2, 3, 1))
    p = params["b1_1x1"]
    b1 = _ref_conv_bn_relu(x, p["w"], p["scale"], p["bias"], 1)
    p = params["b2_1x1"]
    t = _ref_conv_bn_relu(x, p["w"], p["scale"], p["bias"], 1)
    p = params["b2_3x3"]
    b2 = _ref_conv_bn_relu(t, p["w"], p["scale"], p["bias"], 3)
    p = params["b3_1x1"]
    t = _ref_conv_bn_relu(x, p["w"], p["scale"], p["bias"], 1)
    p = params["b3_5x5"]
    b3 = _ref_conv_bn_relu(t, p["w"], p["scale"], p["bias"], 5)
    pooled = lax.reduce_window(x, -jnp.inf, lax.max,
                               (1, 3, 3, 1), (1, 1, 1, 1),
                               [(0, 0), (1, 1), (1, 1), (0, 0)])
    p = params["b4_1x1"]
    b4 = _ref_conv_bn_relu(pooled, p["w"], p["scale"], p["bias"], 1)
    out = jnp.concatenate([b1, b2, b3, b4], axis=-1)
    return jnp.transpose(out, (0, 3, 1, 2))


if __name__ == "__main__":
    key = jax.random.PRNGKey(0)
    k_params, k_x = jax.random.split(key)

    N, Cin, H, W = 4, 4, 16, 16        # N=4 -> Nb=2 images per step, 2 grid steps
    out_channels = 32                  # divisible by 4 -> branch_out = 8

    params = init_inception_a(k_params, Cin, out_channels)
    x = jax.random.normal(k_x, (N, Cin, H, W), jnp.float32)   # NCHW input

    y_ref = inception_block_a_ref(params, x)

    # --- f32 matmul-operand path: tight tolerance vs the reference -----------
    packed_f32 = pack_inception_params(params, jnp.float32)   # packed ONCE
    y32 = jax.block_until_ready(jax.jit(inception_block_a)(packed_f32, x))
    assert y32.shape == (N, out_channels, H, W), y32.shape
    assert jnp.allclose(y32, y_ref, atol=1e-4, rtol=1e-4), \
        float(jnp.max(jnp.abs(y32 - y_ref)))

    # --- bf16 matmul-operand path (MXU-native on v5e/v6e/v7x), f32 accumulate -
    packed_bf16 = pack_inception_params(params, jnp.bfloat16)
    y16 = jax.block_until_ready(jax.jit(inception_block_a)(packed_bf16, x))
    assert jnp.allclose(y16, y_ref, atol=5e-2, rtol=5e-2), \
        float(jnp.max(jnp.abs(y16 - y_ref)))

    print("KERNEL_OK")
</pallas_src>

<mosaic_0001>
module attributes {stable_mosaic.version = 11 : i64} {
  func.func @_inception_a_kernel(%arg0: i32, %arg1: memref<2x4x256xf32, #tpu.memory_space<vmem>>, %arg2: memref<25x512xf32, #tpu.memory_space<vmem>>, %arg3: memref<24x4xf32, #tpu.memory_space<vmem>>, %arg4: memref<24x1xf32, #tpu.memory_space<vmem>>, %arg5: memref<8x72xf32, #tpu.memory_space<vmem>>, %arg6: memref<8x200xf32, #tpu.memory_space<vmem>>, %arg7: memref<8x4xf32, #tpu.memory_space<vmem>>, %arg8: memref<24x1xf32, #tpu.memory_space<vmem>>, %arg9: memref<2x32x256xf32, #tpu.memory_space<vmem>>, %arg10: memref<4x768xf32, #tpu.memory_space<vmem>>, %arg11: memref<8x768xf32, #tpu.memory_space<vmem>>, %arg12: memref<8x768xf32, #tpu.memory_space<vmem>>) attributes {dimension_semantics = [#tpu.dimension_semantics<parallel>], iteration_bounds = array<i64: 2>, scalar_prefetch = 0 : i64, scratch_operands = 3 : i64, tpu.core_type = #tpu.core_type<tc>, window_params = [{transform_indices = @transform_0, window_bounds = array<i64: 2, 4, 256>}, {pipeline_mode = #tpu.pipeline_mode<synchronous>, transform_indices = @transform_1, window_bounds = array<i64: 25, 512>}, {pipeline_mode = #tpu.pipeline_mode<synchronous>, transform_indices = @transform_2, window_bounds = array<i64: 24, 4>}, {pipeline_mode = #tpu.pipeline_mode<synchronous>, transform_indices = @transform_3, window_bounds = array<i64: 24, 1>}, {pipeline_mode = #tpu.pipeline_mode<synchronous>, transform_indices = @transform_4, window_bounds = array<i64: 8, 72>}, {pipeline_mode = #tpu.pipeline_mode<synchronous>, transform_indices = @transform_5, window_bounds = array<i64: 8, 200>}, {pipeline_mode = #tpu.pipeline_mode<synchronous>, transform_indices = @transform_6, window_bounds = array<i64: 8, 4>}, {pipeline_mode = #tpu.pipeline_mode<synchronous>, transform_indices = @transform_7, window_bounds = array<i64: 24, 1>}, {transform_indices = @transform_8, window_bounds = array<i64: 2, 32, 256>}]} {
    %cst = arith.constant 0.000000e+00 : f32
    %0 = vector.broadcast %cst : f32 to vector<4x128xf32>
    %c0 = arith.constant 0 : index
    %c0_0 = arith.constant 0 : index
    %1 = vector.load %arg10[%c0, %c0_0] : memref<4x768xf32, #tpu.memory_space<vmem>>, vector<4x128xf32>
    tpu.vector_store %arg10[%c0, %c0_0], %0 {strides = array<i32>} : memref<4x768xf32, #tpu.memory_space<vmem>>, vector<4x128xf32>,
    %cst_1 = arith.constant 0.000000e+00 : f32
    %2 = vector.broadcast %cst_1 : f32 to vector<4x128xf32>
    %c0_2 = arith.constant 0 : index
    %c640 = arith.constant 640 : index
    %3 = vector.load %arg10[%c0_2, %c640] : memref<4x768xf32, #tpu.memory_space<vmem>>, vector<4x128xf32>
    tpu.vector_store %arg10[%c0_2, %c640], %2 {strides = array<i32>} : memref<4x768xf32, #tpu.memory_space<vmem>>, vector<4x128xf32>,
    %cst_3 = arith.constant 0.000000e+00 : f32
    %4 = vector.broadcast %cst_3 : f32 to vector<8x128xf32>
    %c0_4 = arith.constant 0 : index
    %c0_5 = arith.constant 0 : index
    %5 = vector.load %arg11[%c0_4, %c0_5] : memref<8x768xf32, #tpu.memory_space<vmem>>, vector<8x128xf32>
    tpu.vector_store %arg11[%c0_4, %c0_5], %4 {strides = array<i32>} : memref<8x768xf32, #tpu.memory_space<vmem>>, vector<8x128xf32>,
    %cst_6 = arith.constant 0.000000e+00 : f32
    %6 = vector.broadcast %cst_6 : f32 to vector<8x128xf32>
    %c0_7 = arith.constant 0 : index
    %c640_8 = arith.constant 640 : index
    %7 = vector.load %arg11[%c0_7, %c640_8] : memref<8x768xf32, #tpu.memory_space<vmem>>, vector<8x128xf32>
    tpu.vector_store %arg11[%c0_7, %c640_8], %6 {strides = array<i32>} : memref<8x768xf32, #tpu.memory_space<vmem>>, vector<8x128xf32>,
    %cst_9 = arith.constant 0.000000e+00 : f32
    %8 = vector.broadcast %cst_9 : f32 to vector<8x128xf32>
    %c0_10 = arith.constant 0 : index
    %c0_11 = arith.constant 0 : index
    %9 = vector.load %arg12[%c0_10, %c0_11] : memref<8x768xf32, #tpu.memory_space<vmem>>, vector<8x128xf32>
    tpu.vector_store %arg12[%c0_10, %c0_11], %8 {strides = array<i32>} : memref<8x768xf32, #tpu.memory_space<vmem>>, vector<8x128xf32>,
    %cst_12 = arith.constant 0.000000e+00 : f32
    %10 = vector.broadcast %cst_12 : f32 to vector<8x128xf32>
    %c0_13 = arith.constant 0 : index
    %c640_14 = arith.constant 640 : index
    %11 = vector.load %arg12[%c0_13, %c640_14] : memref<8x768xf32, #tpu.memory_space<vmem>>, vector<8x128xf32>
    tpu.vector_store %arg12[%c0_13, %c640_14], %10 {strides = array<i32>} : memref<8x768xf32, #tpu.memory_space<vmem>>, vector<8x128xf32>,
    %c0_15 = arith.constant 0 : index
    %c0_16 = arith.constant 0 : index
    %c0_17 = arith.constant 0 : index
    %12 = vector.load %arg1[%c0_15, %c0_16, %c0_17] : memref<2x4x256xf32, #tpu.memory_space<vmem>>, vector<1x4x256xf32>
    %13 = vector.shape_cast %12 : vector<1x4x256xf32> to vector<4x256xf32>
    %c0_18 = arith.constant 0 : index
    %c128 = arith.constant 128 : index
    %14 = vector.load %arg10[%c0_18, %c128] : memref<4x768xf32, #tpu.memory_space<vmem>>, vector<4x256xf32>
    tpu.vector_store %arg10[%c0_18, %c128], %13 {strides = array<i32>} : memref<4x768xf32, #tpu.memory_space<vmem>>, vector<4x256xf32>,
    %c1 = arith.constant 1 : index
    %c0_19 = arith.constant 0 : index
    %c0_20 = arith.constant 0 : index
    %15 = vector.load %arg1[%c1, %c0_19, %c0_20] : memref<2x4x256xf32, #tpu.memory_space<vmem>>, vector<1x4x256xf32>
    %16 = vector.shape_cast %15 : vector<1x4x256xf32> to vector<4x256xf32>
    %c0_21 = arith.constant 0 : index
    %c384 = arith.constant 384 : index
    %17 = vector.load %arg10[%c0_21, %c384] : memref<4x768xf32, #tpu.memory_space<vmem>>, vector<4x256xf32>
    tpu.vector_store %arg10[%c0_21, %c384], %16 {strides = array<i32>} : memref<4x768xf32, #tpu.memory_space<vmem>>, vector<4x256xf32>,
    %c0_22 = arith.constant 0 : index
    %c128_23 = arith.constant 128 : index
    %18 = vector.load %arg10[%c0_22, %c128_23] : memref<4x768xf32, #tpu.memory_space<vmem>>, vector<4x512xf32>
    %c0_24 = arith.constant 0 : index
    %c0_25 = arith.constant 0 : index
    %19 = vector.load %arg3[%c0_24, %c0_25] : memref<24x4xf32, #tpu.memory_space<vmem>>, vector<24x4xf32>
    %cst_26 = arith.constant dense<0.000000e+00> : vector<24x512xf32>
    %20 = tpu.matmul %19, %18, %cst_26 {dimension_numbers = #tpu.dot_dimension_numbers<[1], [0], [0], [1], [0, 0, 1, 1], [], []>} : vector<24x4xf32>, vector<4x512xf32>, vector<24x512xf32> -> vector<24x512xf32>
    %c0_27 = arith.constant 0 : index
    %c0_28 = arith.constant 0 : index
    %21 = vector.load %arg4[%c0_27, %c0_28] : memref<24x1xf32, #tpu.memory_space<vmem>>, vector<24x1xf32>
    %22 = vector.broadcast %21 : vector<24x1xf32> to vector<24x512xf32>
    %23 = arith.addf %20, %22 : vector<24x512xf32>
    %cst_29 = arith.constant 0.000000e+00 : f32
    %24 = vector.broadcast %cst_29 : f32 to vector<24x512xf32>
    %25 = arith.maximumf %23, %24 : vector<24x512xf32>
    %26 = vector.extract_strided_slice %25 {offsets = [0, 0], sizes = [8, 512], strides = [1, 1]} : vector<24x512xf32> to vector<8x512xf32>
    %27 = vector.extract_strided_slice %25 {offsets = [8, 0], sizes = [8, 512], strides = [1, 1]} : vector<24x512xf32> to vector<8x512xf32>
    %c0_30 = arith.constant 0 : index
    %c128_31 = arith.constant 128 : index
    %28 = vector.load %arg11[%c0_30, %c128_31] : memref<8x768xf32, #tpu.memory_space<vmem>>, vector<8x512xf32>
    tpu.vector_store %arg11[%c0_30, %c128_31], %27 {strides = array<i32>} : memref<8x768xf32, #tpu.memory_space<vmem>>, vector<8x512xf32>,
    %29 = vector.extract_strided_slice %25 {offsets = [16, 0], sizes = [8, 512], strides = [1, 1]} : vector<24x512xf32> to vector<8x512xf32>
    %c0_32 = arith.constant 0 : index
    %c128_33 = arith.constant 128 : index
    %30 = vector.load %arg12[%c0_32, %c128_33] : memref<8x768xf32, #tpu.memory_space<vmem>>, vector<8x512xf32>
    tpu.vector_store %arg12[%c0_32, %c128_33], %29 {strides = array<i32>} : memref<8x768xf32, #tpu.memory_space<vmem>>, vector<8x512xf32>,
    %c0_34 = arith.constant 0 : index
    %c0_35 = arith.constant 0 : index
    %31 = vector.load %arg8[%c0_34, %c0_35] : memref<24x1xf32, #tpu.memory_space<vmem>>, vector<24x1xf32>
    %c0_36 = arith.constant 0 : index
    %c0_37 = arith.constant 0 : index
    %32 = vector.load %arg5[%c0_36, %c0_37] : memref<8x72xf32, #tpu.memory_space<vmem>>, vector<8x72xf32>
    %c0_38 = arith.constant 0 : index
    %c111 = arith.constant 111 : index
    %33 = vector.load %arg11[%c0_38, %c111] : memref<8x768xf32, #tpu.memory_space<vmem>>, vector<8x512xf32>
    %c6 = arith.constant 6 : index
    %c0_39 = arith.constant 0 : index
    %34 = vector.load %arg2[%c6, %c0_39] : memref<25x512xf32, #tpu.memory_space<vmem>>, vector<1x512xf32>
    %35 = vector.broadcast %34 : vector<1x512xf32> to vector<8x512xf32>
    %36 = arith.mulf %33, %35 : vector<8x512xf32>
    %c0_40 = arith.constant 0 : index
    %c112 = arith.constant 112 : index
    %37 = vector.load %arg11[%c0_40, %c112] : memref<8x768xf32, #tpu.memory_space<vmem>>, vector<8x512xf32>
    %c7 = arith.constant 7 : index
    %c0_41 = arith.constant 0 : index
    %38 = vector.load %arg2[%c7, %c0_41] : memref<25x512xf32, #tpu.memory_space<vmem>>, vector<1x512xf32>
    %39 = vector.broadcast %38 : vector<1x512xf32> to vector<8x512xf32>
    %40 = arith.mulf %37, %39 : vector<8x512xf32>
    %c0_42 = arith.constant 0 : index
    %c113 = arith.constant 113 : index
    %41 = vector.load %arg11[%c0_42, %c113] : memref<8x768xf32, #tpu.memory_space<vmem>>, vector<8x512xf32>
    %c8 = arith.constant 8 : index
    %c0_43 = arith.constant 0 : index
    %42 = vector.load %arg2[%c8, %c0_43] : memref<25x512xf32, #tpu.memory_space<vmem>>, vector<1x512xf32>
    %43 = vector.broadcast %42 : vector<1x512xf32> to vector<8x512xf32>
    %44 = arith.mulf %41, %43 : vector<8x512xf32>
    %c0_44 = arith.constant 0 : index
    %c127 = arith.constant 127 : index
    %45 = vector.load %arg11[%c0_44, %c127] : memref<8x768xf32, #tpu.memory_space<vmem>>, vector<8x512xf32>
    %c11 = arith.constant 11 : index
    %c0_45 = arith.constant 0 : index
    %46 = vector.load %arg2[%c11, %c0_45] : memref<25x512xf32, #tpu.memory_space<vmem>>, vector<1x512xf32>
    %47 = vector.broadcast %46 : vector<1x512xf32> to vector<8x512xf32>
    %48 = arith.mulf %45, %47 : vector<8x512xf32>
    %c0_46 = arith.constant 0 : index
    %c128_47 = arith.constant 128 : index
    %49 = vector.load %arg11[%c0_46, %c128_47] : memref<8x768xf32, #tpu.memory_space<vmem>>, vector<8x512xf32>
    %c12 = arith.constant 12 : index
    %c0_48 = arith.constant 0 : index
    %50 = vector.load %arg2[%c12, %c0_48] : memref<25x512xf32, #tpu.memory_space<vmem>>, vector<1x512xf32>
    %51 = vector.broadcast %50 : vector<1x512xf32> to vector<8x512xf32>
    %52 = arith.mulf %49, %51 : vector<8x512xf32>
    %c0_49 = arith.constant 0 : index
    %c129 = arith.constant 129 : index
    %53 = vector.load %arg11[%c0_49, %c129] : memref<8x768xf32, #tpu.memory_space<vmem>>, vector<8x512xf32>
    %c13 = arith.constant 13 : index
    %c0_50 = arith.constant 0 : index
    %54 = vector.load %arg2[%c13, %c0_50] : memref<25x512xf32, #tpu.memory_space<vmem>>, vector<1x512xf32>
    %55 = vector.broadcast %54 : vector<1x512xf32> to vector<8x512xf32>
    %56 = arith.mulf %53, %55 : vector<8x512xf32>
    %c0_51 = arith.constant 0 : index
    %c143 = arith.constant 143 : index
    %57 = vector.load %arg11[%c0_51, %c143] : memref<8x768xf32, #tpu.memory_space<vmem>>, vector<8x512xf32>
    %c16 = arith.constant 16 : index
    %c0_52 = arith.constant 0 : index
    %58 = vector.load %arg2[%c16, %c0_52] : memref<25x512xf32, #tpu.memory_space<vmem>>, vector<1x512xf32>
    %59 = vector.broadcast %58 : vector<1x512xf32> to vector<8x512xf32>
    %60 = arith.mulf %57, %59 : vector<8x512xf32>
    %c0_53 = arith.constant 0 : index
    %c144 = arith.constant 144 : index
    %61 = vector.load %arg11[%c0_53, %c144] : memref<8x768xf32, #tpu.memory_space<vmem>>, vector<8x512xf32>
    %c17 = arith.constant 17 : index
    %c0_54 = arith.constant 0 : index
    %62 = vector.load %arg2[%c17, %c0_54] : memref<25x512xf32, #tpu.memory_space<vmem>>, vector<1x512xf32>
    %63 = vector.broadcast %62 : vector<1x512xf32> to vector<8x512xf32>
    %64 = arith.mulf %61, %63 : vector<8x512xf32>
    %c0_55 = arith.constant 0 : index
    %c145 = arith.constant 145 : index
    %65 = vector.load %arg11[%c0_55, %c145] : memref<8x768xf32, #tpu.memory_space<vmem>>, vector<8x512xf32>
    %c18 = arith.constant 18 : index
    %c0_56 = arith.constant 0 : index
    %66 = vector.load %arg2[%c18, %c0_56] : memref<25x512xf32, #tpu.memory_space<vmem>>, vector<1x512xf32>
    %67 = vector.broadcast %66 : vector<1x512xf32> to vector<8x512xf32>
    %68 = arith.mulf %65, %67 : vector<8x512xf32>
    %69 = tpu.concatenate %36, %40, %44, %48, %52, %56, %60, %64, %68 in 0 : vector<8x512xf32>, vector<8x512xf32>, vector<8x512xf32>, vector<8x512xf32>, vector<8x512xf32>, vector<8x512xf32>, vector<8x512xf32>, vector<8x512xf32>, vector<8x512xf32> -> vector<72x512xf32>
    %cst_57 = arith.constant dense<0.000000e+00> : vector<8x512xf32>
    %70 = tpu.matmul %32, %69, %cst_57 {dimension_numbers = #tpu.dot_dimension_numbers<[1], [0], [0], [1], [0, 0, 1, 1], [], []>} : vector<8x72xf32>, vector<72x512xf32>, vector<8x512xf32> -> vector<8x512xf32>
    %71 = vector.extract_strided_slice %31 {offsets = [0, 0], sizes = [8, 1], strides = [1, 1]} : vector<24x1xf32> to vector<8x1xf32>
    %72 = vector.broadcast %71 : vector<8x1xf32> to vector<8x512xf32>
    %73 = arith.addf %70, %72 : vector<8x512xf32>
    %cst_58 = arith.constant 0.000000e+00 : f32
    %74 = vector.broadcast %cst_58 : f32 to vector<8x512xf32>
    %75 = arith.maximumf %73, %74 : vector<8x512xf32>
    %c0_59 = arith.constant 0 : index
    %c0_60 = arith.constant 0 : index
    %76 = vector.load %arg6[%c0_59, %c0_60] : memref<8x200xf32, #tpu.memory_space<vmem>>, vector<8x200xf32>
    %c0_61 = arith.constant 0 : index
    %c94 = arith.constant 94 : index
    %77 = vector.load %arg12[%c0_61, %c94] : memref<8x768xf32, #tpu.memory_space<vmem>>, vector<8x512xf32>
    %c0_62 = arith.constant 0 : index
    %c0_63 = arith.constant 0 : index
    %78 = vector.load %arg2[%c0_62, %c0_63] : memref<25x512xf32, #tpu.memory_space<vmem>>, vector<1x512xf32>
    %79 = vector.broadcast %78 : vector<1x512xf32> to vector<8x512xf32>
    %80 = arith.mulf %77, %79 : vector<8x512xf32>
    %c0_64 = arith.constant 0 : index
    %c95 = arith.constant 95 : index
    %81 = vector.load %arg12[%c0_64, %c95] : memref<8x768xf32, #tpu.memory_space<vmem>>, vector<8x512xf32>
    %c1_65 = arith.constant 1 : index
    %c0_66 = arith.constant 0 : index
    %82 = vector.load %arg2[%c1_65, %c0_66] : memref<25x512xf32, #tpu.memory_space<vmem>>, vector<1x512xf32>
    %83 = vector.broadcast %82 : vector<1x512xf32> to vector<8x512xf32>
    %84 = arith.mulf %81, %83 : vector<8x512xf32>
    %c0_67 = arith.constant 0 : index
    %c96 = arith.constant 96 : index
    %85 = vector.load %arg12[%c0_67, %c96] : memref<8x768xf32, #tpu.memory_space<vmem>>, vector<8x512xf32>
    %c2 = arith.constant 2 : index
    %c0_68 = arith.constant 0 : index
    %86 = vector.load %arg2[%c2, %c0_68] : memref<25x512xf32, #tpu.memory_space<vmem>>, vector<1x512xf32>
    %87 = vector.broadcast %86 : vector<1x512xf32> to vector<8x512xf32>
    %88 = arith.mulf %85, %87 : vector<8x512xf32>
    %c0_69 = arith.constant 0 : index
    %c97 = arith.constant 97 : index
    %89 = vector.load %arg12[%c0_69, %c97] : memref<8x768xf32, #tpu.memory_space<vmem>>, vector<8x512xf32>
    %c3 = arith.constant 3 : index
    %c0_70 = arith.constant 0 : index
    %90 = vector.load %arg2[%c3, %c0_70] : memref<25x512xf32, #tpu.memory_space<vmem>>, vector<1x512xf32>
    %91 = vector.broadcast %90 : vector<1x512xf32> to vector<8x512xf32>
    %92 = arith.mulf %89, %91 : vector<8x512xf32>
    %c0_71 = arith.constant 0 : index
    %c98 = arith.constant 98 : index
    %93 = vector.load %arg12[%c0_71, %c98] : memref<8x768xf32, #tpu.memory_space<vmem>>, vector<8x512xf32>
    %c4 = arith.constant 4 : index
    %c0_72 = arith.constant 0 : index
    %94 = vector.load %arg2[%c4, %c0_72] : memref<25x512xf32, #tpu.memory_space<vmem>>, vector<1x512xf32>
    %95 = vector.broadcast %94 : vector<1x512xf32> to vector<8x512xf32>
    %96 = arith.mulf %93, %95 : vector<8x512xf32>
    %c0_73 = arith.constant 0 : index
    %c110 = arith.constant 110 : index
    %97 = vector.load %arg12[%c0_73, %c110] : memref<8x768xf32, #tpu.memory_space<vmem>>, vector<8x512xf32>
    %c5 = arith.constant 5 : index
    %c0_74 = arith.constant 0 : index
    %98 = vector.load %arg2[%c5, %c0_74] : memref<25x512xf32, #tpu.memory_space<vmem>>, vector<1x512xf32>
    %99 = vector.broadcast %98 : vector<1x512xf32> to vector<8x512xf32>
    %100 = arith.mulf %97, %99 : vector<8x512xf32>
    %c0_75 = arith.constant 0 : index
    %c111_76 = arith.constant 111 : index
    %101 = vector.load %arg12[%c0_75, %c111_76] : memref<8x768xf32, #tpu.memory_space<vmem>>, vector<8x512xf32>
    %c6_77 = arith.constant 6 : index
    %c0_78 = arith.constant 0 : index
    %102 = vector.load %arg2[%c6_77, %c0_78] : memref<25x512xf32, #tpu.memory_space<vmem>>, vector<1x512xf32>
    %103 = vector.broadcast %102 : vector<1x512xf32> to vector<8x512xf32>
    %104 = arith.mulf %101, %103 : vector<8x512xf32>
    %c0_79 = arith.constant 0 : index
    %c112_80 = arith.constant 112 : index
    %105 = vector.load %arg12[%c0_79, %c112_80] : memref<8x768xf32, #tpu.memory_space<vmem>>, vector<8x512xf32>
    %c7_81 = arith.constant 7 : index
    %c0_82 = arith.constant 0 : index
    %106 = vector.load %arg2[%c7_81, %c0_82] : memref<25x512xf32, #tpu.memory_space<vmem>>, vector<1x512xf32>
    %107 = vector.broadcast %106 : vector<1x512xf32> to vector<8x512xf32>
    %108 = arith.mulf %105, %107 : vector<8x512xf32>
    %c0_83 = arith.constant 0 : index
    %c113_84 = arith.constant 113 : index
    %109 = vector.load %arg12[%c0_83, %c113_84] : memref<8x768xf32, #tpu.memory_space<vmem>>, vector<8x512xf32>
    %c8_85 = arith.constant 8 : index
    %c0_86 = arith.constant 0 : index
    %110 = vector.load %arg2[%c8_85, %c0_86] : memref<25x512xf32, #tpu.memory_space<vmem>>, vector<1x512xf32>
    %111 = vector.broadcast %110 : vector<1x512xf32> to vector<8x512xf32>
    %112 = arith.mulf %109, %111 : vector<8x512xf32>
    %c0_87 = arith.constant 0 : index
    %c114 = arith.constant 114 : index
    %113 = vector.load %arg12[%c0_87, %c114] : memref<8x768xf32, #tpu.memory_space<vmem>>, vector<8x512xf32>
    %c9 = arith.constant 9 : index
    %c0_88 = arith.constant 0 : index
    %114 = vector.load %arg2[%c9, %c0_88] : memref<25x512xf32, #tpu.memory_space<vmem>>, vector<1x512xf32>
    %115 = vector.broadcast %114 : vector<1x512xf32> to vector<8x512xf32>
    %116 = arith.mulf %113, %115 : vector<8x512xf32>
    %c0_89 = arith.constant 0 : index
    %c126 = arith.constant 126 : index
    %117 = vector.load %arg12[%c0_89, %c126] : memref<8x768xf32, #tpu.memory_space<vmem>>, vector<8x512xf32>
    %c10 = arith.constant 10 : index
    %c0_90 = arith.constant 0 : index
    %118 = vector.load %arg2[%c10, %c0_90] : memref<25x512xf32, #tpu.memory_space<vmem>>, vector<1x512xf32>
    %119 = vector.broadcast %118 : vector<1x512xf32> to vector<8x512xf32>
    %120 = arith.mulf %117, %119 : vector<8x512xf32>
    %c0_91 = arith.constant 0 : index
    %c127_92 = arith.constant 127 : index
    %121 = vector.load %arg12[%c0_91, %c127_92] : memref<8x768xf32, #tpu.memory_space<vmem>>, vector<8x512xf32>
    %c11_93 = arith.constant 11 : index
    %c0_94 = arith.constant 0 : index
    %122 = vector.load %arg2[%c11_93, %c0_94] : memref<25x512xf32, #tpu.memory_space<vmem>>, vector<1x512xf32>
    %123 = vector.broadcast %122 : vector<1x512xf32> to vector<8x512xf32>
    %124 = arith.mulf %121, %123 : vector<8x512xf32>
    %c0_95 = arith.constant 0 : index
    %c128_96 = arith.constant 128 : index
    %125 = vector.load %arg12[%c0_95, %c128_96] : memref<8x768xf32, #tpu.memory_space<vmem>>, vector<8x512xf32>
    %c12_97 = arith.constant 12 : index
    %c0_98 = arith.constant 0 : index
    %126 = vector.load %arg2[%c12_97, %c0_98] : memref<25x512xf32, #tpu.memory_space<vmem>>, vector<1x512xf32>
    %127 = vector.broadcast %126 : vector<1x512xf32> to vector<8x512xf32>
    %128 = arith.mulf %125, %127 : vector<8x512xf32>
    %c0_99 = arith.constant 0 : index
    %c129_100 = arith.constant 129 : index
    %129 = vector.load %arg12[%c0_99, %c129_100] : memref<8x768xf32, #tpu.memory_space<vmem>>, vector<8x512xf32>
    %c13_101 = arith.constant 13 : index
    %c0_102 = arith.constant 0 : index
    %130 = vector.load %arg2[%c13_101, %c0_102] : memref<25x512xf32, #tpu.memory_space<vmem>>, vector<1x512xf32>
    %131 = vector.broadcast %130 : vector<1x512xf32> to vector<8x512xf32>
    %132 = arith.mulf %129, %131 : vector<8x512xf32>
    %c0_103 = arith.constant 0 : index
    %c130 = arith.constant 130 : index
    %133 = vector.load %arg12[%c0_103, %c130] : memref<8x768xf32, #tpu.memory_space<vmem>>, vector<8x512xf32>
    %c14 = arith.constant 14 : index
    %c0_104 = arith.constant 0 : index
    %134 = vector.load %arg2[%c14, %c0_104] : memref<25x512xf32, #tpu.memory_space<vmem>>, vector<1x512xf32>
    %135 = vector.broadcast %134 : vector<1x512xf32> to vector<8x512xf32>
    %136 = arith.mulf %133, %135 : vector<8x512xf32>
    %c0_105 = arith.constant 0 : index
    %c142 = arith.constant 142 : index
    %137 = vector.load %arg12[%c0_105, %c142] : memref<8x768xf32, #tpu.memory_space<vmem>>, vector<8x512xf32>
    %c15 = arith.constant 15 : index
    %c0_106 = arith.constant 0 : index
    %138 = vector.load %arg2[%c15, %c0_106] : memref<25x512xf32, #tpu.memory_space<vmem>>, vector<1x512xf32>
    %139 = vector.broadcast %138 : vector<1x512xf32> to vector<8x512xf32>
    %140 = arith.mulf %137, %139 : vector<8x512xf32>
    %c0_107 = arith.constant 0 : index
    %c143_108 = arith.constant 143 : index
    %141 = vector.load %arg12[%c0_107, %c143_108] : memref<8x768xf32, #tpu.memory_space<vmem>>, vector<8x512xf32>
    %c16_109 = arith.constant 16 : index
    %c0_110 = arith.constant 0 : index
    %142 = vector.load %arg2[%c16_109, %c0_110] : memref<25x512xf32, #tpu.memory_space<vmem>>, vector<1x512xf32>
    %143 = vector.broadcast %142 : vector<1x512xf32> to vector<8x512xf32>
    %144 = arith.mulf %141, %143 : vector<8x512xf32>
    %c0_111 = arith.constant 0 : index
    %c144_112 = arith.constant 144 : index
    %145 = vector.load %arg12[%c0_111, %c144_112] : memref<8x768xf32, #tpu.memory_space<vmem>>, vector<8x512xf32>
    %c17_113 = arith.constant 17 : index
    %c0_114 = arith.constant 0 : index
    %146 = vector.load %arg2[%c17_113, %c0_114] : memref<25x512xf32, #tpu.memory_space<vmem>>, vector<1x512xf32>
    %147 = vector.broadcast %146 : vector<1x512xf32> to vector<8x512xf32>
    %148 = arith.mulf %145, %147 : vector<8x512xf32>
    %c0_115 = arith.constant 0 : index
    %c145_116 = arith.constant 145 : index
    %149 = vector.load %arg12[%c0_115, %c145_116] : memref<8x768xf32, #tpu.memory_space<vmem>>, vector<8x512xf32>
    %c18_117 = arith.constant 18 : index
    %c0_118 = arith.constant 0 : index
    %150 = vector.load %arg2[%c18_117, %c0_118] : memref<25x512xf32, #tpu.memory_space<vmem>>, vector<1x512xf32>
    %151 = vector.broadcast %150 : vector<1x512xf32> to vector<8x512xf32>
    %152 = arith.mulf %149, %151 : vector<8x512xf32>
    %c0_119 = arith.constant 0 : index
    %c146 = arith.constant 146 : index
    %153 = vector.load %arg12[%c0_119, %c146] : memref<8x768xf32, #tpu.memory_space<vmem>>, vector<8x512xf32>
    %c19 = arith.constant 19 : index
    %c0_120 = arith.constant 0 : index
    %154 = vector.load %arg2[%c19, %c0_120] : memref<25x512xf32, #tpu.memory_space<vmem>>, vector<1x512xf32>
    %155 = vector.broadcast %154 : vector<1x512xf32> to vector<8x512xf32>
    %156 = arith.mulf %153, %155 : vector<8x512xf32>
    %c0_121 = arith.constant 0 : index
    %c158 = arith.constant 158 : index
    %157 = vector.load %arg12[%c0_121, %c158] : memref<8x768xf32, #tpu.memory_space<vmem>>, vector<8x512xf32>
    %c20 = arith.constant 20 : index
    %c0_122 = arith.constant 0 : index
    %158 = vector.load %arg2[%c20, %c0_122] : memref<25x512xf32, #tpu.memory_space<vmem>>, vector<1x512xf32>
    %159 = vector.broadcast %158 : vector<1x512xf32> to vector<8x512xf32>
    %160 = arith.mulf %157, %159 : vector<8x512xf32>
    %c0_123 = arith.constant 0 : index
    %c159 = arith.constant 159 : index
    %161 = vector.load %arg12[%c0_123, %c159] : memref<8x768xf32, #tpu.memory_space<vmem>>, vector<8x512xf32>
    %c21 = arith.constant 21 : index
    %c0_124 = arith.constant 0 : index
    %162 = vector.load %arg2[%c21, %c0_124] : memref<25x512xf32, #tpu.memory_space<vmem>>, vector<1x512xf32>
    %163 = vector.broadcast %162 : vector<1x512xf32> to vector<8x512xf32>
    %164 = arith.mulf %161, %163 : vector<8x512xf32>
    %c0_125 = arith.constant 0 : index
    %c160 = arith.constant 160 : index
    %165 = vector.load %arg12[%c0_125, %c160] : memref<8x768xf32, #tpu.memory_space<vmem>>, vector<8x512xf32>
    %c22 = arith.constant 22 : index
    %c0_126 = arith.constant 0 : index
    %166 = vector.load %arg2[%c22, %c0_126] : memref<25x512xf32, #tpu.memory_space<vmem>>, vector<1x512xf32>
    %167 = vector.broadcast %166 : vector<1x512xf32> to vector<8x512xf32>
    %168 = arith.mulf %165, %167 : vector<8x512xf32>
    %c0_127 = arith.constant 0 : index
    %c161 = arith.constant 161 : index
    %169 = vector.load %arg12[%c0_127, %c161] : memref<8x768xf32, #tpu.memory_space<vmem>>, vector<8x512xf32>
    %c23 = arith.constant 23 : index
    %c0_128 = arith.constant 0 : index
    %170 = vector.load %arg2[%c23, %c0_128] : memref<25x512xf32, #tpu.memory_space<vmem>>, vector<1x512xf32>
    %171 = vector.broadcast %170 : vector<1x512xf32> to vector<8x512xf32>
    %172 = arith.mulf %169, %171 : vector<8x512xf32>
    %c0_129 = arith.constant 0 : index
    %c162 = arith.constant 162 : index
    %173 = vector.load %arg12[%c0_129, %c162] : memref<8x768xf32, #tpu.memory_space<vmem>>, vector<8x512xf32>
    %c24 = arith.constant 24 : index
    %c0_130 = arith.constant 0 : index
    %174 = vector.load %arg2[%c24, %c0_130] : memref<25x512xf32, #tpu.memory_space<vmem>>, vector<1x512xf32>
    %175 = vector.broadcast %174 : vector<1x512xf32> to vector<8x512xf32>
    %176 = arith.mulf %173, %175 : vector<8x512xf32>
    %177 = tpu.concatenate %80, %84, %88, %92, %96, %100, %104, %108, %112, %116, %120, %124, %128, %132, %136, %140 in 0 : vector<8x512xf32>, vector<8x512xf32>, vector<8x512xf32>, vector<8x512xf32>, vector<8x512xf32>, vector<8x512xf32>, vector<8x512xf32>, vector<8x512xf32>, vector<8x512xf32>, vector<8x512xf32>, vector<8x512xf32>, vector<8x512xf32>, vector<8x512xf32>, vector<8x512xf32>, vector<8x512xf32>, vector<8x512xf32> -> vector<128x512xf32>
    %178 = tpu.concatenate %144, %148, %152, %156, %160, %164, %168, %172, %176 in 0 : vector<8x512xf32>, vector<8x512xf32>, vector<8x512xf32>, vector<8x512xf32>, vector<8x512xf32>, vector<8x512xf32>, vector<8x512xf32>, vector<8x512xf32>, vector<8x512xf32> -> vector<72x512xf32>
    %179 = tpu.concatenate %177, %178 in 0 : vector<128x512xf32>, vector<72x512xf32> -> vector<200x512xf32>
    %cst_131 = arith.constant dense<0.000000e+00> : vector<8x512xf32>
    %180 = tpu.matmul %76, %179, %cst_131 {dimension_numbers = #tpu.dot_dimension_numbers<[1], [0], [0], [1], [0, 0, 1, 1], [], []>} : vector<8x200xf32>, vector<200x512xf32>, vector<8x512xf32> -> vector<8x512xf32>
    %181 = vector.extract_strided_slice %31 {offsets = [8, 0], sizes = [8, 1], strides = [1, 1]} : vector<24x1xf32> to vector<8x1xf32>
    %182 = vector.broadcast %181 : vector<8x1xf32> to vector<8x512xf32>
    %183 = arith.addf %180, %182 : vector<8x512xf32>
    %cst_132 = arith.constant 0.000000e+00 : f32
    %184 = vector.broadcast %cst_132 : f32 to vector<8x512xf32>
    %185 = arith.maximumf %183, %184 : vector<8x512xf32>
    %c0_133 = arith.constant 0 : index
    %c111_134 = arith.constant 111 : index
    %186 = vector.load %arg10[%c0_133, %c111_134] : memref<4x768xf32, #tpu.memory_space<vmem>>, vector<4x512xf32>
    %c6_135 = arith.constant 6 : index
    %c0_136 = arith.constant 0 : index
    %187 = vector.load %arg2[%c6_135, %c0_136] : memref<25x512xf32, #tpu.memory_space<vmem>>, vector<1x512xf32>
    %cst_137 = arith.constant 0.000000e+00 : f32
    %188 = vector.broadcast %cst_137 : f32 to vector<1x512xf32>
    %189 = arith.cmpf ogt, %187, %188 : vector<1x512xf32>
    %cst_138 = arith.constant 0xFF800000 : f32
    %190 = vector.shape_cast %189 : vector<1x512xi1> to vector<1x512xi1>
    %191 = vector.broadcast %190 : vector<1x512xi1> to vector<4x512xi1>
    %192 = vector.broadcast %cst_138 : f32 to vector<4x512xf32>
    %193 = arith.select %191, %186, %192 : vector<4x512xi1>, vector<4x512xf32>
    %194 = arith.maximumf %18, %193 : vector<4x512xf32>
    %c0_139 = arith.constant 0 : index
    %c112_140 = arith.constant 112 : index
    %195 = vector.load %arg10[%c0_139, %c112_140] : memref<4x768xf32, #tpu.memory_space<vmem>>, vector<4x512xf32>
    %c7_141 = arith.constant 7 : index
    %c0_142 = arith.constant 0 : index
    %196 = vector.load %arg2[%c7_141, %c0_142] : memref<25x512xf32, #tpu.memory_space<vmem>>, vector<1x512xf32>
    %cst_143 = arith.constant 0.000000e+00 : f32
    %197 = vector.broadcast %cst_143 : f32 to vector<1x512xf32>
    %198 = arith.cmpf ogt, %196, %197 : vector<1x512xf32>
    %cst_144 = arith.constant 0xFF800000 : f32
    %199 = vector.shape_cast %198 : vector<1x512xi1> to vector<1x512xi1>
    %200 = vector.broadcast %199 : vector<1x512xi1> to vector<4x512xi1>
    %201 = vector.broadcast %cst_144 : f32 to vector<4x512xf32>
    %202 = arith.select %200, %195, %201 : vector<4x512xi1>, vector<4x512xf32>
    %203 = arith.maximumf %194, %202 : vector<4x512xf32>
    %c0_145 = arith.constant 0 : index
    %c113_146 = arith.constant 113 : index
    %204 = vector.load %arg10[%c0_145, %c113_146] : memref<4x768xf32, #tpu.memory_space<vmem>>, vector<4x512xf32>
    %c8_147 = arith.constant 8 : index
    %c0_148 = arith.constant 0 : index
    %205 = vector.load %arg2[%c8_147, %c0_148] : memref<25x512xf32, #tpu.memory_space<vmem>>, vector<1x512xf32>
    %cst_149 = arith.constant 0.000000e+00 : f32
    %206 = vector.broadcast %cst_149 : f32 to vector<1x512xf32>
    %207 = arith.cmpf ogt, %205, %206 : vector<1x512xf32>
    %cst_150 = arith.constant 0xFF800000 : f32
    %208 = vector.shape_cast %207 : vector<1x512xi1> to vector<1x512xi1>
    %209 = vector.broadcast %208 : vector<1x512xi1> to vector<4x512xi1>
    %210 = vector.broadcast %cst_150 : f32 to vector<4x512xf32>
    %211 = arith.select %209, %204, %210 : vector<4x512xi1>, vector<4x512xf32>
    %212 = arith.maximumf %203, %211 : vector<4x512xf32>
    %c0_151 = arith.constant 0 : index
    %c127_152 = arith.constant 127 : index
    %213 = vector.load %arg10[%c0_151, %c127_152] : memref<4x768xf32, #tpu.memory_space<vmem>>, vector<4x512xf32>
    %c11_153 = arith.constant 11 : index
    %c0_154 = arith.constant 0 : index
    %214 = vector.load %arg2[%c11_153, %c0_154] : memref<25x512xf32, #tpu.memory_space<vmem>>, vector<1x512xf32>
    %cst_155 = arith.constant 0.000000e+00 : f32
    %215 = vector.broadcast %cst_155 : f32 to vector<1x512xf32>
    %216 = arith.cmpf ogt, %214, %215 : vector<1x512xf32>
    %cst_156 = arith.constant 0xFF800000 : f32
    %217 = vector.shape_cast %216 : vector<1x512xi1> to vector<1x512xi1>
    %218 = vector.broadcast %217 : vector<1x512xi1> to vector<4x512xi1>
    %219 = vector.broadcast %cst_156 : f32 to vector<4x512xf32>
    %220 = arith.select %218, %213, %219 : vector<4x512xi1>, vector<4x512xf32>
    %221 = arith.maximumf %212, %220 : vector<4x512xf32>
    %c0_157 = arith.constant 0 : index
    %c129_158 = arith.constant 129 : index
    %222 = vector.load %arg10[%c0_157, %c129_158] : memref<4x768xf32, #tpu.memory_space<vmem>>, vector<4x512xf32>
    %c13_159 = arith.constant 13 : index
    %c0_160 = arith.constant 0 : index
    %223 = vector.load %arg2[%c13_159, %c0_160] : memref<25x512xf32, #tpu.memory_space<vmem>>, vector<1x512xf32>
    %cst_161 = arith.constant 0.000000e+00 : f32
    %224 = vector.broadcast %cst_161 : f32 to vector<1x512xf32>
    %225 = arith.cmpf ogt, %223, %224 : vector<1x512xf32>
    %cst_162 = arith.constant 0xFF800000 : f32
    %226 = vector.shape_cast %225 : vector<1x512xi1> to vector<1x512xi1>
    %227 = vector.broadcast %226 : vector<1x512xi1> to vector<4x512xi1>
    %228 = vector.broadcast %cst_162 : f32 to vector<4x512xf32>
    %229 = arith.select %227, %222, %228 : vector<4x512xi1>, vector<4x512xf32>
    %230 = arith.maximumf %221, %229 : vector<4x512xf32>
    %c0_163 = arith.constant 0 : index
    %c143_164 = arith.constant 143 : index
    %231 = vector.load %arg10[%c0_163, %c143_164] : memref<4x768xf32, #tpu.memory_space<vmem>>, vector<4x512xf32>
    %c16_165 = arith.constant 16 : index
    %c0_166 = arith.constant 0 : index
    %232 = vector.load %arg2[%c16_165, %c0_166] : memref<25x512xf32, #tpu.memory_space<vmem>>, vector<1x512xf32>
    %cst_167 = arith.constant 0.000000e+00 : f32
    %233 = vector.broadcast %cst_167 : f32 to vector<1x512xf32>
    %234 = arith.cmpf ogt, %232, %233 : vector<1x512xf32>
    %cst_168 = arith.constant 0xFF800000 : f32
    %235 = vector.shape_cast %234 : vector<1x512xi1> to vector<1x512xi1>
    %236 = vector.broadcast %235 : vector<1x512xi1> to vector<4x512xi1>
    %237 = vector.broadcast %cst_168 : f32 to vector<4x512xf32>
    %238 = arith.select %236, %231, %237 : vector<4x512xi1>, vector<4x512xf32>
    %239 = arith.maximumf %230, %238 : vector<4x512xf32>
    %c0_169 = arith.constant 0 : index
    %c144_170 = arith.constant 144 : index
    %240 = vector.load %arg10[%c0_169, %c144_170] : memref<4x768xf32, #tpu.memory_space<vmem>>, vector<4x512xf32>
    %c17_171 = arith.constant 17 : index
    %c0_172 = arith.constant 0 : index
    %241 = vector.load %arg2[%c17_171, %c0_172] : memref<25x512xf32, #tpu.memory_space<vmem>>, vector<1x512xf32>
    %cst_173 = arith.constant 0.000000e+00 : f32
    %242 = vector.broadcast %cst_173 : f32 to vector<1x512xf32>
    %243 = arith.cmpf ogt, %241, %242 : vector<1x512xf32>
    %cst_174 = arith.constant 0xFF800000 : f32
    %244 = vector.shape_cast %243 : vector<1x512xi1> to vector<1x512xi1>
    %245 = vector.broadcast %244 : vector<1x512xi1> to vector<4x512xi1>
    %246 = vector.broadcast %cst_174 : f32 to vector<4x512xf32>
    %247 = arith.select %245, %240, %246 : vector<4x512xi1>, vector<4x512xf32>
    %248 = arith.maximumf %239, %247 : vector<4x512xf32>
    %c0_175 = arith.constant 0 : index
    %c145_176 = arith.constant 145 : index
    %249 = vector.load %arg10[%c0_175, %c145_176] : memref<4x768xf32, #tpu.memory_space<vmem>>, vector<4x512xf32>
    %c18_177 = arith.constant 18 : index
    %c0_178 = arith.constant 0 : index
    %250 = vector.load %arg2[%c18_177, %c0_178] : memref<25x512xf32, #tpu.memory_space<vmem>>, vector<1x512xf32>
    %cst_179 = arith.constant 0.000000e+00 : f32
    %251 = vector.broadcast %cst_179 : f32 to vector<1x512xf32>
    %252 = arith.cmpf ogt, %250, %251 : vector<1x512xf32>
    %cst_180 = arith.constant 0xFF800000 : f32
    %253 = vector.shape_cast %252 : vector<1x512xi1> to vector<1x512xi1>
    %254 = vector.broadcast %253 : vector<1x512xi1> to vector<4x512xi1>
    %255 = vector.broadcast %cst_180 : f32 to vector<4x512xf32>
    %256 = arith.select %254, %249, %255 : vector<4x512xi1>, vector<4x512xf32>
    %257 = arith.maximumf %248, %256 : vector<4x512xf32>
    %c0_181 = arith.constant 0 : index
    %c0_182 = arith.constant 0 : index
    %258 = vector.load %arg7[%c0_181, %c0_182] : memref<8x4xf32, #tpu.memory_space<vmem>>, vector<8x4xf32>
    %cst_183 = arith.constant dense<0.000000e+00> : vector<8x512xf32>
    %259 = tpu.matmul %258, %257, %cst_183 {dimension_numbers = #tpu.dot_dimension_numbers<[1], [0], [0], [1], [0, 0, 1, 1], [], []>} : vector<8x4xf32>, vector<4x512xf32>, vector<8x512xf32> -> vector<8x512xf32>
    %260 = vector.extract_strided_slice %31 {offsets = [16, 0], sizes = [8, 1], strides = [1, 1]} : vector<24x1xf32> to vector<8x1xf32>
    %261 = vector.broadcast %260 : vector<8x1xf32> to vector<8x512xf32>
    %262 = arith.addf %259, %261 : vector<8x512xf32>
    %cst_184 = arith.constant 0.000000e+00 : f32
    %263 = vector.broadcast %cst_184 : f32 to vector<8x512xf32>
    %264 = arith.maximumf %262, %263 : vector<8x512xf32>
    %265 = vector.extract_strided_slice %26 {offsets = [0, 0], sizes = [8, 256], strides = [1, 1]} : vector<8x512xf32> to vector<8x256xf32>
    %c0_185 = arith.constant 0 : index
    %c0_186 = arith.constant 0 : index
    %c0_187 = arith.constant 0 : index
    %266 = vector.load %arg9[%c0_185, %c0_186, %c0_187] : memref<2x32x256xf32, #tpu.memory_space<vmem>>, vector<1x8x256xf32>
    %267 = vector.shape_cast %266 : vector<1x8x256xf32> to vector<8x256xf32>
    %268 = vector.shape_cast %265 : vector<8x256xf32> to vector<1x8x256xf32>
    tpu.vector_store %arg9[%c0_185, %c0_186, %c0_187], %268 {strides = array<i32>} : memref<2x32x256xf32, #tpu.memory_space<vmem>>, vector<1x8x256xf32>,
    %269 = vector.extract_strided_slice %26 {offsets = [0, 256], sizes = [8, 256], strides = [1, 1]} : vector<8x512xf32> to vector<8x256xf32>
    %c1_188 = arith.constant 1 : index
    %c0_189 = arith.constant 0 : index
    %c0_190 = arith.constant 0 : index
    %270 = vector.load %arg9[%c1_188, %c0_189, %c0_190] : memref<2x32x256xf32, #tpu.memory_space<vmem>>, vector<1x8x256xf32>
    %271 = vector.shape_cast %270 : vector<1x8x256xf32> to vector<8x256xf32>
    %272 = vector.shape_cast %269 : vector<8x256xf32> to vector<1x8x256xf32>
    tpu.vector_store %arg9[%c1_188, %c0_189, %c0_190], %272 {strides = array<i32>} : memref<2x32x256xf32, #tpu.memory_space<vmem>>, vector<1x8x256xf32>,
    %273 = vector.extract_strided_slice %75 {offsets = [0, 0], sizes = [8, 256], strides = [1, 1]} : vector<8x512xf32> to vector<8x256xf32>
    %c0_191 = arith.constant 0 : index
    %c8_192 = arith.constant 8 : index
    %c0_193 = arith.constant 0 : index
    %274 = vector.load %arg9[%c0_191, %c8_192, %c0_193] : memref<2x32x256xf32, #tpu.memory_space<vmem>>, vector<1x8x256xf32>
    %275 = vector.shape_cast %274 : vector<1x8x256xf32> to vector<8x256xf32>
    %276 = vector.shape_cast %273 : vector<8x256xf32> to vector<1x8x256xf32>
    tpu.vector_store %arg9[%c0_191, %c8_192, %c0_193], %276 {strides = array<i32>} : memref<2x32x256xf32, #tpu.memory_space<vmem>>, vector<1x8x256xf32>,
    %277 = vector.extract_strided_slice %75 {offsets = [0, 256], sizes = [8, 256], strides = [1, 1]} : vector<8x512xf32> to vector<8x256xf32>
    %c1_194 = arith.constant 1 : index
    %c8_195 = arith.constant 8 : index
    %c0_196 = arith.constant 0 : index
    %278 = vector.load %arg9[%c1_194, %c8_195, %c0_196] : memref<2x32x256xf32, #tpu.memory_space<vmem>>, vector<1x8x256xf32>
    %279 = vector.shape_cast %278 : vector<1x8x256xf32> to vector<8x256xf32>
    %280 = vector.shape_cast %277 : vector<8x256xf32> to vector<1x8x256xf32>
    tpu.vector_store %arg9[%c1_194, %c8_195, %c0_196], %280 {strides = array<i32>} : memref<2x32x256xf32, #tpu.memory_space<vmem>>, vector<1x8x256xf32>,
    %281 = vector.extract_strided_slice %185 {offsets = [0, 0], sizes = [8, 256], strides = [1, 1]} : vector<8x512xf32> to vector<8x256xf32>
    %c0_197 = arith.constant 0 : index
    %c16_198 = arith.constant 16 : index
    %c0_199 = arith.constant 0 : index
    %282 = vector.load %arg9[%c0_197, %c16_198, %c0_199] : memref<2x32x256xf32, #tpu.memory_space<vmem>>, vector<1x8x256xf32>
    %283 = vector.shape_cast %282 : vector<1x8x256xf32> to vector<8x256xf32>
    %284 = vector.shape_cast %281 : vector<8x256xf32> to vector<1x8x256xf32>
    tpu.vector_store %arg9[%c0_197, %c16_198, %c0_199], %284 {strides = array<i32>} : memref<2x32x256xf32, #tpu.memory_space<vmem>>, vector<1x8x256xf32>,
    %285 = vector.extract_strided_slice %185 {offsets = [0, 256], sizes = [8, 256], strides = [1, 1]} : vector<8x512xf32> to vector<8x256xf32>
    %c1_200 = arith.constant 1 : index
    %c16_201 = arith.constant 16 : index
    %c0_202 = arith.constant 0 : index
    %286 = vector.load %arg9[%c1_200, %c16_201, %c0_202] : memref<2x32x256xf32, #tpu.memory_space<vmem>>, vector<1x8x256xf32>
    %287 = vector.shape_cast %286 : vector<1x8x256xf32> to vector<8x256xf32>
    %288 = vector.shape_cast %285 : vector<8x256xf32> to vector<1x8x256xf32>
    tpu.vector_store %arg9[%c1_200, %c16_201, %c0_202], %288 {strides = array<i32>} : memref<2x32x256xf32, #tpu.memory_space<vmem>>, vector<1x8x256xf32>,
    %289 = vector.extract_strided_slice %264 {offsets = [0, 0], sizes = [8, 256], strides = [1, 1]} : vector<8x512xf32> to vector<8x256xf32>
    %c0_203 = arith.constant 0 : index
    %c24_204 = arith.constant 24 : index
    %c0_205 = arith.constant 0 : index
    %290 = vector.load %arg9[%c0_203, %c24_204, %c0_205] : memref<2x32x256xf32, #tpu.memory_space<vmem>>, vector<1x8x256xf32>
    %291 = vector.shape_cast %290 : vector<1x8x256xf32> to vector<8x256xf32>
    %292 = vector.shape_cast %289 : vector<8x256xf32> to vector<1x8x256xf32>
    tpu.vector_store %arg9[%c0_203, %c24_204, %c0_205], %292 {strides = array<i32>} : memref<2x32x256xf32, #tpu.memory_space<vmem>>, vector<1x8x256xf32>,
    %293 = vector.extract_strided_slice %264 {offsets = [0, 256], sizes = [8, 256], strides = [1, 1]} : vector<8x512xf32> to vector<8x256xf32>
    %c1_206 = arith.constant 1 : index
    %c24_207 = arith.constant 24 : index
    %c0_208 = arith.constant 0 : index
    %294 = vector.load %arg9[%c1_206, %c24_207, %c0_208] : memref<2x32x256xf32, #tpu.memory_space<vmem>>, vector<1x8x256xf32>
    %295 = vector.shape_cast %294 : vector<1x8x256xf32> to vector<8x256xf32>
    %296 = vector.shape_cast %293 : vector<8x256xf32> to vector<1x8x256xf32>
    tpu.vector_store %arg9[%c1_206, %c24_207, %c0_208], %296 {strides = array<i32>} : memref<2x32x256xf32, #tpu.memory_space<vmem>>, vector<1x8x256xf32>,
    return
  }
  func.func @transform_0(%arg0: i32) -> (i32, i32, i32) {
    %c0_i32 = arith.constant 0 : i32
    %c0_i32_0 = arith.constant 0 : i32
    %c0_i32_1 = arith.constant 0 : i32
    return %arg0, %c0_i32, %c0_i32_0 : i32, i32, i32
  }
  func.func @transform_1(%arg0: i32) -> (i32, i32) {
    %c0_i32 = arith.constant 0 : i32
    %c0_i32_0 = arith.constant 0 : i32
    %c0_i32_1 = arith.constant 0 : i32
    return %c0_i32, %c0_i32_0 : i32, i32
  }
  func.func @transform_2(%arg0: i32) -> (i32, i32) {
    %c0_i32 = arith.constant 0 : i32
    %c0_i32_0 = arith.constant 0 : i32
    %c0_i32_1 = arith.constant 0 : i32
    return %c0_i32, %c0_i32_0 : i32, i32
  }
  func.func @transform_3(%arg0: i32) -> (i32, i32) {
    %c0_i32 = arith.constant 0 : i32
    %c0_i32_0 = arith.constant 0 : i32
    %c0_i32_1 = arith.constant 0 : i32
    return %c0_i32, %c0_i32_0 : i32, i32
  }
  func.func @transform_4(%arg0: i32) -> (i32, i32) {
    %c0_i32 = arith.constant 0 : i32
    %c0_i32_0 = arith.constant 0 : i32
    %c0_i32_1 = arith.constant 0 : i32
    return %c0_i32, %c0_i32_0 : i32, i32
  }
  func.func @transform_5(%arg0: i32) -> (i32, i32) {
    %c0_i32 = arith.constant 0 : i32
    %c0_i32_0 = arith.constant 0 : i32
    %c0_i32_1 = arith.constant 0 : i32
    return %c0_i32, %c0_i32_0 : i32, i32
  }
  func.func @transform_6(%arg0: i32) -> (i32, i32) {
    %c0_i32 = arith.constant 0 : i32
    %c0_i32_0 = arith.constant 0 : i32
    %c0_i32_1 = arith.constant 0 : i32
    return %c0_i32, %c0_i32_0 : i32, i32
  }
  func.func @transform_7(%arg0: i32) -> (i32, i32) {
    %c0_i32 = arith.constant 0 : i32
    %c0_i32_0 = arith.constant 0 : i32
    %c0_i32_1 = arith.constant 0 : i32
    return %c0_i32, %c0_i32_0 : i32, i32
  }
  func.func @transform_8(%arg0: i32) -> (i32, i32, i32) {
    %c0_i32 = arith.constant 0 : i32
    %c0_i32_0 = arith.constant 0 : i32
    %c0_i32_1 = arith.constant 0 : i32
    return %arg0, %c0_i32, %c0_i32_0 : i32, i32, i32
  }
}

</mosaic_0001>

<llo_original>
// kernel: inception_block_a.1
$region0: #{inception_block_a.1}
  #allocation0 [shape = 'u32[]', space=smem, size = 0x4, offset = 0x4, fixed_abs, tag = 'smem constant byte address 0x4 - core index']
  #allocation1 [shape = 'u32[72,128]{1,0:T(1,128)}', space=vmem, size = 0x9000, scoped, tag = 'internal scratch']
  #allocation2 [shape = 'f32[4,768]{1,0:T(4,128)}', space=vmem, size = 0x3000, scoped, tag = 'scratch operand']
  #allocation3 [shape = 'f32[8,768]{1,0:T(8,128)}', space=vmem, size = 0x6000, scoped, tag = 'scratch operand']
  #allocation4 [shape = 'f32[8,768]{1,0:T(8,128)}', space=vmem, size = 0x6000, scoped, tag = 'scratch operand']
  %s0 = inlined_call_operand.vmem [shape: f32[4,4,256], index: 0, kind: input, shape index: {}]
  %s1 = inlined_call_operand.vmem [shape: f32[25,512], index: 1, kind: input, shape index: {}]
  %s2 = inlined_call_operand.vmem [shape: f32[24,4], index: 2, kind: input, shape index: {}]
  %s3 = inlined_call_operand.vmem [shape: f32[24,1], index: 3, kind: input, shape index: {}]
  %s4 = inlined_call_operand.vmem [shape: f32[8,72], index: 4, kind: input, shape index: {}]
  %s5 = inlined_call_operand.vmem [shape: f32[8,200], index: 5, kind: input, shape index: {}]
  %s6 = inlined_call_operand.vmem [shape: f32[8,4], index: 6, kind: input, shape index: {}]
  %s7 = inlined_call_operand.vmem [shape: f32[24,1], index: 7, kind: input, shape index: {}]
  %s8 = inlined_call_operand.vmem [shape: f32[4,32,256], index: 8, kind: output, shape index: {}]
  %s9 = sld [smem:[#allocation0]]
  $region65: #{inception_block_a.1} parent=0
    _
  %s11 = ssub.s32 1, %s9
  %s12 = scalar_select 0, %s11, %s9
  loop: start=0, step=1, limit=4
  $region2: #{inception_block_a.1} parent=0 // loop_pre_header
    _
  $region3: #{inception_block_a.1} parent=0 // loop_header
    %s14 = sphi 0, %s18
    %p15 = scmp.ge.s32.totalorder %s14, 4
    %s24 = sphi 0, %s26
    %s27 = sphi 0, %s24
    %s28 = sphi 0, %s27
    %s44 = sphi 0, %s28
    %s48 = sphi 0, %s48
    %s50 = sphi 0, %s48
    %s51 = sphi 0, %s50
    %s65 = sphi 0, %s51
    %s69 = sphi 0, %s69
    %s71 = sphi 0, %s69
    %s72 = sphi 0, %s71
    %s86 = sphi 0, %s72
    %s90 = sphi 0, %s90
    %s92 = sphi 0, %s90
    %s93 = sphi 0, %s92
    %s107 = sphi 0, %s93
    %s111 = sphi 0, %s111
    %s113 = sphi 0, %s111
    %s114 = sphi 0, %s113
    %s128 = sphi 0, %s114
    %s132 = sphi 0, %s132
    %s134 = sphi 0, %s132
    %s135 = sphi 0, %s134
    %s149 = sphi 0, %s135
    %s153 = sphi 0, %s153
    %s155 = sphi 0, %s153
    %s156 = sphi 0, %s155
    %s170 = sphi 0, %s156
    %s174 = sphi 0, %s174
    %s176 = sphi 0, %s174
    %s177 = sphi 0, %s176
    %s191 = sphi 0, %s177
    %s197 = sphi 0, %s199
    %s200 = sphi 0, %s197
    %s201 = sphi 0, %s200
    %s217 = sphi 0, %s201
  $region4: #{inception_block_a.1} parent=0 // loop_header_branch
    %17 = sbr.rel (%p15) target = $region8
  $region5: #{inception_block_a.1} parent=0 // loop_body
    %s19 = ssub.s32 %s14, 1
    %s20 = ssub.s32 %s14, 2
    %s21 = sadd.s32 %s14, 1
    %s22 = ssub.s32 %s14, %s21
    %p23 = scmp.eq.s32.totalorder %s22, 0
    %s25 = sadd.s32 %s24, 1
    %s26 = scalar_select %p23, %s24, %s25
    %p29 = pneg %p23
    %p30 = scmp.eq.s32.totalorder %s14, 1
    %p31 = por %p29, %p30
    %p32 = scmp.ne.s32.totalorder %s24, %s27
    %p33 = scmp.eq.s32.totalorder %s14, 0
    %p34 = por %p32, %p33
    %p35 = scmp.ne.s32.totalorder %s24, %s27
    %p36 = scmp.eq.s32.totalorder %s19, 1
    %p37 = por %p35, %p36
    %p38 = scmp.ne.s32.totalorder %s27, %s28
    %p39 = scmp.eq.s32.totalorder %s19, 0
    %p40 = por %p38, %p39
    %p41 = scmp.ne.s32.totalorder %s27, %s28
    %p42 = scmp.eq.s32.totalorder %s20, 1
    %p43 = por %p41, %p42
    %p45 = scmp.ne.s32.totalorder %s28, %s44
    %p46 = scmp.eq.s32.totalorder %s20, 0
    %p47 = por %p45, %p46
    %s49 = sadd.s32 %s48, 1
    %p52 = scmp.eq.s32.totalorder %s14, 1
    %p53 = scmp.ne.s32.totalorder %s48, %s50
    %p54 = scmp.eq.s32.totalorder %s14, 0
    %p55 = por %p53, %p54
    %p56 = scmp.ne.s32.totalorder %s48, %s50
    %p57 = scmp.eq.s32.totalorder %s19, 1
    %p58 = por %p56, %p57
    %p59 = scmp.ne.s32.totalorder %s50, %s51
    %p60 = scmp.eq.s32.totalorder %s19, 0
    %p61 = por %p59, %p60
    %p62 = scmp.ne.s32.totalorder %s50, %s51
    %p63 = scmp.eq.s32.totalorder %s20, 1
    %p64 = por %p62, %p63
    %p66 = scmp.ne.s32.totalorder %s51, %s65
    %p67 = scmp.eq.s32.totalorder %s20, 0
    %p68 = por %p66, %p67
    %s70 = sadd.s32 %s69, 1
    %p73 = scmp.eq.s32.totalorder %s14, 1
    %p74 = scmp.ne.s32.totalorder %s69, %s71
    %p75 = scmp.eq.s32.totalorder %s14, 0
    %p76 = por %p74, %p75
    %p77 = scmp.ne.s32.totalorder %s69, %s71
    %p78 = scmp.eq.s32.totalorder %s19, 1
    %p79 = por %p77, %p78
    %p80 = scmp.ne.s32.totalorder %s71, %s72
    %p81 = scmp.eq.s32.totalorder %s19, 0
    %p82 = por %p80, %p81
    %p83 = scmp.ne.s32.totalorder %s71, %s72
    %p84 = scmp.eq.s32.totalorder %s20, 1
    %p85 = por %p83, %p84
    %p87 = scmp.ne.s32.totalorder %s72, %s86
    %p88 = scmp.eq.s32.totalorder %s20, 0
    %p89 = por %p87, %p88
    %s91 = sadd.s32 %s90, 1
    %p94 = scmp.eq.s32.totalorder %s14, 1
    %p95 = scmp.ne.s32.totalorder %s90, %s92
    %p96 = scmp.eq.s32.totalorder %s14, 0
    %p97 = por %p95, %p96
    %p98 = scmp.ne.s32.totalorder %s90, %s92
    %p99 = scmp.eq.s32.totalorder %s19, 1
    %p100 = por %p98, %p99
    %p101 = scmp.ne.s32.totalorder %s92, %s93
    %p102 = scmp.eq.s32.totalorder %s19, 0
    %p103 = por %p101, %p102
    %p104 = scmp.ne.s32.totalorder %s92, %s93
    %p105 = scmp.eq.s32.totalorder %s20, 1
    %p106 = por %p104, %p105
    %p108 = scmp.ne.s32.totalorder %s93, %s107
    %p109 = scmp.eq.s32.totalorder %s20, 0
    %p110 = por %p108, %p109
    %s112 = sadd.s32 %s111, 1
    %p115 = scmp.eq.s32.totalorder %s14, 1
    %p116 = scmp.ne.s32.totalorder %s111, %s113
    %p117 = scmp.eq.s32.totalorder %s14, 0
    %p118 = por %p116, %p117
    %p119 = scmp.ne.s32.totalorder %s111, %s113
    %p120 = scmp.eq.s32.totalorder %s19, 1
    %p121 = por %p119, %p120
    %p122 = scmp.ne.s32.totalorder %s113, %s114
    %p123 = scmp.eq.s32.totalorder %s19, 0
    %p124 = por %p122, %p123
    %p125 = scmp.ne.s32.totalorder %s113, %s114
    %p126 = scmp.eq.s32.totalorder %s20, 1
    %p127 = por %p125, %p126
    %p129 = scmp.ne.s32.totalorder %s114, %s128
    %p130 = scmp.eq.s32.totalorder %s20, 0
    %p131 = por %p129, %p130
    %s133 = sadd.s32 %s132, 1
    %p136 = scmp.eq.s32.totalorder %s14, 1
    %p137 = scmp.ne.s32.totalorder %s132, %s134
    %p138 = scmp.eq.s32.totalorder %s14, 0
    %p139 = por %p137, %p138
    %p140 = scmp.ne.s32.totalorder %s132, %s134
    %p141 = scmp.eq.s32.totalorder %s19, 1
    %p142 = por %p140, %p141
    %p143 = scmp.ne.s32.totalorder %s134, %s135
    %p144 = scmp.eq.s32.totalorder %s19, 0
    %p145 = por %p143, %p144
    %p146 = scmp.ne.s32.totalorder %s134, %s135
    %p147 = scmp.eq.s32.totalorder %s20, 1
    %p148 = por %p146, %p147
    %p150 = scmp.ne.s32.totalorder %s135, %s149
    %p151 = scmp.eq.s32.totalorder %s20, 0
    %p152 = por %p150, %p151
    %s154 = sadd.s32 %s153, 1
    %p157 = scmp.eq.s32.totalorder %s14, 1
    %p158 = scmp.ne.s32.totalorder %s153, %s155
    %p159 = scmp.eq.s32.totalorder %s14, 0
    %p160 = por %p158, %p159
    %p161 = scmp.ne.s32.totalorder %s153, %s155
    %p162 = scmp.eq.s32.totalorder %s19, 1
    %p163 = por %p161, %p162
    %p164 = scmp.ne.s32.totalorder %s155, %s156
    %p165 = scmp.eq.s32.totalorder %s19, 0
    %p166 = por %p164, %p165
    %p167 = scmp.ne.s32.totalorder %s155, %s156
    %p168 = scmp.eq.s32.totalorder %s20, 1
    %p169 = por %p167, %p168
    %p171 = scmp.ne.s32.totalorder %s156, %s170
    %p172 = scmp.eq.s32.totalorder %s20, 0
    %p173 = por %p171, %p172
    %s175 = sadd.s32 %s174, 1
    %p178 = scmp.eq.s32.totalorder %s14, 1
    %p179 = scmp.ne.s32.totalorder %s174, %s176
    %p180 = scmp.eq.s32.totalorder %s14, 0
    %p181 = por %p179, %p180
    %p182 = scmp.ne.s32.totalorder %s174, %s176
    %p183 = scmp.eq.s32.totalorder %s19, 1
    %p184 = por %p182, %p183
    %p185 = scmp.ne.s32.totalorder %s176, %s177
    %p186 = scmp.eq.s32.totalorder %s19, 0
    %p187 = por %p185, %p186
    %p188 = scmp.ne.s32.totalorder %s176, %s177
    %p189 = scmp.eq.s32.totalorder %s20, 1
    %p190 = por %p188, %p189
    %p192 = scmp.ne.s32.totalorder %s177, %s191
    %p193 = scmp.eq.s32.totalorder %s20, 0
    %p194 = por %p192, %p193
    %s195 = ssub.s32 %s14, %s21
    %p196 = scmp.eq.s32.totalorder %s195, 0
    %s198 = sadd.s32 %s197, 1
    %s199 = scalar_select %p196, %s197, %s198
    %p202 = pneg %p196
    %p203 = scmp.eq.s32.totalorder %s14, 1
    %p204 = por %p202, %p203
    %p205 = scmp.ne.s32.totalorder %s197, %s200
    %p206 = scmp.eq.s32.totalorder %s14, 0
    %p207 = por %p205, %p206
    %p208 = scmp.ne.s32.totalorder %s197, %s200
    %p209 = scmp.eq.s32.totalorder %s19, 1
    %p210 = por %p208, %p209
    %p211 = scmp.ne.s32.totalorder %s200, %s201
    %p212 = scmp.eq.s32.totalorder %s19, 0
    %p213 = por %p211, %p212
    %p214 = scmp.ne.s32.totalorder %s200, %s201
    %p215 = scmp.eq.s32.totalorder %s20, 1
    %p216 = por %p214, %p215
    %p218 = scmp.ne.s32.totalorder %s201, %s217
    %p219 = scmp.eq.s32.totalorder %s20, 0
    %p220 = por %p218, %p219
    %p221 = scmp.le.s32.totalorder 1, %s14
    %p222 = scmp.lt.s32.totalorder %s14, 3
    %p223 = pnand %p221, %p222
    %p224 = pneg %p223
    // Predicated region
    $region9: #{inception_block_a.1} parent=5 // pred_check
      _
    $region10: #{inception_block_a.1} parent=5 // pred_check_branch
      %226 = sbr.rel (%p223) target = $region12
    $region11: #{inception_block_a.1} parent=5 // pred_region
      %s227 = ssub.s32 %s14, 1
      // Predicated region
      $region13: #{inception_block_a.1} parent=11 // pred_check
        %p228 = pneg %p61
      $region14: #{inception_block_a.1} parent=11 // pred_check_branch
        %230 = sbr.rel (%p228) target = $region16
      $region15: #{inception_block_a.1} parent=11 // pred_region
        _
      $region16: #{inception_block_a.1} parent=11 // pred_fallthru
        _
      // Predicated region
      $region17: #{inception_block_a.1} parent=11 // pred_check
        %p231 = pneg %p82
      $region18: #{inception_block_a.1} parent=11 // pred_check_branch
        %233 = sbr.rel (%p231) target = $region20
      $region19: #{inception_block_a.1} parent=11 // pred_region
        _
      $region20: #{inception_block_a.1} parent=11 // pred_fallthru
        _
      // Predicated region
      $region21: #{inception_block_a.1} parent=11 // pred_check
        %p234 = pneg %p103
      $region22: #{inception_block_a.1} parent=11 // pred_check_branch
        %236 = sbr.rel (%p234) target = $region24
      $region23: #{inception_block_a.1} parent=11 // pred_region
        _
      $region24: #{inception_block_a.1} parent=11 // pred_fallthru
        _
      // Predicated region
      $region25: #{inception_block_a.1} parent=11 // pred_check
        %p237 = pneg %p124
      $region26: #{inception_block_a.1} parent=11 // pred_check_branch
        %239 = sbr.rel (%p237) target = $region28
      $region27: #{inception_block_a.1} parent=11 // pred_region
        _
      $region28: #{inception_block_a.1} parent=11 // pred_fallthru
        _
      // Predicated region
      $region29: #{inception_block_a.1} parent=11 // pred_check
        %p240 = pneg %p145
      $region30: #{inception_block_a.1} parent=11 // pred_check_branch
        %242 = sbr.rel (%p240) target = $region32
      $region31: #{inception_block_a.1} parent=11 // pred_region
        _
      $region32: #{inception_block_a.1} parent=11 // pred_fallthru
        _
      // Predicated region
      $region33: #{inception_block_a.1} parent=11 // pred_check
        %p243 = pneg %p166
      $region34: #{inception_block_a.1} parent=11 // pred_check_branch
        %245 = sbr.rel (%p243) target = $region36
      $region35: #{inception_block_a.1} parent=11 // pred_region
        _
      $region36: #{inception_block_a.1} parent=11 // pred_fallthru
        _
      // Predicated region
      $region37: #{inception_block_a.1} parent=11 // pred_check
        %p246 = pneg %p187
      $region38: #{inception_block_a.1} parent=11 // pred_check_branch
        %248 = sbr.rel (%p246) target = $region40
      $region39: #{inception_block_a.1} parent=11 // pred_region
        _
      $region40: #{inception_block_a.1} parent=11 // pred_fallthru
        _
    $region12: #{inception_block_a.1} parent=5 // pred_fallthru
      _
    %p249 = scmp.lt.s32.totalorder %s14, 2
    // Predicated region
    $region41: #{inception_block_a.1} parent=5 // pred_check
      %p250 = pneg %p249
    $region42: #{inception_block_a.1} parent=5 // pred_check_branch
      %252 = sbr.rel (%p250) target = $region44
    $region43: #{inception_block_a.1} parent=5 // pred_region
      // Predicated region
      $region45: #{inception_block_a.1} parent=43 // pred_check
        %p253 = pneg %p34
      $region46: #{inception_block_a.1} parent=43 // pred_check_branch
        %255 = sbr.rel (%p253) target = $region48
      $region47: #{inception_block_a.1} parent=43 // pred_region
        %s256 = smul.u32 2, %s14
        %p257 = scmp.lt.s32.totalorder %s256, 3
        %s258 = scalar_select %p257, %s256, 3
        %s259 = smul.addr %s258, 2
        %s260 = smul.addr %s259, 4
        %s261 = scalar_lea.vmem %s0, %s260
        %s262 = smul.u32 2, %s14
      $region48: #{inception_block_a.1} parent=43 // pred_fallthru
        _
    $region44: #{inception_block_a.1} parent=5 // pred_fallthru
      _
    %p263 = scmp.le.s32.totalorder 1, %s14
    %p264 = scmp.lt.s32.totalorder %s14, 3
    %p265 = pnand %p263, %p264
    %p266 = pneg %p265
    // Predicated region
    $region49: #{inception_block_a.1} parent=5 // pred_check
      _
    $region50: #{inception_block_a.1} parent=5 // pred_check_branch
      %268 = sbr.rel (%p265) target = $region52
    $region51: #{inception_block_a.1} parent=5 // pred_region
      %s269 = ssub.s32 %s14, 1
      %s270 = smul.u32 2, %s19
      %p271 = scmp.lt.s32.totalorder %s270, 3
      %s272 = scalar_select %p271, %s270, 3
      %s273 = smul.addr %s272, 2
      %s274 = smul.addr %s273, 4
      %s275 = scalar_lea.vmem %s0, %s274
      %p276 = pneg %p40
      %p277 = pneg %p37
      %p278 = pneg %p61
      %p279 = pneg %p58
      %p280 = pneg %p82
      %p281 = pneg %p79
      %p282 = pneg %p103
      %p283 = pneg %p100
      %p284 = pneg %p124
      %p285 = pneg %p121
      %p286 = pneg %p145
      %p287 = pneg %p142
      %p288 = pneg %p166
      %p289 = pneg %p163
      %p290 = pneg %p187
      %p291 = pneg %p184
      %p292 = pneg %p213
      %p293 = pneg %p210
      %s294 = smul.u32 2, %s19
      %p295 = scmp.lt.s32.totalorder %s294, 3
      %s296 = scalar_select %p295, %s294, 3
      %s297 = smul.addr %s296, 8
      %s298 = smul.addr %s297, 8
      %s299 = scalar_lea.vmem %s8, %s298
      %s300 = smul.u32 2, %s19
      %p301 = scmp.lt.s32.totalorder %s300, 3
      %s302 = scalar_select %p301, %s300, 3
      %s303 = smul.addr %s302, 2
      %s304 = smul.addr %s303, 4
      %s305 = scalar_lea.vmem %s0, %s304
      %s306 = smul.u32 2, %s19
      %s307 = smul.u32 2, %s19
      %p308 = scmp.lt.s32.totalorder %s307, 3
      %s309 = scalar_select %p308, %s307, 3
      %s310 = smul.addr %s309, 8
      %s311 = smul.addr %s310, 8
      %s312 = scalar_lea.vmem %s8, %s311
      %s313 = smul.u32 2, %s19
      %314 = vst [vmem:[#allocation2] sm:$0xf] 0.0
      %315 = vst [vmem:[#allocation2 + $0x14] sm:$0xf] 0.0
      %316 = vst [vmem:[#allocation3] sm:$0xff] 0.0
      %317 = vst [vmem:[#allocation3 + $0x28] sm:$0xff] 0.0
      %318 = vst [vmem:[#allocation4] sm:$0xff] 0.0
      %319 = vst [vmem:[#allocation4 + $0x28] sm:$0xff] 0.0
      %v320 = vld [vmem:[%s305] sm:$0xff]
      %321 = vst [vmem:[#allocation2 + $0x4] sm:$0xff] %v320
      %s322 = scalar_lea.vmem %s305, 8
      %v323 = vld [vmem:[%s322] sm:$0xff]
      %324 = vst [vmem:[#allocation2 + $0xc] sm:$0xff] %v323
      %v325 = vld [vmem:[#allocation2 + $0x4] sm:$0xff]
      %v326 = vld [vmem:[#allocation2 + $0xc] sm:$0xff]
      %v327 = vld [vmem:[%s2] sm:$0xff]
      %v328 = vld [vmem:[%s2 + $0x8] sm:$0xff]
      %v329 = vld [vmem:[%s2 + $0x10] sm:$0xff]
      %v330 = vld [vmem:[%s3] sm:$0xff]
      %v331 = vld [vmem:[%s3 + $0x8] sm:$0xff]
      %v332 = vld [vmem:[%s3 + $0x10] sm:$0xff]
      %334 = vset.pattern.permute.xlu0 0
      %335 = vperm.xlu0 %334, %v330
      %v336 = vpop.permute.xlu0 %335
      %339 = vset.pattern.permute.xlu0 0
      %340 = vperm.xlu0 %339, %v331
      %v341 = vpop.permute.xlu0 %340
      %344 = vset.pattern.permute.xlu0 0
      %345 = vperm.xlu0 %344, %v332
      %v346 = vpop.permute.xlu0 %345
      %350 = vst [vmem:[#allocation1] ss:$2 sm:$0xff] %v325
      %s351 = scalar_lea.vmem [#allocation1], 16
      %352 = vst [vmem:[%s351] ss:$2 sm:$0xff] %v326
      %v353 = vld.sshfl [vmem:[#allocation1] sm:$0xff pattern:$0x75316420]
      %v354 = vld.sshfl [vmem:[#allocation1 + $0x8] sm:$0xff pattern:$0x75316420]
      %v355 = vld.sshfl [vmem:[#allocation1 + $0x10] sm:$0xff pattern:$0x75316420]
      %v356 = vld.sshfl [vmem:[#allocation1 + $0x18] sm:$0xff pattern:$0x75316420]
      %vm357 = vcmask 31744
      %v359 = vsel %vm357, %v327, 0
      %v362 = vsel %vm357, %v328, 0
      %v365 = vsel %vm357, %v329, 0
      %vm367 = vcmask 1043456
      %v368 = vsel %vm367, %v353, 0
      %v370 = vsel %vm367, %v354, 0
      %v372 = vsel %vm367, %v355, 0
      %v374 = vsel %vm367, %v356, 0
      %376 = vmatpush.msra.mxu0 0.0
      %377 = vmatpush.msra.mxu0 0.0
      %378 = vmatpush.msra.mxu0 0.0
      %379 = vmatpush.msra.mxu0 0.0
      %380 = vmatpush.msra.mxu0 0.0
      %381 = vmatpush.msra.mxu0 0.0
      %382 = vmatpush.msra.mxu0 0.0
      %383 = vmatpush.msra.mxu0 0.0
      %384 = vmatpush.msra.mxu0 0.0
      %385 = vmatpush.msra.mxu0 0.0
      %386 = vmatpush.msra.mxu0 0.0
      %387 = vmatpush.msra.mxu0 0.0
      %388 = vmatpush.msra.mxu0 0.0
      %389 = vmatpush.msra.mxu0 0.0
      %390 = vmatpush.msra.mxu0 0.0
      %391 = vmatpush.msra.mxu0 %v368
      %392 = vmatmul.f32.gmra.mxu0 %v359
      %v393 = vpop.f32.mrf.mxu0
      %v394 = vadd.f32 %v336, %v393
      %395 = vmatmul.f32.gmra.mxu0 %v362
      %v396 = vpop.f32.mrf.mxu0
      %v397 = vadd.f32 %v341, %v396
      %398 = vmatmul.f32.gmra.mxu0 %v365
      %v399 = vpop.f32.mrf.mxu0
      %v400 = vadd.f32 %v346, %v399
      %401 = vdwg.mxu0
      %402 = vmatpush.msra.mxu0 0.0
      %403 = vmatpush.msra.mxu0 0.0
      %404 = vmatpush.msra.mxu0 0.0
      %405 = vmatpush.msra.mxu0 0.0
      %406 = vmatpush.msra.mxu0 0.0
      %407 = vmatpush.msra.mxu0 0.0
      %408 = vmatpush.msra.mxu0 0.0
      %409 = vmatpush.msra.mxu0 0.0
      %410 = vmatpush.msra.mxu0 0.0
      %411 = vmatpush.msra.mxu0 0.0
      %412 = vmatpush.msra.mxu0 0.0
      %413 = vmatpush.msra.mxu0 0.0
      %414 = vmatpush.msra.mxu0 0.0
      %415 = vmatpush.msra.mxu0 0.0
      %416 = vmatpush.msra.mxu0 0.0
      %417 = vmatpush.msra.mxu0 %v370
      %418 = vmatmul.f32.gmra.mxu0 %v359
      %v419 = vpop.f32.mrf.mxu0
      %v420 = vadd.f32 %v336, %v419
      %421 = vmatmul.f32.gmra.mxu0 %v362
      %v422 = vpop.f32.mrf.mxu0
      %v423 = vadd.f32 %v341, %v422
      %424 = vmatmul.f32.gmra.mxu0 %v365
      %v425 = vpop.f32.mrf.mxu0
      %v426 = vadd.f32 %v346, %v425
      %427 = vdwg.mxu0
      %428 = vmatpush.msra.mxu0 0.0
      %429 = vmatpush.msra.mxu0 0.0
      %430 = vmatpush.msra.mxu0 0.0
      %431 = vmatpush.msra.mxu0 0.0
      %432 = vmatpush.msra.mxu0 0.0
      %433 = vmatpush.msra.mxu0 0.0
      %434 = vmatpush.msra.mxu0 0.0
      %435 = vmatpush.msra.mxu0 0.0
      %436 = vmatpush.msra.mxu0 0.0
      %437 = vmatpush.msra.mxu0 0.0
      %438 = vmatpush.msra.mxu0 0.0
      %439 = vmatpush.msra.mxu0 0.0
      %440 = vmatpush.msra.mxu0 0.0
      %441 = vmatpush.msra.mxu0 0.0
      %442 = vmatpush.msra.mxu0 0.0
      %443 = vmatpush.msra.mxu0 %v372
      %444 = vmatmul.f32.gmra.mxu0 %v359
      %v445 = vpop.f32.mrf.mxu0
      %v446 = vadd.f32 %v336, %v445
      %447 = vmatmul.f32.gmra.mxu0 %v362
      %v448 = vpop.f32.mrf.mxu0
      %v449 = vadd.f32 %v341, %v448
      %450 = vmatmul.f32.gmra.mxu0 %v365
      %v451 = vpop.f32.mrf.mxu0
      %v452 = vadd.f32 %v346, %v451
      %453 = vdwg.mxu0
      %454 = vmatpush.msra.mxu0 0.0
      %455 = vmatpush.msra.mxu0 0.0
      %456 = vmatpush.msra.mxu0 0.0
      %457 = vmatpush.msra.mxu0 0.0
      %458 = vmatpush.msra.mxu0 0.0
      %459 = vmatpush.msra.mxu0 0.0
      %460 = vmatpush.msra.mxu0 0.0
      %461 = vmatpush.msra.mxu0 0.0
      %462 = vmatpush.msra.mxu0 0.0
      %463 = vmatpush.msra.mxu0 0.0
      %464 = vmatpush.msra.mxu0 0.0
      %465 = vmatpush.msra.mxu0 0.0
      %466 = vmatpush.msra.mxu0 0.0
      %467 = vmatpush.msra.mxu0 0.0
      %468 = vmatpush.msra.mxu0 0.0
      %469 = vmatpush.msra.mxu0 %v374
      %470 = vmatmul.f32.gmra.mxu0 %v359
      %v471 = vpop.f32.mrf.mxu0
      %v472 = vadd.f32 %v336, %v471
      %473 = vmatmul.f32.gmra.mxu0 %v362
      %v474 = vpop.f32.mrf.mxu0
      %v475 = vadd.f32 %v341, %v474
      %476 = vmatmul.f32.gmra.mxu0 %v365
      %v477 = vpop.f32.mrf.mxu0
      %v478 = vadd.f32 %v346, %v477
      %479 = vdwg.mxu0
      %v480 = vmax.f32 %v394, 0.0
      %v481 = vmax.f32 %v420, 0.0
      %v482 = vmax.f32 %v446, 0.0
      %v483 = vmax.f32 %v472, 0.0
      %v484 = vmax.f32 %v397, 0.0
      %v485 = vmax.f32 %v423, 0.0
      %v486 = vmax.f32 %v449, 0.0
      %v487 = vmax.f32 %v475, 0.0
      %v488 = vmax.f32 %v400, 0.0
      %v489 = vmax.f32 %v426, 0.0
      %v490 = vmax.f32 %v452, 0.0
      %v491 = vmax.f32 %v478, 0.0
      %492 = vst [vmem:[#allocation3 + $0x8] sm:$0xff] %v484
      %493 = vst [vmem:[#allocation3 + $0x10] sm:$0xff] %v485
      %494 = vst [vmem:[#allocation3 + $0x18] sm:$0xff] %v486
      %495 = vst [vmem:[#allocation3 + $0x20] sm:$0xff] %v487
      %496 = vst [vmem:[#allocation4 + $0x8] sm:$0xff] %v488
      %497 = vst [vmem:[#allocation4 + $0x10] sm:$0xff] %v489
      %498 = vst [vmem:[#allocation4 + $0x18] sm:$0xff] %v490
      %499 = vst [vmem:[#allocation4 + $0x20] sm:$0xff] %v491
      %v500 = vld [vmem:[%s7] sm:$0xff]
      %v501 = vld [vmem:[%s7 + $0x8] sm:$0xff]
      %v502 = vld [vmem:[%s7 + $0x10] sm:$0xff]
      %v503 = vld [vmem:[%s4] sm:$0xff]
      %v504 = vld [vmem:[#allocation3] sm:$0xff]
      %v505 = vld [vmem:[#allocation3 + $0x8] sm:$0xff]
      %v506 = vld [vmem:[#allocation3 + $0x10] sm:$0xff]
      %v507 = vld [vmem:[#allocation3 + $0x18] sm:$0xff]
      %v508 = vld [vmem:[#allocation3 + $0x20] sm:$0xff]
      %s509 = scalar_lea.vmem %s1, 6
      %v510 = vld [vmem:[%s509] ss:$8 sm:$0xf]
      %v512 = vperm.slane %v510, 0
      %v513 = vperm.slane %v510, 1
      %v514 = vperm.slane %v510, 2
      %v515 = vperm.slane %v510, 3
      %516 = vrot.lane.b32.xlu0 %v512, 111
      %v517 = vpop.permute.xlu0 %516
      %518 = vrot.lane.b32.xlu0 %v513, 111
      %v519 = vpop.permute.xlu0 %518
      %520 = vrot.lane.b32.xlu0 %v514, 111
      %v521 = vpop.permute.xlu0 %520
      %522 = vrot.lane.b32.xlu0 %v515, 111
      %v523 = vpop.permute.xlu0 %522
      %vm524 = vcmask 908288
      %v525 = vsel %vm524, %v517, %v519
      %v526 = vsel %vm524, %v519, %v521
      %v527 = vsel %vm524, %v521, %v523
      %v533 = vmul.f32 %v504, %v517
      %v534 = vmul.f32 %v505, %v525
      %v535 = vmul.f32 %v506, %v526
      %v536 = vmul.f32 %v507, %v527
      %v537 = vmul.f32 %v508, %v523
      %s538 = scalar_lea.vmem %s1, 7
      %v539 = vld [vmem:[%s538] ss:$8 sm:$0xf]
      %v541 = vperm.slane %v539, 0
      %v542 = vperm.slane %v539, 1
      %v543 = vperm.slane %v539, 2
      %v544 = vperm.slane %v539, 3
      %545 = vrot.lane.b32.xlu0 %v541, 112
      %v546 = vpop.permute.xlu0 %545
      %547 = vrot.lane.b32.xlu0 %v542, 112
      %v548 = vpop.permute.xlu0 %547
      %549 = vrot.lane.b32.xlu0 %v543, 112
      %v550 = vpop.permute.xlu0 %549
      %551 = vrot.lane.b32.xlu0 %v544, 112
      %v552 = vpop.permute.xlu0 %551
      %vm553 = vcmask 916480
      %v554 = vsel %vm553, %v546, %v548
      %v555 = vsel %vm553, %v548, %v550
      %v556 = vsel %vm553, %v550, %v552
      %v562 = vmul.f32 %v504, %v546
      %v563 = vmul.f32 %v505, %v554
      %v564 = vmul.f32 %v506, %v555
      %v565 = vmul.f32 %v507, %v556
      %v566 = vmul.f32 %v508, %v552
      %s567 = scalar_lea.vmem %s1, 32
      %v568 = vld [vmem:[%s567] ss:$8 sm:$0xf]
      %v570 = vperm.slane %v568, 0
      %v571 = vperm.slane %v568, 1
      %v572 = vperm.slane %v568, 2
      %v573 = vperm.slane %v568, 3
      %574 = vrot.lane.b32.xlu0 %v570, 113
      %v575 = vpop.permute.xlu0 %574
      %576 = vrot.lane.b32.xlu0 %v571, 113
      %v577 = vpop.permute.xlu0 %576
      %578 = vrot.lane.b32.xlu0 %v572, 113
      %v579 = vpop.permute.xlu0 %578
      %580 = vrot.lane.b32.xlu0 %v573, 113
      %v581 = vpop.permute.xlu0 %580
      %vm582 = vcmask 924672
      %v583 = vsel %vm582, %v575, %v577
      %v584 = vsel %vm582, %v577, %v579
      %v585 = vsel %vm582, %v579, %v581
      %v591 = vmul.f32 %v504, %v575
      %v592 = vmul.f32 %v505, %v583
      %v593 = vmul.f32 %v506, %v584
      %v594 = vmul.f32 %v507, %v585
      %v595 = vmul.f32 %v508, %v581
      %s596 = scalar_lea.vmem %s1, 35
      %v597 = vld [vmem:[%s596] ss:$8 sm:$0xf]
      %v599 = vperm.slane %v597, 0
      %v600 = vperm.slane %v597, 1
      %v601 = vperm.slane %v597, 2
      %v602 = vperm.slane %v597, 3
      %603 = vrot.lane.b32.xlu0 %v599, 127
      %v604 = vpop.permute.xlu0 %603
      %605 = vrot.lane.b32.xlu0 %v600, 127
      %v606 = vpop.permute.xlu0 %605
      %607 = vrot.lane.b32.xlu0 %v601, 127
      %v608 = vpop.permute.xlu0 %607
      %609 = vrot.lane.b32.xlu0 %v602, 127
      %v610 = vpop.permute.xlu0 %609
      %vm611 = vcmask 1039360
      %v612 = vsel %vm611, %v604, %v606
      %v613 = vsel %vm611, %v606, %v608
      %v614 = vsel %vm611, %v608, %v610
      %v620 = vmul.f32 %v504, %v604
      %v621 = vmul.f32 %v505, %v612
      %v622 = vmul.f32 %v506, %v613
      %v623 = vmul.f32 %v507, %v614
      %v624 = vmul.f32 %v508, %v610
      %s625 = scalar_lea.vmem %s1, 36
      %v626 = vld [vmem:[%s625] ss:$8 sm:$0xf]
      %v628 = vperm.slane %v626, 0
      %v629 = vperm.slane %v626, 1
      %v630 = vperm.slane %v626, 2
      %v631 = vperm.slane %v626, 3
      %v636 = vmul.f32 %v505, %v628
      %v637 = vmul.f32 %v506, %v629
      %v638 = vmul.f32 %v507, %v630
      %v639 = vmul.f32 %v508, %v631
      %v640 = vld [vmem:[#allocation3 + $0x8] sm:$0xff]
      %v641 = vld [vmem:[#allocation3 + $0x10] sm:$0xff]
      %v642 = vld [vmem:[#allocation3 + $0x18] sm:$0xff]
      %v643 = vld [vmem:[#allocation3 + $0x20] sm:$0xff]
      %v644 = vld [vmem:[#allocation3 + $0x28] sm:$0xff]
      %s645 = scalar_lea.vmem %s1, 37
      %v646 = vld [vmem:[%s645] ss:$8 sm:$0xf]
      %v648 = vperm.slane %v646, 0
      %v649 = vperm.slane %v646, 1
      %v650 = vperm.slane %v646, 2
      %v651 = vperm.slane %v646, 3
      %652 = vrot.lane.b32.xlu0 %v648, 1
      %v653 = vpop.permute.xlu0 %652
      %654 = vrot.lane.b32.xlu0 %v649, 1
      %v655 = vpop.permute.xlu0 %654
      %656 = vrot.lane.b32.xlu0 %v650, 1
      %v657 = vpop.permute.xlu0 %656
      %658 = vrot.lane.b32.xlu0 %v651, 1
      %v659 = vpop.permute.xlu0 %658
      %vm660 = vcmask 7168
      %v661 = vsel %vm660, %v653, %v655
      %v662 = vsel %vm660, %v655, %v657
      %v663 = vsel %vm660, %v657, %v659
      %v669 = vmul.f32 %v640, %v653
      %v670 = vmul.f32 %v641, %v661
      %v671 = vmul.f32 %v642, %v662
      %v672 = vmul.f32 %v643, %v663
      %v673 = vmul.f32 %v644, %v659
      %s674 = scalar_lea.vmem %s1, 64
      %v675 = vld [vmem:[%s674] ss:$8 sm:$0xf]
      %v677 = vperm.slane %v675, 0
      %v678 = vperm.slane %v675, 1
      %v679 = vperm.slane %v675, 2
      %v680 = vperm.slane %v675, 3
      %681 = vrot.lane.b32.xlu0 %v677, 15
      %v682 = vpop.permute.xlu0 %681
      %683 = vrot.lane.b32.xlu0 %v678, 15
      %v684 = vpop.permute.xlu0 %683
      %685 = vrot.lane.b32.xlu0 %v679, 15
      %v686 = vpop.permute.xlu0 %685
      %687 = vrot.lane.b32.xlu0 %v680, 15
      %v688 = vpop.permute.xlu0 %687
      %vm689 = vcmask 121856
      %v690 = vsel %vm689, %v682, %v684
      %v691 = vsel %vm689, %v684, %v686
      %v692 = vsel %vm689, %v686, %v688
      %v698 = vmul.f32 %v640, %v682
      %v699 = vmul.f32 %v641, %v690
      %v700 = vmul.f32 %v642, %v691
      %v701 = vmul.f32 %v643, %v692
      %v702 = vmul.f32 %v644, %v688
      %s703 = scalar_lea.vmem %s1, 65
      %v704 = vld [vmem:[%s703] ss:$8 sm:$0xf]
      %v706 = vperm.slane %v704, 0
      %v707 = vperm.slane %v704, 1
      %v708 = vperm.slane %v704, 2
      %v709 = vperm.slane %v704, 3
      %710 = vrot.lane.b32.xlu0 %v706, 16
      %v711 = vpop.permute.xlu0 %710
      %712 = vrot.lane.b32.xlu0 %v707, 16
      %v713 = vpop.permute.xlu0 %712
      %714 = vrot.lane.b32.xlu0 %v708, 16
      %v715 = vpop.permute.xlu0 %714
      %716 = vrot.lane.b32.xlu0 %v709, 16
      %v717 = vpop.permute.xlu0 %716
      %vm718 = vcmask 130048
      %v719 = vsel %vm718, %v711, %v713
      %v720 = vsel %vm718, %v713, %v715
      %v721 = vsel %vm718, %v715, %v717
      %v727 = vmul.f32 %v640, %v711
      %v728 = vmul.f32 %v641, %v719
      %v729 = vmul.f32 %v642, %v720
      %v730 = vmul.f32 %v643, %v721
      %v731 = vmul.f32 %v644, %v717
      %s732 = scalar_lea.vmem %s1, 66
      %v733 = vld [vmem:[%s732] ss:$8 sm:$0xf]
      %v735 = vperm.slane %v733, 0
      %v736 = vperm.slane %v733, 1
      %v737 = vperm.slane %v733, 2
      %v738 = vperm.slane %v733, 3
      %739 = vrot.lane.b32.xlu0 %v735, 17
      %v740 = vpop.permute.xlu0 %739
      %741 = vrot.lane.b32.xlu0 %v736, 17
      %v742 = vpop.permute.xlu0 %741
      %743 = vrot.lane.b32.xlu0 %v737, 17
      %v744 = vpop.permute.xlu0 %743
      %745 = vrot.lane.b32.xlu0 %v738, 17
      %v746 = vpop.permute.xlu0 %745
      %vm747 = vcmask 138240
      %v748 = vsel %vm747, %v740, %v742
      %v749 = vsel %vm747, %v742, %v744
      %v750 = vsel %vm747, %v744, %v746
      %v756 = vmul.f32 %v640, %v740
      %v757 = vmul.f32 %v641, %v748
      %v758 = vmul.f32 %v642, %v749
      %v759 = vmul.f32 %v643, %v750
      %v760 = vmul.f32 %v644, %v746
      %766 = vrot.lane.b32.xlu0 %v562, 127
      %v767 = vpop.permute.xlu0 %766
      %768 = vrot.lane.b32.xlu0 %v563, 127
      %v769 = vpop.permute.xlu0 %768
      %770 = vrot.lane.b32.xlu0 %v564, 127
      %v771 = vpop.permute.xlu0 %770
      %772 = vrot.lane.b32.xlu0 %v565, 127
      %v773 = vpop.permute.xlu0 %772
      %774 = vrot.lane.b32.xlu0 %v566, 127
      %v775 = vpop.permute.xlu0 %774
      %v776 = vsel %vm611, %v767, %v769
      %v777 = vsel %vm611, %v769, %v771
      %v778 = vsel %vm611, %v771, %v773
      %v779 = vsel %vm611, %v773, %v775
      %785 = vrot.lane.b32.xlu0 %v591, 126
      %v786 = vpop.permute.xlu0 %785
      %787 = vrot.lane.b32.xlu0 %v592, 126
      %v788 = vpop.permute.xlu0 %787
      %789 = vrot.lane.b32.xlu0 %v593, 126
      %v790 = vpop.permute.xlu0 %789
      %791 = vrot.lane.b32.xlu0 %v594, 126
      %v792 = vpop.permute.xlu0 %791
      %793 = vrot.lane.b32.xlu0 %v595, 126
      %v794 = vpop.permute.xlu0 %793
      %vm795 = vcmask 1031168
      %v796 = vsel %vm795, %v786, %v788
      %v797 = vsel %vm795, %v788, %v790
      %v798 = vsel %vm795, %v790, %v792
      %v799 = vsel %vm795, %v792, %v794
      %805 = vrot.lane.b32.xlu0 %v620, 112
      %v806 = vpop.permute.xlu0 %805
      %807 = vrot.lane.b32.xlu0 %v621, 112
      %v808 = vpop.permute.xlu0 %807
      %809 = vrot.lane.b32.xlu0 %v622, 112
      %v810 = vpop.permute.xlu0 %809
      %811 = vrot.lane.b32.xlu0 %v623, 112
      %v812 = vpop.permute.xlu0 %811
      %813 = vrot.lane.b32.xlu0 %v624, 112
      %v814 = vpop.permute.xlu0 %813
      %v815 = vsel %vm553, %v806, %v808
      %v816 = vsel %vm553, %v808, %v810
      %v817 = vsel %vm553, %v810, %v812
      %v818 = vsel %vm553, %v812, %v814
      %823 = vrot.lane.b32.xlu0 %v636, 111
      %v824 = vpop.permute.xlu0 %823
      %825 = vrot.lane.b32.xlu0 %v637, 111
      %v826 = vpop.permute.xlu0 %825
      %827 = vrot.lane.b32.xlu0 %v638, 111
      %v828 = vpop.permute.xlu0 %827
      %829 = vrot.lane.b32.xlu0 %v639, 111
      %v830 = vpop.permute.xlu0 %829
      %v831 = vsel %vm524, %v824, %v826
      %v832 = vsel %vm524, %v826, %v828
      %v833 = vsel %vm524, %v828, %v830
      %839 = vrot.lane.b32.xlu0 %v669, 110
      %v840 = vpop.permute.xlu0 %839
      %841 = vrot.lane.b32.xlu0 %v670, 110
      %v842 = vpop.permute.xlu0 %841
      %843 = vrot.lane.b32.xlu0 %v671, 110
      %v844 = vpop.permute.xlu0 %843
      %845 = vrot.lane.b32.xlu0 %v672, 110
      %v846 = vpop.permute.xlu0 %845
      %847 = vrot.lane.b32.xlu0 %v673, 110
      %v848 = vpop.permute.xlu0 %847
      %vm849 = vcmask 900096
      %v850 = vsel %vm849, %v840, %v842
      %v851 = vsel %vm849, %v842, %v844
      %v852 = vsel %vm849, %v844, %v846
      %v853 = vsel %vm849, %v846, %v848
      %859 = vrot.lane.b32.xlu0 %v698, 96
      %v860 = vpop.permute.xlu0 %859
      %861 = vrot.lane.b32.xlu0 %v699, 96
      %v862 = vpop.permute.xlu0 %861
      %863 = vrot.lane.b32.xlu0 %v700, 96
      %v864 = vpop.permute.xlu0 %863
      %865 = vrot.lane.b32.xlu0 %v701, 96
      %v866 = vpop.permute.xlu0 %865
      %867 = vrot.lane.b32.xlu0 %v702, 96
      %v868 = vpop.permute.xlu0 %867
      %vm869 = vcmask 785408
      %v870 = vsel %vm869, %v860, %v862
      %v871 = vsel %vm869, %v862, %v864
      %v872 = vsel %vm869, %v864, %v866
      %v873 = vsel %vm869, %v866, %v868
      %879 = vrot.lane.b32.xlu0 %v727, 95
      %v880 = vpop.permute.xlu0 %879
      %881 = vrot.lane.b32.xlu0 %v728, 95
      %v882 = vpop.permute.xlu0 %881
      %883 = vrot.lane.b32.xlu0 %v729, 95
      %v884 = vpop.permute.xlu0 %883
      %885 = vrot.lane.b32.xlu0 %v730, 95
      %v886 = vpop.permute.xlu0 %885
      %887 = vrot.lane.b32.xlu0 %v731, 95
      %v888 = vpop.permute.xlu0 %887
      %vm889 = vcmask 777216
      %v890 = vsel %vm889, %v880, %v882
      %v891 = vsel %vm889, %v882, %v884
      %v892 = vsel %vm889, %v884, %v886
      %v893 = vsel %vm889, %v886, %v888
      %899 = vrot.lane.b32.xlu0 %v756, 94
      %v900 = vpop.permute.xlu0 %899
      %901 = vrot.lane.b32.xlu0 %v757, 94
      %v902 = vpop.permute.xlu0 %901
      %903 = vrot.lane.b32.xlu0 %v758, 94
      %v904 = vpop.permute.xlu0 %903
      %905 = vrot.lane.b32.xlu0 %v759, 94
      %v906 = vpop.permute.xlu0 %905
      %907 = vrot.lane.b32.xlu0 %v760, 94
      %v908 = vpop.permute.xlu0 %907
      %vm909 = vcmask 769024
      %v910 = vsel %vm909, %v900, %v902
      %v911 = vsel %vm909, %v902, %v904
      %v912 = vsel %vm909, %v904, %v906
      %v913 = vsel %vm909, %v906, %v908
      %915 = vset.pattern.permute.xlu0 0
      %916 = vperm.xlu0 %915, %v500
      %v917 = vpop.permute.xlu0 %916
      %924 = vrot.lane.b32.xlu0 %v533, 17
      %v925 = vpop.permute.xlu0 %924
      %926 = vrot.lane.b32.xlu0 %v534, 17
      %v927 = vpop.permute.xlu0 %926
      %928 = vrot.lane.b32.xlu0 %v535, 17
      %v929 = vpop.permute.xlu0 %928
      %930 = vrot.lane.b32.xlu0 %v536, 17
      %v931 = vpop.permute.xlu0 %930
      %932 = vrot.lane.b32.xlu0 %v537, 17
      %v933 = vpop.permute.xlu0 %932
      %934 = vrot.lane.b32.xlu0 %v776, 17
      %v935 = vpop.permute.xlu0 %934
      %936 = vrot.lane.b32.xlu0 %v777, 17
      %v937 = vpop.permute.xlu0 %936
      %938 = vrot.lane.b32.xlu0 %v778, 17
      %v939 = vpop.permute.xlu0 %938
      %940 = vrot.lane.b32.xlu0 %v779, 17
      %v941 = vpop.permute.xlu0 %940
      %942 = vrot.lane.b32.xlu0 %v775, 17
      %v943 = vpop.permute.xlu0 %942
      %944 = vrot.lane.b32.xlu0 %v796, 17
      %v945 = vpop.permute.xlu0 %944
      %946 = vrot.lane.b32.xlu0 %v797, 17
      %v947 = vpop.permute.xlu0 %946
      %948 = vrot.lane.b32.xlu0 %v798, 17
      %v949 = vpop.permute.xlu0 %948
      %950 = vrot.lane.b32.xlu0 %v799, 17
      %v951 = vpop.permute.xlu0 %950
      %952 = vrot.lane.b32.xlu0 %v794, 17
      %v953 = vpop.permute.xlu0 %952
      %954 = vrot.lane.b32.xlu0 %v815, 17
      %v955 = vpop.permute.xlu0 %954
      %956 = vrot.lane.b32.xlu0 %v816, 17
      %v957 = vpop.permute.xlu0 %956
      %958 = vrot.lane.b32.xlu0 %v817, 17
      %v959 = vpop.permute.xlu0 %958
      %960 = vrot.lane.b32.xlu0 %v818, 17
      %v961 = vpop.permute.xlu0 %960
      %962 = vrot.lane.b32.xlu0 %v814, 17
      %v963 = vpop.permute.xlu0 %962
      %964 = vrot.lane.b32.xlu0 %v824, 17
      %v965 = vpop.permute.xlu0 %964
      %966 = vrot.lane.b32.xlu0 %v831, 17
      %v967 = vpop.permute.xlu0 %966
      %968 = vrot.lane.b32.xlu0 %v832, 17
      %v969 = vpop.permute.xlu0 %968
      %970 = vrot.lane.b32.xlu0 %v833, 17
      %v971 = vpop.permute.xlu0 %970
      %972 = vrot.lane.b32.xlu0 %v830, 17
      %v973 = vpop.permute.xlu0 %972
      %974 = vrot.lane.b32.xlu0 %v840, 17
      %v975 = vpop.permute.xlu0 %974
      %976 = vrot.lane.b32.xlu0 %v850, 17
      %v977 = vpop.permute.xlu0 %976
      %978 = vrot.lane.b32.xlu0 %v851, 17
      %v979 = vpop.permute.xlu0 %978
      %980 = vrot.lane.b32.xlu0 %v852, 17
      %v981 = vpop.permute.xlu0 %980
      %982 = vrot.lane.b32.xlu0 %v853, 17
      %v983 = vpop.permute.xlu0 %982
      %984 = vrot.lane.b32.xlu0 %v860, 17
      %v985 = vpop.permute.xlu0 %984
      %986 = vrot.lane.b32.xlu0 %v870, 17
      %v987 = vpop.permute.xlu0 %986
      %988 = vrot.lane.b32.xlu0 %v871, 17
      %v989 = vpop.permute.xlu0 %988
      %990 = vrot.lane.b32.xlu0 %v872, 17
      %v991 = vpop.permute.xlu0 %990
      %992 = vrot.lane.b32.xlu0 %v873, 17
      %v993 = vpop.permute.xlu0 %992
      %994 = vrot.lane.b32.xlu0 %v880, 17
      %v995 = vpop.permute.xlu0 %994
      %996 = vrot.lane.b32.xlu0 %v890, 17
      %v997 = vpop.permute.xlu0 %996
      %998 = vrot.lane.b32.xlu0 %v891, 17
      %v999 = vpop.permute.xlu0 %998
      %1000 = vrot.lane.b32.xlu0 %v892, 17
      %v1001 = vpop.permute.xlu0 %1000
      %1002 = vrot.lane.b32.xlu0 %v893, 17
      %v1003 = vpop.permute.xlu0 %1002
      %1004 = vrot.lane.b32.xlu0 %v900, 17
      %v1005 = vpop.permute.xlu0 %1004
      %1006 = vrot.lane.b32.xlu0 %v910, 17
      %v1007 = vpop.permute.xlu0 %1006
      %1008 = vrot.lane.b32.xlu0 %v911, 17
      %v1009 = vpop.permute.xlu0 %1008
      %1010 = vrot.lane.b32.xlu0 %v912, 17
      %v1011 = vpop.permute.xlu0 %1010
      %1012 = vrot.lane.b32.xlu0 %v913, 17
      %v1013 = vpop.permute.xlu0 %1012
      %v1014 = vsel %vm747, %v925, %v927
      %v1015 = vsel %vm747, %v927, %v929
      %v1016 = vsel %vm747, %v929, %v931
      %v1017 = vsel %vm747, %v931, %v933
      %v1018 = vsel %vm747, %v935, %v937
      %v1019 = vsel %vm747, %v937, %v939
      %v1020 = vsel %vm747, %v939, %v941
      %v1021 = vsel %vm747, %v941, %v943
      %v1022 = vsel %vm747, %v945, %v947
      %v1023 = vsel %vm747, %v947, %v949
      %v1024 = vsel %vm747, %v949, %v951
      %v1025 = vsel %vm747, %v951, %v953
      %v1026 = vsel %vm747, %v955, %v957
      %v1027 = vsel %vm747, %v957, %v959
      %v1028 = vsel %vm747, %v959, %v961
      %v1029 = vsel %vm747, %v961, %v963
      %v1030 = vsel %vm747, %v965, %v967
      %v1031 = vsel %vm747, %v967, %v969
      %v1032 = vsel %vm747, %v969, %v971
      %v1033 = vsel %vm747, %v971, %v973
      %v1034 = vsel %vm747, %v975, %v977
      %v1035 = vsel %vm747, %v977, %v979
      %v1036 = vsel %vm747, %v979, %v981
      %v1037 = vsel %vm747, %v981, %v983
      %v1038 = vsel %vm747, %v985, %v987
      %v1039 = vsel %vm747, %v987, %v989
      %v1040 = vsel %vm747, %v989, %v991
      %v1041 = vsel %vm747, %v991, %v993
      %v1042 = vsel %vm747, %v995, %v997
      %v1043 = vsel %vm747, %v997, %v999
      %v1044 = vsel %vm747, %v999, %v1001
      %v1045 = vsel %vm747, %v1001, %v1003
      %v1046 = vsel %vm747, %v1005, %v1007
      %v1047 = vsel %vm747, %v1007, %v1009
      %v1048 = vsel %vm747, %v1009, %v1011
      %v1049 = vsel %vm747, %v1011, %v1013
      %vm1086 = vcmask 588800
      %v1088 = vsel %vm1086, %v503, 0
      %1090 = vmatpush.msra.mxu0 0.0
      %1091 = vmatpush.msra.mxu0 0.0
      %1092 = vmatpush.msra.mxu0 0.0
      %1093 = vmatpush.msra.mxu0 0.0
      %1094 = vmatpush.msra.mxu0 0.0
      %1095 = vmatpush.msra.mxu0 0.0
      %1096 = vmatpush.msra.mxu0 0.0
      %1097 = vmatpush.msra.mxu0 %v1046
      %1098 = vmatpush.msra.mxu0 %v1042
      %1099 = vmatpush.msra.mxu0 %v1038
      %1100 = vmatpush.msra.mxu0 %v1034
      %1101 = vmatpush.msra.mxu0 %v1030
      %1102 = vmatpush.msra.mxu0 %v1026
      %1103 = vmatpush.msra.mxu0 %v1022
      %1104 = vmatpush.msra.mxu0 %v1018
      %1105 = vmatpush.msra.mxu0 %v1014
      %1106 = vmatmul.f32.gmra.mxu0 %v1088
      %v1107 = vpop.f32.mrf.mxu0
      %v1108 = vadd.f32 %v917, %v1107
      %1109 = vdwg.mxu0
      %1110 = vmatpush.msra.mxu0 0.0
      %1111 = vmatpush.msra.mxu0 0.0
      %1112 = vmatpush.msra.mxu0 0.0
      %1113 = vmatpush.msra.mxu0 0.0
      %1114 = vmatpush.msra.mxu0 0.0
      %1115 = vmatpush.msra.mxu0 0.0
      %1116 = vmatpush.msra.mxu0 0.0
      %1117 = vmatpush.msra.mxu0 %v1047
      %1118 = vmatpush.msra.mxu0 %v1043
      %1119 = vmatpush.msra.mxu0 %v1039
      %1120 = vmatpush.msra.mxu0 %v1035
      %1121 = vmatpush.msra.mxu0 %v1031
      %1122 = vmatpush.msra.mxu0 %v1027
      %1123 = vmatpush.msra.mxu0 %v1023
      %1124 = vmatpush.msra.mxu0 %v1019
      %1125 = vmatpush.msra.mxu0 %v1015
      %1126 = vmatmul.f32.gmra.mxu0 %v1088
      %v1127 = vpop.f32.mrf.mxu0
      %v1128 = vadd.f32 %v917, %v1127
      %1129 = vdwg.mxu0
      %1130 = vmatpush.msra.mxu0 0.0
      %1131 = vmatpush.msra.mxu0 0.0
      %1132 = vmatpush.msra.mxu0 0.0
      %1133 = vmatpush.msra.mxu0 0.0
      %1134 = vmatpush.msra.mxu0 0.0
      %1135 = vmatpush.msra.mxu0 0.0
      %1136 = vmatpush.msra.mxu0 0.0
      %1137 = vmatpush.msra.mxu0 %v1048
      %1138 = vmatpush.msra.mxu0 %v1044
      %1139 = vmatpush.msra.mxu0 %v1040
      %1140 = vmatpush.msra.mxu0 %v1036
      %1141 = vmatpush.msra.mxu0 %v1032
      %1142 = vmatpush.msra.mxu0 %v1028
      %1143 = vmatpush.msra.mxu0 %v1024
      %1144 = vmatpush.msra.mxu0 %v1020
      %1145 = vmatpush.msra.mxu0 %v1016
      %1146 = vmatmul.f32.gmra.mxu0 %v1088
      %v1147 = vpop.f32.mrf.mxu0
      %v1148 = vadd.f32 %v917, %v1147
      %1149 = vdwg.mxu0
      %1150 = vmatpush.msra.mxu0 0.0
      %1151 = vmatpush.msra.mxu0 0.0
      %1152 = vmatpush.msra.mxu0 0.0
      %1153 = vmatpush.msra.mxu0 0.0
      %1154 = vmatpush.msra.mxu0 0.0
      %1155 = vmatpush.msra.mxu0 0.0
      %1156 = vmatpush.msra.mxu0 0.0
      %1157 = vmatpush.msra.mxu0 %v1049
      %1158 = vmatpush.msra.mxu0 %v1045
      %1159 = vmatpush.msra.mxu0 %v1041
      %1160 = vmatpush.msra.mxu0 %v1037
      %1161 = vmatpush.msra.mxu0 %v1033
      %1162 = vmatpush.msra.mxu0 %v1029
      %1163 = vmatpush.msra.mxu0 %v1025
      %1164 = vmatpush.msra.mxu0 %v1021
      %1165 = vmatpush.msra.mxu0 %v1017
      %1166 = vmatmul.f32.gmra.mxu0 %v1088
      %v1167 = vpop.f32.mrf.mxu0
      %v1168 = vadd.f32 %v917, %v1167
      %1169 = vdwg.mxu0
      %v1170 = vmax.f32 %v1108, 0.0
      %v1171 = vmax.f32 %v1128, 0.0
      %v1172 = vmax.f32 %v1148, 0.0
      %v1173 = vmax.f32 %v1168, 0.0
      %v1174 = vld [vmem:[%s5] sm:$0xff]
      %v1175 = vld [vmem:[%s5 + $0x8] sm:$0xff]
      %v1176 = vld [vmem:[#allocation4] sm:$0xff]
      %v1177 = vld [vmem:[#allocation4 + $0x8] sm:$0xff]
      %v1178 = vld [vmem:[#allocation4 + $0x10] sm:$0xff]
      %v1179 = vld [vmem:[#allocation4 + $0x18] sm:$0xff]
      %v1180 = vld [vmem:[#allocation4 + $0x20] sm:$0xff]
      %v1181 = vld [vmem:[%s1] ss:$8 sm:$0xf]
      %v1183 = vperm.slane %v1181, 0
      %v1184 = vperm.slane %v1181, 1
      %v1185 = vperm.slane %v1181, 2
      %v1186 = vperm.slane %v1181, 3
      %1187 = vrot.lane.b32.xlu0 %v1183, 94
      %v1188 = vpop.permute.xlu0 %1187
      %1189 = vrot.lane.b32.xlu0 %v1184, 94
      %v1190 = vpop.permute.xlu0 %1189
      %1191 = vrot.lane.b32.xlu0 %v1185, 94
      %v1192 = vpop.permute.xlu0 %1191
      %1193 = vrot.lane.b32.xlu0 %v1186, 94
      %v1194 = vpop.permute.xlu0 %1193
      %v1195 = vsel %vm909, %v1188, %v1190
      %v1196 = vsel %vm909, %v1190, %v1192
      %v1197 = vsel %vm909, %v1192, %v1194
      %v1203 = vmul.f32 %v1176, %v1188
      %v1204 = vmul.f32 %v1177, %v1195
      %v1205 = vmul.f32 %v1178, %v1196
      %v1206 = vmul.f32 %v1179, %v1197
      %v1207 = vmul.f32 %v1180, %v1194
      %s1208 = scalar_lea.vmem %s1, 1
      %v1209 = vld [vmem:[%s1208] ss:$8 sm:$0xf]
      %v1211 = vperm.slane %v1209, 0
      %v1212 = vperm.slane %v1209, 1
      %v1213 = vperm.slane %v1209, 2
      %v1214 = vperm.slane %v1209, 3
      %1215 = vrot.lane.b32.xlu0 %v1211, 95
      %v1216 = vpop.permute.xlu0 %1215
      %1217 = vrot.lane.b32.xlu0 %v1212, 95
      %v1218 = vpop.permute.xlu0 %1217
      %1219 = vrot.lane.b32.xlu0 %v1213, 95
      %v1220 = vpop.permute.xlu0 %1219
      %1221 = vrot.lane.b32.xlu0 %v1214, 95
      %v1222 = vpop.permute.xlu0 %1221
      %v1223 = vsel %vm889, %v1216, %v1218
      %v1224 = vsel %vm889, %v1218, %v1220
      %v1225 = vsel %vm889, %v1220, %v1222
      %v1231 = vmul.f32 %v1176, %v1216
      %v1232 = vmul.f32 %v1177, %v1223
      %v1233 = vmul.f32 %v1178, %v1224
      %v1234 = vmul.f32 %v1179, %v1225
      %v1235 = vmul.f32 %v1180, %v1222
      %s1236 = scalar_lea.vmem %s1, 2
      %v1237 = vld [vmem:[%s1236] ss:$8 sm:$0xf]
      %v1239 = vperm.slane %v1237, 0
      %v1240 = vperm.slane %v1237, 1
      %v1241 = vperm.slane %v1237, 2
      %v1242 = vperm.slane %v1237, 3
      %1243 = vrot.lane.b32.xlu0 %v1239, 96
      %v1244 = vpop.permute.xlu0 %1243
      %1245 = vrot.lane.b32.xlu0 %v1240, 96
      %v1246 = vpop.permute.xlu0 %1245
      %1247 = vrot.lane.b32.xlu0 %v1241, 96
      %v1248 = vpop.permute.xlu0 %1247
      %1249 = vrot.lane.b32.xlu0 %v1242, 96
      %v1250 = vpop.permute.xlu0 %1249
      %v1251 = vsel %vm869, %v1244, %v1246
      %v1252 = vsel %vm869, %v1246, %v1248
      %v1253 = vsel %vm869, %v1248, %v1250
      %v1259 = vmul.f32 %v1176, %v1244
      %v1260 = vmul.f32 %v1177, %v1251
      %v1261 = vmul.f32 %v1178, %v1252
      %v1262 = vmul.f32 %v1179, %v1253
      %v1263 = vmul.f32 %v1180, %v1250
      %s1264 = scalar_lea.vmem %s1, 3
      %v1265 = vld [vmem:[%s1264] ss:$8 sm:$0xf]
      %v1267 = vperm.slane %v1265, 0
      %v1268 = vperm.slane %v1265, 1
      %v1269 = vperm.slane %v1265, 2
      %v1270 = vperm.slane %v1265, 3
      %1271 = vrot.lane.b32.xlu0 %v1267, 97
      %v1272 = vpop.permute.xlu0 %1271
      %1273 = vrot.lane.b32.xlu0 %v1268, 97
      %v1274 = vpop.permute.xlu0 %1273
      %1275 = vrot.lane.b32.xlu0 %v1269, 97
      %v1276 = vpop.permute.xlu0 %1275
      %1277 = vrot.lane.b32.xlu0 %v1270, 97
      %v1278 = vpop.permute.xlu0 %1277
      %vm1279 = vcmask 793600
      %v1280 = vsel %vm1279, %v1272, %v1274
      %v1281 = vsel %vm1279, %v1274, %v1276
      %v1282 = vsel %vm1279, %v1276, %v1278
      %v1288 = vmul.f32 %v1176, %v1272
      %v1289 = vmul.f32 %v1177, %v1280
      %v1290 = vmul.f32 %v1178, %v1281
      %v1291 = vmul.f32 %v1179, %v1282
      %v1292 = vmul.f32 %v1180, %v1278
      %s1293 = scalar_lea.vmem %s1, 4
      %v1294 = vld [vmem:[%s1293] ss:$8 sm:$0xf]
      %v1296 = vperm.slane %v1294, 0
      %v1297 = vperm.slane %v1294, 1
      %v1298 = vperm.slane %v1294, 2
      %v1299 = vperm.slane %v1294, 3
      %1300 = vrot.lane.b32.xlu0 %v1296, 98
      %v1301 = vpop.permute.xlu0 %1300
      %1302 = vrot.lane.b32.xlu0 %v1297, 98
      %v1303 = vpop.permute.xlu0 %1302
      %1304 = vrot.lane.b32.xlu0 %v1298, 98
      %v1305 = vpop.permute.xlu0 %1304
      %1306 = vrot.lane.b32.xlu0 %v1299, 98
      %v1307 = vpop.permute.xlu0 %1306
      %vm1308 = vcmask 801792
      %v1309 = vsel %vm1308, %v1301, %v1303
      %v1310 = vsel %vm1308, %v1303, %v1305
      %v1311 = vsel %vm1308, %v1305, %v1307
      %v1317 = vmul.f32 %v1176, %v1301
      %v1318 = vmul.f32 %v1177, %v1309
      %v1319 = vmul.f32 %v1178, %v1310
      %v1320 = vmul.f32 %v1179, %v1311
      %v1321 = vmul.f32 %v1180, %v1307
      %s1322 = scalar_lea.vmem %s1, 5
      %v1323 = vld [vmem:[%s1322] ss:$8 sm:$0xf]
      %v1325 = vperm.slane %v1323, 0
      %v1326 = vperm.slane %v1323, 1
      %v1327 = vperm.slane %v1323, 2
      %v1328 = vperm.slane %v1323, 3
      %1329 = vrot.lane.b32.xlu0 %v1325, 110
      %v1330 = vpop.permute.xlu0 %1329
      %1331 = vrot.lane.b32.xlu0 %v1326, 110
      %v1332 = vpop.permute.xlu0 %1331
      %1333 = vrot.lane.b32.xlu0 %v1327, 110
      %v1334 = vpop.permute.xlu0 %1333
      %1335 = vrot.lane.b32.xlu0 %v1328, 110
      %v1336 = vpop.permute.xlu0 %1335
      %v1337 = vsel %vm849, %v1330, %v1332
      %v1338 = vsel %vm849, %v1332, %v1334
      %v1339 = vsel %vm849, %v1334, %v1336
      %v1345 = vmul.f32 %v1176, %v1330
      %v1346 = vmul.f32 %v1177, %v1337
      %v1347 = vmul.f32 %v1178, %v1338
      %v1348 = vmul.f32 %v1179, %v1339
      %v1349 = vmul.f32 %v1180, %v1336
      %v1350 = vmul.f32 %v1176, %v517
      %v1351 = vmul.f32 %v1177, %v525
      %v1352 = vmul.f32 %v1178, %v526
      %v1353 = vmul.f32 %v1179, %v527
      %v1354 = vmul.f32 %v1180, %v523
      %v1355 = vmul.f32 %v1176, %v546
      %v1356 = vmul.f32 %v1177, %v554
      %v1357 = vmul.f32 %v1178, %v555
      %v1358 = vmul.f32 %v1179, %v556
      %v1359 = vmul.f32 %v1180, %v552
      %v1360 = vmul.f32 %v1176, %v575
      %v1361 = vmul.f32 %v1177, %v583
      %v1362 = vmul.f32 %v1178, %v584
      %v1363 = vmul.f32 %v1179, %v585
      %v1364 = vmul.f32 %v1180, %v581
      %s1365 = scalar_lea.vmem %s1, 33
      %v1366 = vld [vmem:[%s1365] ss:$8 sm:$0xf]
      %v1368 = vperm.slane %v1366, 0
      %v1369 = vperm.slane %v1366, 1
      %v1370 = vperm.slane %v1366, 2
      %v1371 = vperm.slane %v1366, 3
      %1372 = vrot.lane.b32.xlu0 %v1368, 114
      %v1373 = vpop.permute.xlu0 %1372
      %1374 = vrot.lane.b32.xlu0 %v1369, 114
      %v1375 = vpop.permute.xlu0 %1374
      %1376 = vrot.lane.b32.xlu0 %v1370, 114
      %v1377 = vpop.permute.xlu0 %1376
      %1378 = vrot.lane.b32.xlu0 %v1371, 114
      %v1379 = vpop.permute.xlu0 %1378
      %vm1380 = vcmask 932864
      %v1381 = vsel %vm1380, %v1373, %v1375
      %v1382 = vsel %vm1380, %v1375, %v1377
      %v1383 = vsel %vm1380, %v1377, %v1379
      %v1389 = vmul.f32 %v1176, %v1373
      %v1390 = vmul.f32 %v1177, %v1381
      %v1391 = vmul.f32 %v1178, %v1382
      %v1392 = vmul.f32 %v1179, %v1383
      %v1393 = vmul.f32 %v1180, %v1379
      %s1394 = scalar_lea.vmem %s1, 34
      %v1395 = vld [vmem:[%s1394] ss:$8 sm:$0xf]
      %v1397 = vperm.slane %v1395, 0
      %v1398 = vperm.slane %v1395, 1
      %v1399 = vperm.slane %v1395, 2
      %v1400 = vperm.slane %v1395, 3
      %1401 = vrot.lane.b32.xlu0 %v1397, 126
      %v1402 = vpop.permute.xlu0 %1401
      %1403 = vrot.lane.b32.xlu0 %v1398, 126
      %v1404 = vpop.permute.xlu0 %1403
      %1405 = vrot.lane.b32.xlu0 %v1399, 126
      %v1406 = vpop.permute.xlu0 %1405
      %1407 = vrot.lane.b32.xlu0 %v1400, 126
      %v1408 = vpop.permute.xlu0 %1407
      %v1409 = vsel %vm795, %v1402, %v1404
      %v1410 = vsel %vm795, %v1404, %v1406
      %v1411 = vsel %vm795, %v1406, %v1408
      %v1417 = vmul.f32 %v1176, %v1402
      %v1418 = vmul.f32 %v1177, %v1409
      %v1419 = vmul.f32 %v1178, %v1410
      %v1420 = vmul.f32 %v1179, %v1411
      %v1421 = vmul.f32 %v1180, %v1408
      %v1422 = vmul.f32 %v1176, %v604
      %v1423 = vmul.f32 %v1177, %v612
      %v1424 = vmul.f32 %v1178, %v613
      %v1425 = vmul.f32 %v1179, %v614
      %v1426 = vmul.f32 %v1180, %v610
      %v1427 = vmul.f32 %v1177, %v628
      %v1428 = vmul.f32 %v1178, %v629
      %v1429 = vmul.f32 %v1179, %v630
      %v1430 = vmul.f32 %v1180, %v631
      %v1431 = vld [vmem:[#allocation4 + $0x8] sm:$0xff]
      %v1432 = vld [vmem:[#allocation4 + $0x10] sm:$0xff]
      %v1433 = vld [vmem:[#allocation4 + $0x18] sm:$0xff]
      %v1434 = vld [vmem:[#allocation4 + $0x20] sm:$0xff]
      %v1435 = vld [vmem:[#allocation4 + $0x28] sm:$0xff]
      %v1436 = vmul.f32 %v1431, %v653
      %v1437 = vmul.f32 %v1432, %v661
      %v1438 = vmul.f32 %v1433, %v662
      %v1439 = vmul.f32 %v1434, %v663
      %v1440 = vmul.f32 %v1435, %v659
      %s1441 = scalar_lea.vmem %s1, 38
      %v1442 = vld [vmem:[%s1441] ss:$8 sm:$0xf]
      %v1444 = vperm.slane %v1442, 0
      %v1445 = vperm.slane %v1442, 1
      %v1446 = vperm.slane %v1442, 2
      %v1447 = vperm.slane %v1442, 3
      %1448 = vrot.lane.b32.xlu0 %v1444, 2
      %v1449 = vpop.permute.xlu0 %1448
      %1450 = vrot.lane.b32.xlu0 %v1445, 2
      %v1451 = vpop.permute.xlu0 %1450
      %1452 = vrot.lane.b32.xlu0 %v1446, 2
      %v1453 = vpop.permute.xlu0 %1452
      %1454 = vrot.lane.b32.xlu0 %v1447, 2
      %v1455 = vpop.permute.xlu0 %1454
      %vm1456 = vcmask 15360
      %v1457 = vsel %vm1456, %v1449, %v1451
      %v1458 = vsel %vm1456, %v1451, %v1453
      %v1459 = vsel %vm1456, %v1453, %v1455
      %v1465 = vmul.f32 %v1431, %v1449
      %v1466 = vmul.f32 %v1432, %v1457
      %v1467 = vmul.f32 %v1433, %v1458
      %v1468 = vmul.f32 %v1434, %v1459
      %v1469 = vmul.f32 %v1435, %v1455
      %s1470 = scalar_lea.vmem %s1, 39
      %v1471 = vld [vmem:[%s1470] ss:$8 sm:$0xf]
      %v1473 = vperm.slane %v1471, 0
      %v1474 = vperm.slane %v1471, 1
      %v1475 = vperm.slane %v1471, 2
      %v1476 = vperm.slane %v1471, 3
      %1477 = vrot.lane.b32.xlu0 %v1473, 14
      %v1478 = vpop.permute.xlu0 %1477
      %1479 = vrot.lane.b32.xlu0 %v1474, 14
      %v1480 = vpop.permute.xlu0 %1479
      %1481 = vrot.lane.b32.xlu0 %v1475, 14
      %v1482 = vpop.permute.xlu0 %1481
      %1483 = vrot.lane.b32.xlu0 %v1476, 14
      %v1484 = vpop.permute.xlu0 %1483
      %vm1485 = vcmask 113664
      %v1486 = vsel %vm1485, %v1478, %v1480
      %v1487 = vsel %vm1485, %v1480, %v1482
      %v1488 = vsel %vm1485, %v1482, %v1484
      %v1494 = vmul.f32 %v1431, %v1478
      %v1495 = vmul.f32 %v1432, %v1486
      %v1496 = vmul.f32 %v1433, %v1487
      %v1497 = vmul.f32 %v1434, %v1488
      %v1498 = vmul.f32 %v1435, %v1484
      %v1499 = vmul.f32 %v1431, %v682
      %v1500 = vmul.f32 %v1432, %v690
      %v1501 = vmul.f32 %v1433, %v691
      %v1502 = vmul.f32 %v1434, %v692
      %v1503 = vmul.f32 %v1435, %v688
      %v1504 = vmul.f32 %v1431, %v711
      %v1505 = vmul.f32 %v1432, %v719
      %v1506 = vmul.f32 %v1433, %v720
      %v1507 = vmul.f32 %v1434, %v721
      %v1508 = vmul.f32 %v1435, %v717
      %v1509 = vmul.f32 %v1431, %v740
      %v1510 = vmul.f32 %v1432, %v748
      %v1511 = vmul.f32 %v1433, %v749
      %v1512 = vmul.f32 %v1434, %v750
      %v1513 = vmul.f32 %v1435, %v746
      %s1514 = scalar_lea.vmem %s1, 67
      %v1515 = vld [vmem:[%s1514] ss:$8 sm:$0xf]
      %v1517 = vperm.slane %v1515, 0
      %v1518 = vperm.slane %v1515, 1
      %v1519 = vperm.slane %v1515, 2
      %v1520 = vperm.slane %v1515, 3
      %1521 = vrot.lane.b32.xlu0 %v1517, 18
      %v1522 = vpop.permute.xlu0 %1521
      %1523 = vrot.lane.b32.xlu0 %v1518, 18
      %v1524 = vpop.permute.xlu0 %1523
      %1525 = vrot.lane.b32.xlu0 %v1519, 18
      %v1526 = vpop.permute.xlu0 %1525
      %1527 = vrot.lane.b32.xlu0 %v1520, 18
      %v1528 = vpop.permute.xlu0 %1527
      %vm1529 = vcmask 146432
      %v1530 = vsel %vm1529, %v1522, %v1524
      %v1531 = vsel %vm1529, %v1524, %v1526
      %v1532 = vsel %vm1529, %v1526, %v1528
      %v1538 = vmul.f32 %v1431, %v1522
      %v1539 = vmul.f32 %v1432, %v1530
      %v1540 = vmul.f32 %v1433, %v1531
      %v1541 = vmul.f32 %v1434, %v1532
      %v1542 = vmul.f32 %v1435, %v1528
      %s1543 = scalar_lea.vmem %s1, 68
      %v1544 = vld [vmem:[%s1543] ss:$8 sm:$0xf]
      %v1546 = vperm.slane %v1544, 0
      %v1547 = vperm.slane %v1544, 1
      %v1548 = vperm.slane %v1544, 2
      %v1549 = vperm.slane %v1544, 3
      %1550 = vrot.lane.b32.xlu0 %v1546, 30
      %v1551 = vpop.permute.xlu0 %1550
      %1552 = vrot.lane.b32.xlu0 %v1547, 30
      %v1553 = vpop.permute.xlu0 %1552
      %1554 = vrot.lane.b32.xlu0 %v1548, 30
      %v1555 = vpop.permute.xlu0 %1554
      %1556 = vrot.lane.b32.xlu0 %v1549, 30
      %v1557 = vpop.permute.xlu0 %1556
      %vm1558 = vcmask 244736
      %v1559 = vsel %vm1558, %v1551, %v1553
      %v1560 = vsel %vm1558, %v1553, %v1555
      %v1561 = vsel %vm1558, %v1555, %v1557
      %v1567 = vmul.f32 %v1431, %v1551
      %v1568 = vmul.f32 %v1432, %v1559
      %v1569 = vmul.f32 %v1433, %v1560
      %v1570 = vmul.f32 %v1434, %v1561
      %v1571 = vmul.f32 %v1435, %v1557
      %s1572 = scalar_lea.vmem %s1, 69
      %v1573 = vld [vmem:[%s1572] ss:$8 sm:$0xf]
      %v1575 = vperm.slane %v1573, 0
      %v1576 = vperm.slane %v1573, 1
      %v1577 = vperm.slane %v1573, 2
      %v1578 = vperm.slane %v1573, 3
      %1579 = vrot.lane.b32.xlu0 %v1575, 31
      %v1580 = vpop.permute.xlu0 %1579
      %1581 = vrot.lane.b32.xlu0 %v1576, 31
      %v1582 = vpop.permute.xlu0 %1581
      %1583 = vrot.lane.b32.xlu0 %v1577, 31
      %v1584 = vpop.permute.xlu0 %1583
      %1585 = vrot.lane.b32.xlu0 %v1578, 31
      %v1586 = vpop.permute.xlu0 %1585
      %vm1587 = vcmask 252928
      %v1588 = vsel %vm1587, %v1580, %v1582
      %v1589 = vsel %vm1587, %v1582, %v1584
      %v1590 = vsel %vm1587, %v1584, %v1586
      %v1596 = vmul.f32 %v1431, %v1580
      %v1597 = vmul.f32 %v1432, %v1588
      %v1598 = vmul.f32 %v1433, %v1589
      %v1599 = vmul.f32 %v1434, %v1590
      %v1600 = vmul.f32 %v1435, %v1586
      %s1601 = scalar_lea.vmem %s1, 70
      %v1602 = vld [vmem:[%s1601] ss:$8 sm:$0xf]
      %v1604 = vperm.slane %v1602, 0
      %v1605 = vperm.slane %v1602, 1
      %v1606 = vperm.slane %v1602, 2
      %v1607 = vperm.slane %v1602, 3
      %1608 = vrot.lane.b32.xlu0 %v1604, 32
      %v1609 = vpop.permute.xlu0 %1608
      %1610 = vrot.lane.b32.xlu0 %v1605, 32
      %v1611 = vpop.permute.xlu0 %1610
      %1612 = vrot.lane.b32.xlu0 %v1606, 32
      %v1613 = vpop.permute.xlu0 %1612
      %1614 = vrot.lane.b32.xlu0 %v1607, 32
      %v1615 = vpop.permute.xlu0 %1614
      %vm1616 = vcmask 261120
      %v1617 = vsel %vm1616, %v1609, %v1611
      %v1618 = vsel %vm1616, %v1611, %v1613
      %v1619 = vsel %vm1616, %v1613, %v1615
      %v1625 = vmul.f32 %v1431, %v1609
      %v1626 = vmul.f32 %v1432, %v1617
      %v1627 = vmul.f32 %v1433, %v1618
      %v1628 = vmul.f32 %v1434, %v1619
      %v1629 = vmul.f32 %v1435, %v1615
      %s1630 = scalar_lea.vmem %s1, 71
      %v1631 = vld [vmem:[%s1630] ss:$8 sm:$0xf]
      %v1633 = vperm.slane %v1631, 0
      %v1634 = vperm.slane %v1631, 1
      %v1635 = vperm.slane %v1631, 2
      %v1636 = vperm.slane %v1631, 3
      %1637 = vrot.lane.b32.xlu0 %v1633, 33
      %v1638 = vpop.permute.xlu0 %1637
      %1639 = vrot.lane.b32.xlu0 %v1634, 33
      %v1640 = vpop.permute.xlu0 %1639
      %1641 = vrot.lane.b32.xlu0 %v1635, 33
      %v1642 = vpop.permute.xlu0 %1641
      %1643 = vrot.lane.b32.xlu0 %v1636, 33
      %v1644 = vpop.permute.xlu0 %1643
      %vm1645 = vcmask 269312
      %v1646 = vsel %vm1645, %v1638, %v1640
      %v1647 = vsel %vm1645, %v1640, %v1642
      %v1648 = vsel %vm1645, %v1642, %v1644
      %v1654 = vmul.f32 %v1431, %v1638
      %v1655 = vmul.f32 %v1432, %v1646
      %v1656 = vmul.f32 %v1433, %v1647
      %v1657 = vmul.f32 %v1434, %v1648
      %v1658 = vmul.f32 %v1435, %v1644
      %s1659 = scalar_lea.vmem %s1, 96
      %v1660 = vld [vmem:[%s1659] ss:$8 sm:$0xf]
      %v1662 = vperm.slane %v1660, 0
      %v1663 = vperm.slane %v1660, 1
      %v1664 = vperm.slane %v1660, 2
      %v1665 = vperm.slane %v1660, 3
      %1666 = vrot.lane.b32.xlu0 %v1662, 34
      %v1667 = vpop.permute.xlu0 %1666
      %1668 = vrot.lane.b32.xlu0 %v1663, 34
      %v1669 = vpop.permute.xlu0 %1668
      %1670 = vrot.lane.b32.xlu0 %v1664, 34
      %v1671 = vpop.permute.xlu0 %1670
      %1672 = vrot.lane.b32.xlu0 %v1665, 34
      %v1673 = vpop.permute.xlu0 %1672
      %vm1674 = vcmask 277504
      %v1675 = vsel %vm1674, %v1667, %v1669
      %v1676 = vsel %vm1674, %v1669, %v1671
      %v1677 = vsel %vm1674, %v1671, %v1673
      %v1683 = vmul.f32 %v1431, %v1667
      %v1684 = vmul.f32 %v1432, %v1675
      %v1685 = vmul.f32 %v1433, %v1676
      %v1686 = vmul.f32 %v1434, %v1677
      %v1687 = vmul.f32 %v1435, %v1673
      %1693 = vrot.lane.b32.xlu0 %v1231, 127
      %v1694 = vpop.permute.xlu0 %1693
      %1695 = vrot.lane.b32.xlu0 %v1232, 127
      %v1696 = vpop.permute.xlu0 %1695
      %1697 = vrot.lane.b32.xlu0 %v1233, 127
      %v1698 = vpop.permute.xlu0 %1697
      %1699 = vrot.lane.b32.xlu0 %v1234, 127
      %v1700 = vpop.permute.xlu0 %1699
      %1701 = vrot.lane.b32.xlu0 %v1235, 127
      %v1702 = vpop.permute.xlu0 %1701
      %v1703 = vsel %vm611, %v1694, %v1696
      %v1704 = vsel %vm611, %v1696, %v1698
      %v1705 = vsel %vm611, %v1698, %v1700
      %v1706 = vsel %vm611, %v1700, %v1702
      %1712 = vrot.lane.b32.xlu0 %v1259, 126
      %v1713 = vpop.permute.xlu0 %1712
      %1714 = vrot.lane.b32.xlu0 %v1260, 126
      %v1715 = vpop.permute.xlu0 %1714
      %1716 = vrot.lane.b32.xlu0 %v1261, 126
      %v1717 = vpop.permute.xlu0 %1716
      %1718 = vrot.lane.b32.xlu0 %v1262, 126
      %v1719 = vpop.permute.xlu0 %1718
      %1720 = vrot.lane.b32.xlu0 %v1263, 126
      %v1721 = vpop.permute.xlu0 %1720
      %v1722 = vsel %vm795, %v1713, %v1715
      %v1723 = vsel %vm795, %v1715, %v1717
      %v1724 = vsel %vm795, %v1717, %v1719
      %v1725 = vsel %vm795, %v1719, %v1721
      %1731 = vrot.lane.b32.xlu0 %v1288, 125
      %v1732 = vpop.permute.xlu0 %1731
      %1733 = vrot.lane.b32.xlu0 %v1289, 125
      %v1734 = vpop.permute.xlu0 %1733
      %1735 = vrot.lane.b32.xlu0 %v1290, 125
      %v1736 = vpop.permute.xlu0 %1735
      %1737 = vrot.lane.b32.xlu0 %v1291, 125
      %v1738 = vpop.permute.xlu0 %1737
      %1739 = vrot.lane.b32.xlu0 %v1292, 125
      %v1740 = vpop.permute.xlu0 %1739
      %vm1741 = vcmask 1022976
      %v1742 = vsel %vm1741, %v1732, %v1734
      %v1743 = vsel %vm1741, %v1734, %v1736
      %v1744 = vsel %vm1741, %v1736, %v1738
      %v1745 = vsel %vm1741, %v1738, %v1740
      %1751 = vrot.lane.b32.xlu0 %v1317, 124
      %v1752 = vpop.permute.xlu0 %1751
      %1753 = vrot.lane.b32.xlu0 %v1318, 124
      %v1754 = vpop.permute.xlu0 %1753
      %1755 = vrot.lane.b32.xlu0 %v1319, 124
      %v1756 = vpop.permute.xlu0 %1755
      %1757 = vrot.lane.b32.xlu0 %v1320, 124
      %v1758 = vpop.permute.xlu0 %1757
      %1759 = vrot.lane.b32.xlu0 %v1321, 124
      %v1760 = vpop.permute.xlu0 %1759
      %vm1761 = vcmask 1014784
      %v1762 = vsel %vm1761, %v1752, %v1754
      %v1763 = vsel %vm1761, %v1754, %v1756
      %v1764 = vsel %vm1761, %v1756, %v1758
      %v1765 = vsel %vm1761, %v1758, %v1760
      %1771 = vrot.lane.b32.xlu0 %v1345, 112
      %v1772 = vpop.permute.xlu0 %1771
      %1773 = vrot.lane.b32.xlu0 %v1346, 112
      %v1774 = vpop.permute.xlu0 %1773
      %1775 = vrot.lane.b32.xlu0 %v1347, 112
      %v1776 = vpop.permute.xlu0 %1775
      %1777 = vrot.lane.b32.xlu0 %v1348, 112
      %v1778 = vpop.permute.xlu0 %1777
      %1779 = vrot.lane.b32.xlu0 %v1349, 112
      %v1780 = vpop.permute.xlu0 %1779
      %v1781 = vsel %vm553, %v1772, %v1774
      %v1782 = vsel %vm553, %v1774, %v1776
      %v1783 = vsel %vm553, %v1776, %v1778
      %v1784 = vsel %vm553, %v1778, %v1780
      %1790 = vrot.lane.b32.xlu0 %v1350, 111
      %v1791 = vpop.permute.xlu0 %1790
      %1792 = vrot.lane.b32.xlu0 %v1351, 111
      %v1793 = vpop.permute.xlu0 %1792
      %1794 = vrot.lane.b32.xlu0 %v1352, 111
      %v1795 = vpop.permute.xlu0 %1794
      %1796 = vrot.lane.b32.xlu0 %v1353, 111
      %v1797 = vpop.permute.xlu0 %1796
      %1798 = vrot.lane.b32.xlu0 %v1354, 111
      %v1799 = vpop.permute.xlu0 %1798
      %v1800 = vsel %vm524, %v1791, %v1793
      %v1801 = vsel %vm524, %v1793, %v1795
      %v1802 = vsel %vm524, %v1795, %v1797
      %v1803 = vsel %vm524, %v1797, %v1799
      %1809 = vrot.lane.b32.xlu0 %v1355, 110
      %v1810 = vpop.permute.xlu0 %1809
      %1811 = vrot.lane.b32.xlu0 %v1356, 110
      %v1812 = vpop.permute.xlu0 %1811
      %1813 = vrot.lane.b32.xlu0 %v1357, 110
      %v1814 = vpop.permute.xlu0 %1813
      %1815 = vrot.lane.b32.xlu0 %v1358, 110
      %v1816 = vpop.permute.xlu0 %1815
      %1817 = vrot.lane.b32.xlu0 %v1359, 110
      %v1818 = vpop.permute.xlu0 %1817
      %v1819 = vsel %vm849, %v1810, %v1812
      %v1820 = vsel %vm849, %v1812, %v1814
      %v1821 = vsel %vm849, %v1814, %v1816
      %v1822 = vsel %vm849, %v1816, %v1818
      %1828 = vrot.lane.b32.xlu0 %v1360, 109
      %v1829 = vpop.permute.xlu0 %1828
      %1830 = vrot.lane.b32.xlu0 %v1361, 109
      %v1831 = vpop.permute.xlu0 %1830
      %1832 = vrot.lane.b32.xlu0 %v1362, 109
      %v1833 = vpop.permute.xlu0 %1832
      %1834 = vrot.lane.b32.xlu0 %v1363, 109
      %v1835 = vpop.permute.xlu0 %1834
      %1836 = vrot.lane.b32.xlu0 %v1364, 109
      %v1837 = vpop.permute.xlu0 %1836
      %vm1838 = vcmask 891904
      %v1839 = vsel %vm1838, %v1829, %v1831
      %v1840 = vsel %vm1838, %v1831, %v1833
      %v1841 = vsel %vm1838, %v1833, %v1835
      %v1842 = vsel %vm1838, %v1835, %v1837
      %1848 = vrot.lane.b32.xlu0 %v1389, 108
      %v1849 = vpop.permute.xlu0 %1848
      %1850 = vrot.lane.b32.xlu0 %v1390, 108
      %v1851 = vpop.permute.xlu0 %1850
      %1852 = vrot.lane.b32.xlu0 %v1391, 108
      %v1853 = vpop.permute.xlu0 %1852
      %1854 = vrot.lane.b32.xlu0 %v1392, 108
      %v1855 = vpop.permute.xlu0 %1854
      %1856 = vrot.lane.b32.xlu0 %v1393, 108
      %v1857 = vpop.permute.xlu0 %1856
      %vm1858 = vcmask 883712
      %v1859 = vsel %vm1858, %v1849, %v1851
      %v1860 = vsel %vm1858, %v1851, %v1853
      %v1861 = vsel %vm1858, %v1853, %v1855
      %v1862 = vsel %vm1858, %v1855, %v1857
      %1868 = vrot.lane.b32.xlu0 %v1417, 96
      %v1869 = vpop.permute.xlu0 %1868
      %1870 = vrot.lane.b32.xlu0 %v1418, 96
      %v1871 = vpop.permute.xlu0 %1870
      %1872 = vrot.lane.b32.xlu0 %v1419, 96
      %v1873 = vpop.permute.xlu0 %1872
      %1874 = vrot.lane.b32.xlu0 %v1420, 96
      %v1875 = vpop.permute.xlu0 %1874
      %1876 = vrot.lane.b32.xlu0 %v1421, 96
      %v1877 = vpop.permute.xlu0 %1876
      %v1878 = vsel %vm869, %v1869, %v1871
      %v1879 = vsel %vm869, %v1871, %v1873
      %v1880 = vsel %vm869, %v1873, %v1875
      %v1881 = vsel %vm869, %v1875, %v1877
      %1887 = vrot.lane.b32.xlu0 %v1422, 95
      %v1888 = vpop.permute.xlu0 %1887
      %1889 = vrot.lane.b32.xlu0 %v1423, 95
      %v1890 = vpop.permute.xlu0 %1889
      %1891 = vrot.lane.b32.xlu0 %v1424, 95
      %v1892 = vpop.permute.xlu0 %1891
      %1893 = vrot.lane.b32.xlu0 %v1425, 95
      %v1894 = vpop.permute.xlu0 %1893
      %1895 = vrot.lane.b32.xlu0 %v1426, 95
      %v1896 = vpop.permute.xlu0 %1895
      %v1897 = vsel %vm889, %v1888, %v1890
      %v1898 = vsel %vm889, %v1890, %v1892
      %v1899 = vsel %vm889, %v1892, %v1894
      %v1900 = vsel %vm889, %v1894, %v1896
      %1905 = vrot.lane.b32.xlu0 %v1427, 94
      %v1906 = vpop.permute.xlu0 %1905
      %1907 = vrot.lane.b32.xlu0 %v1428, 94
      %v1908 = vpop.permute.xlu0 %1907
      %1909 = vrot.lane.b32.xlu0 %v1429, 94
      %v1910 = vpop.permute.xlu0 %1909
      %1911 = vrot.lane.b32.xlu0 %v1430, 94
      %v1912 = vpop.permute.xlu0 %1911
      %v1913 = vsel %vm909, %v1906, %v1908
      %v1914 = vsel %vm909, %v1908, %v1910
      %v1915 = vsel %vm909, %v1910, %v1912
      %1921 = vrot.lane.b32.xlu0 %v1436, 93
      %v1922 = vpop.permute.xlu0 %1921
      %1923 = vrot.lane.b32.xlu0 %v1437, 93
      %v1924 = vpop.permute.xlu0 %1923
      %1925 = vrot.lane.b32.xlu0 %v1438, 93
      %v1926 = vpop.permute.xlu0 %1925
      %1927 = vrot.lane.b32.xlu0 %v1439, 93
      %v1928 = vpop.permute.xlu0 %1927
      %1929 = vrot.lane.b32.xlu0 %v1440, 93
      %v1930 = vpop.permute.xlu0 %1929
      %vm1931 = vcmask 760832
      %v1932 = vsel %vm1931, %v1922, %v1924
      %v1933 = vsel %vm1931, %v1924, %v1926
      %v1934 = vsel %vm1931, %v1926, %v1928
      %v1935 = vsel %vm1931, %v1928, %v1930
      %1941 = vrot.lane.b32.xlu0 %v1465, 92
      %v1942 = vpop.permute.xlu0 %1941
      %1943 = vrot.lane.b32.xlu0 %v1466, 92
      %v1944 = vpop.permute.xlu0 %1943
      %1945 = vrot.lane.b32.xlu0 %v1467, 92
      %v1946 = vpop.permute.xlu0 %1945
      %1947 = vrot.lane.b32.xlu0 %v1468, 92
      %v1948 = vpop.permute.xlu0 %1947
      %1949 = vrot.lane.b32.xlu0 %v1469, 92
      %v1950 = vpop.permute.xlu0 %1949
      %vm1951 = vcmask 752640
      %v1952 = vsel %vm1951, %v1942, %v1944
      %v1953 = vsel %vm1951, %v1944, %v1946
      %v1954 = vsel %vm1951, %v1946, %v1948
      %v1955 = vsel %vm1951, %v1948, %v1950
      %1961 = vrot.lane.b32.xlu0 %v1494, 80
      %v1962 = vpop.permute.xlu0 %1961
      %1963 = vrot.lane.b32.xlu0 %v1495, 80
      %v1964 = vpop.permute.xlu0 %1963
      %1965 = vrot.lane.b32.xlu0 %v1496, 80
      %v1966 = vpop.permute.xlu0 %1965
      %1967 = vrot.lane.b32.xlu0 %v1497, 80
      %v1968 = vpop.permute.xlu0 %1967
      %1969 = vrot.lane.b32.xlu0 %v1498, 80
      %v1970 = vpop.permute.xlu0 %1969
      %vm1971 = vcmask 654336
      %v1972 = vsel %vm1971, %v1962, %v1964
      %v1973 = vsel %vm1971, %v1964, %v1966
      %v1974 = vsel %vm1971, %v1966, %v1968
      %v1975 = vsel %vm1971, %v1968, %v1970
      %1981 = vrot.lane.b32.xlu0 %v1504, 127
      %v1982 = vpop.permute.xlu0 %1981
      %1983 = vrot.lane.b32.xlu0 %v1505, 127
      %v1984 = vpop.permute.xlu0 %1983
      %1985 = vrot.lane.b32.xlu0 %v1506, 127
      %v1986 = vpop.permute.xlu0 %1985
      %1987 = vrot.lane.b32.xlu0 %v1507, 127
      %v1988 = vpop.permute.xlu0 %1987
      %1989 = vrot.lane.b32.xlu0 %v1508, 127
      %v1990 = vpop.permute.xlu0 %1989
      %v1991 = vsel %vm611, %v1982, %v1984
      %v1992 = vsel %vm611, %v1984, %v1986
      %v1993 = vsel %vm611, %v1986, %v1988
      %v1994 = vsel %vm611, %v1988, %v1990
      %2000 = vrot.lane.b32.xlu0 %v1509, 126
      %v2001 = vpop.permute.xlu0 %2000
      %2002 = vrot.lane.b32.xlu0 %v1510, 126
      %v2003 = vpop.permute.xlu0 %2002
      %2004 = vrot.lane.b32.xlu0 %v1511, 126
      %v2005 = vpop.permute.xlu0 %2004
      %2006 = vrot.lane.b32.xlu0 %v1512, 126
      %v2007 = vpop.permute.xlu0 %2006
      %2008 = vrot.lane.b32.xlu0 %v1513, 126
      %v2009 = vpop.permute.xlu0 %2008
      %v2010 = vsel %vm795, %v2001, %v2003
      %v2011 = vsel %vm795, %v2003, %v2005
      %v2012 = vsel %vm795, %v2005, %v2007
      %v2013 = vsel %vm795, %v2007, %v2009
      %2019 = vrot.lane.b32.xlu0 %v1538, 125
      %v2020 = vpop.permute.xlu0 %2019
      %2021 = vrot.lane.b32.xlu0 %v1539, 125
      %v2022 = vpop.permute.xlu0 %2021
      %2023 = vrot.lane.b32.xlu0 %v1540, 125
      %v2024 = vpop.permute.xlu0 %2023
      %2025 = vrot.lane.b32.xlu0 %v1541, 125
      %v2026 = vpop.permute.xlu0 %2025
      %2027 = vrot.lane.b32.xlu0 %v1542, 125
      %v2028 = vpop.permute.xlu0 %2027
      %v2029 = vsel %vm1741, %v2020, %v2022
      %v2030 = vsel %vm1741, %v2022, %v2024
      %v2031 = vsel %vm1741, %v2024, %v2026
      %v2032 = vsel %vm1741, %v2026, %v2028
      %2038 = vrot.lane.b32.xlu0 %v1567, 113
      %v2039 = vpop.permute.xlu0 %2038
      %2040 = vrot.lane.b32.xlu0 %v1568, 113
      %v2041 = vpop.permute.xlu0 %2040
      %2042 = vrot.lane.b32.xlu0 %v1569, 113
      %v2043 = vpop.permute.xlu0 %2042
      %2044 = vrot.lane.b32.xlu0 %v1570, 113
      %v2045 = vpop.permute.xlu0 %2044
      %2046 = vrot.lane.b32.xlu0 %v1571, 113
      %v2047 = vpop.permute.xlu0 %2046
      %v2048 = vsel %vm582, %v2039, %v2041
      %v2049 = vsel %vm582, %v2041, %v2043
      %v2050 = vsel %vm582, %v2043, %v2045
      %v2051 = vsel %vm582, %v2045, %v2047
      %2057 = vrot.lane.b32.xlu0 %v1596, 112
      %v2058 = vpop.permute.xlu0 %2057
      %2059 = vrot.lane.b32.xlu0 %v1597, 112
      %v2060 = vpop.permute.xlu0 %2059
      %2061 = vrot.lane.b32.xlu0 %v1598, 112
      %v2062 = vpop.permute.xlu0 %2061
      %2063 = vrot.lane.b32.xlu0 %v1599, 112
      %v2064 = vpop.permute.xlu0 %2063
      %2065 = vrot.lane.b32.xlu0 %v1600, 112
      %v2066 = vpop.permute.xlu0 %2065
      %v2067 = vsel %vm553, %v2058, %v2060
      %v2068 = vsel %vm553, %v2060, %v2062
      %v2069 = vsel %vm553, %v2062, %v2064
      %v2070 = vsel %vm553, %v2064, %v2066
      %2076 = vrot.lane.b32.xlu0 %v1625, 111
      %v2077 = vpop.permute.xlu0 %2076
      %2078 = vrot.lane.b32.xlu0 %v1626, 111
      %v2079 = vpop.permute.xlu0 %2078
      %2080 = vrot.lane.b32.xlu0 %v1627, 111
      %v2081 = vpop.permute.xlu0 %2080
      %2082 = vrot.lane.b32.xlu0 %v1628, 111
      %v2083 = vpop.permute.xlu0 %2082
      %2084 = vrot.lane.b32.xlu0 %v1629, 111
      %v2085 = vpop.permute.xlu0 %2084
      %v2086 = vsel %vm524, %v2077, %v2079
      %v2087 = vsel %vm524, %v2079, %v2081
      %v2088 = vsel %vm524, %v2081, %v2083
      %v2089 = vsel %vm524, %v2083, %v2085
      %2095 = vrot.lane.b32.xlu0 %v1654, 110
      %v2096 = vpop.permute.xlu0 %2095
      %2097 = vrot.lane.b32.xlu0 %v1655, 110
      %v2098 = vpop.permute.xlu0 %2097
      %2099 = vrot.lane.b32.xlu0 %v1656, 110
      %v2100 = vpop.permute.xlu0 %2099
      %2101 = vrot.lane.b32.xlu0 %v1657, 110
      %v2102 = vpop.permute.xlu0 %2101
      %2103 = vrot.lane.b32.xlu0 %v1658, 110
      %v2104 = vpop.permute.xlu0 %2103
      %v2105 = vsel %vm849, %v2096, %v2098
      %v2106 = vsel %vm849, %v2098, %v2100
      %v2107 = vsel %vm849, %v2100, %v2102
      %v2108 = vsel %vm849, %v2102, %v2104
      %2114 = vrot.lane.b32.xlu0 %v1683, 109
      %v2115 = vpop.permute.xlu0 %2114
      %2116 = vrot.lane.b32.xlu0 %v1684, 109
      %v2117 = vpop.permute.xlu0 %2116
      %2118 = vrot.lane.b32.xlu0 %v1685, 109
      %v2119 = vpop.permute.xlu0 %2118
      %2120 = vrot.lane.b32.xlu0 %v1686, 109
      %v2121 = vpop.permute.xlu0 %2120
      %2122 = vrot.lane.b32.xlu0 %v1687, 109
      %v2123 = vpop.permute.xlu0 %2122
      %v2124 = vsel %vm1838, %v2115, %v2117
      %v2125 = vsel %vm1838, %v2117, %v2119
      %v2126 = vsel %vm1838, %v2119, %v2121
      %v2127 = vsel %vm1838, %v2121, %v2123
      %2133 = vrot.lane.b32.xlu0 %v1499, 79
      %v2134 = vpop.permute.xlu0 %2133
      %2135 = vrot.lane.b32.xlu0 %v1500, 79
      %v2136 = vpop.permute.xlu0 %2135
      %2137 = vrot.lane.b32.xlu0 %v1501, 79
      %v2138 = vpop.permute.xlu0 %2137
      %2139 = vrot.lane.b32.xlu0 %v1502, 79
      %v2140 = vpop.permute.xlu0 %2139
      %2141 = vrot.lane.b32.xlu0 %v1503, 79
      %v2142 = vpop.permute.xlu0 %2141
      %2143 = vrot.lane.b32.xlu0 %v1991, 79
      %v2144 = vpop.permute.xlu0 %2143
      %2145 = vrot.lane.b32.xlu0 %v1992, 79
      %v2146 = vpop.permute.xlu0 %2145
      %2147 = vrot.lane.b32.xlu0 %v1993, 79
      %v2148 = vpop.permute.xlu0 %2147
      %2149 = vrot.lane.b32.xlu0 %v1994, 79
      %v2150 = vpop.permute.xlu0 %2149
      %2151 = vrot.lane.b32.xlu0 %v1990, 79
      %v2152 = vpop.permute.xlu0 %2151
      %2153 = vrot.lane.b32.xlu0 %v2010, 79
      %v2154 = vpop.permute.xlu0 %2153
      %2155 = vrot.lane.b32.xlu0 %v2011, 79
      %v2156 = vpop.permute.xlu0 %2155
      %2157 = vrot.lane.b32.xlu0 %v2012, 79
      %v2158 = vpop.permute.xlu0 %2157
      %2159 = vrot.lane.b32.xlu0 %v2013, 79
      %v2160 = vpop.permute.xlu0 %2159
      %2161 = vrot.lane.b32.xlu0 %v2009, 79
      %v2162 = vpop.permute.xlu0 %2161
      %2163 = vrot.lane.b32.xlu0 %v2029, 79
      %v2164 = vpop.permute.xlu0 %2163
      %2165 = vrot.lane.b32.xlu0 %v2030, 79
      %v2166 = vpop.permute.xlu0 %2165
      %2167 = vrot.lane.b32.xlu0 %v2031, 79
      %v2168 = vpop.permute.xlu0 %2167
      %2169 = vrot.lane.b32.xlu0 %v2032, 79
      %v2170 = vpop.permute.xlu0 %2169
      %2171 = vrot.lane.b32.xlu0 %v2028, 79
      %v2172 = vpop.permute.xlu0 %2171
      %2173 = vrot.lane.b32.xlu0 %v2048, 79
      %v2174 = vpop.permute.xlu0 %2173
      %2175 = vrot.lane.b32.xlu0 %v2049, 79
      %v2176 = vpop.permute.xlu0 %2175
      %2177 = vrot.lane.b32.xlu0 %v2050, 79
      %v2178 = vpop.permute.xlu0 %2177
      %2179 = vrot.lane.b32.xlu0 %v2051, 79
      %v2180 = vpop.permute.xlu0 %2179
      %2181 = vrot.lane.b32.xlu0 %v2047, 79
      %v2182 = vpop.permute.xlu0 %2181
      %2183 = vrot.lane.b32.xlu0 %v2067, 79
      %v2184 = vpop.permute.xlu0 %2183
      %2185 = vrot.lane.b32.xlu0 %v2068, 79
      %v2186 = vpop.permute.xlu0 %2185
      %2187 = vrot.lane.b32.xlu0 %v2069, 79
      %v2188 = vpop.permute.xlu0 %2187
      %2189 = vrot.lane.b32.xlu0 %v2070, 79
      %v2190 = vpop.permute.xlu0 %2189
      %2191 = vrot.lane.b32.xlu0 %v2066, 79
      %v2192 = vpop.permute.xlu0 %2191
      %2193 = vrot.lane.b32.xlu0 %v2086, 79
      %v2194 = vpop.permute.xlu0 %2193
      %2195 = vrot.lane.b32.xlu0 %v2087, 79
      %v2196 = vpop.permute.xlu0 %2195
      %2197 = vrot.lane.b32.xlu0 %v2088, 79
      %v2198 = vpop.permute.xlu0 %2197
      %2199 = vrot.lane.b32.xlu0 %v2089, 79
      %v2200 = vpop.permute.xlu0 %2199
      %2201 = vrot.lane.b32.xlu0 %v2085, 79
      %v2202 = vpop.permute.xlu0 %2201
      %2203 = vrot.lane.b32.xlu0 %v2105, 79
      %v2204 = vpop.permute.xlu0 %2203
      %2205 = vrot.lane.b32.xlu0 %v2106, 79
      %v2206 = vpop.permute.xlu0 %2205
      %2207 = vrot.lane.b32.xlu0 %v2107, 79
      %v2208 = vpop.permute.xlu0 %2207
      %2209 = vrot.lane.b32.xlu0 %v2108, 79
      %v2210 = vpop.permute.xlu0 %2209
      %2211 = vrot.lane.b32.xlu0 %v2104, 79
      %v2212 = vpop.permute.xlu0 %2211
      %2213 = vrot.lane.b32.xlu0 %v2124, 79
      %v2214 = vpop.permute.xlu0 %2213
      %2215 = vrot.lane.b32.xlu0 %v2125, 79
      %v2216 = vpop.permute.xlu0 %2215
      %2217 = vrot.lane.b32.xlu0 %v2126, 79
      %v2218 = vpop.permute.xlu0 %2217
      %2219 = vrot.lane.b32.xlu0 %v2127, 79
      %v2220 = vpop.permute.xlu0 %2219
      %2221 = vrot.lane.b32.xlu0 %v2123, 79
      %v2222 = vpop.permute.xlu0 %2221
      %vm2223 = vcmask 646144
      %v2224 = vsel %vm2223, %v2134, %v2136
      %v2225 = vsel %vm2223, %v2136, %v2138
      %v2226 = vsel %vm2223, %v2138, %v2140
      %v2227 = vsel %vm2223, %v2140, %v2142
      %v2228 = vsel %vm2223, %v2144, %v2146
      %v2229 = vsel %vm2223, %v2146, %v2148
      %v2230 = vsel %vm2223, %v2148, %v2150
      %v2231 = vsel %vm2223, %v2150, %v2152
      %v2232 = vsel %vm2223, %v2154, %v2156
      %v2233 = vsel %vm2223, %v2156, %v2158
      %v2234 = vsel %vm2223, %v2158, %v2160
      %v2235 = vsel %vm2223, %v2160, %v2162
      %v2236 = vsel %vm2223, %v2164, %v2166
      %v2237 = vsel %vm2223, %v2166, %v2168
      %v2238 = vsel %vm2223, %v2168, %v2170
      %v2239 = vsel %vm2223, %v2170, %v2172
      %v2240 = vsel %vm2223, %v2174, %v2176
      %v2241 = vsel %vm2223, %v2176, %v2178
      %v2242 = vsel %vm2223, %v2178, %v2180
      %v2243 = vsel %vm2223, %v2180, %v2182
      %v2244 = vsel %vm2223, %v2184, %v2186
      %v2245 = vsel %vm2223, %v2186, %v2188
      %v2246 = vsel %vm2223, %v2188, %v2190
      %v2247 = vsel %vm2223, %v2190, %v2192
      %v2248 = vsel %vm2223, %v2194, %v2196
      %v2249 = vsel %vm2223, %v2196, %v2198
      %v2250 = vsel %vm2223, %v2198, %v2200
      %v2251 = vsel %vm2223, %v2200, %v2202
      %v2252 = vsel %vm2223, %v2204, %v2206
      %v2253 = vsel %vm2223, %v2206, %v2208
      %v2254 = vsel %vm2223, %v2208, %v2210
      %v2255 = vsel %vm2223, %v2210, %v2212
      %v2256 = vsel %vm2223, %v2214, %v2216
      %v2257 = vsel %vm2223, %v2216, %v2218
      %v2258 = vsel %vm2223, %v2218, %v2220
      %v2259 = vsel %vm2223, %v2220, %v2222
      %2261 = vset.pattern.permute.xlu0 0
      %2262 = vperm.xlu0 %2261, %v501
      %v2263 = vpop.permute.xlu0 %2262
      %2270 = vrot.lane.b32.xlu0 %v1203, 34
      %v2271 = vpop.permute.xlu0 %2270
      %2272 = vrot.lane.b32.xlu0 %v1204, 34
      %v2273 = vpop.permute.xlu0 %2272
      %2274 = vrot.lane.b32.xlu0 %v1205, 34
      %v2275 = vpop.permute.xlu0 %2274
      %2276 = vrot.lane.b32.xlu0 %v1206, 34
      %v2277 = vpop.permute.xlu0 %2276
      %2278 = vrot.lane.b32.xlu0 %v1207, 34
      %v2279 = vpop.permute.xlu0 %2278
      %2280 = vrot.lane.b32.xlu0 %v1703, 34
      %v2281 = vpop.permute.xlu0 %2280
      %2282 = vrot.lane.b32.xlu0 %v1704, 34
      %v2283 = vpop.permute.xlu0 %2282
      %2284 = vrot.lane.b32.xlu0 %v1705, 34
      %v2285 = vpop.permute.xlu0 %2284
      %2286 = vrot.lane.b32.xlu0 %v1706, 34
      %v2287 = vpop.permute.xlu0 %2286
      %2288 = vrot.lane.b32.xlu0 %v1702, 34
      %v2289 = vpop.permute.xlu0 %2288
      %2290 = vrot.lane.b32.xlu0 %v1722, 34
      %v2291 = vpop.permute.xlu0 %2290
      %2292 = vrot.lane.b32.xlu0 %v1723, 34
      %v2293 = vpop.permute.xlu0 %2292
      %2294 = vrot.lane.b32.xlu0 %v1724, 34
      %v2295 = vpop.permute.xlu0 %2294
      %2296 = vrot.lane.b32.xlu0 %v1725, 34
      %v2297 = vpop.permute.xlu0 %2296
      %2298 = vrot.lane.b32.xlu0 %v1721, 34
      %v2299 = vpop.permute.xlu0 %2298
      %2300 = vrot.lane.b32.xlu0 %v1742, 34
      %v2301 = vpop.permute.xlu0 %2300
      %2302 = vrot.lane.b32.xlu0 %v1743, 34
      %v2303 = vpop.permute.xlu0 %2302
      %2304 = vrot.lane.b32.xlu0 %v1744, 34
      %v2305 = vpop.permute.xlu0 %2304
      %2306 = vrot.lane.b32.xlu0 %v1745, 34
      %v2307 = vpop.permute.xlu0 %2306
      %2308 = vrot.lane.b32.xlu0 %v1740, 34
      %v2309 = vpop.permute.xlu0 %2308
      %2310 = vrot.lane.b32.xlu0 %v1762, 34
      %v2311 = vpop.permute.xlu0 %2310
      %2312 = vrot.lane.b32.xlu0 %v1763, 34
      %v2313 = vpop.permute.xlu0 %2312
      %2314 = vrot.lane.b32.xlu0 %v1764, 34
      %v2315 = vpop.permute.xlu0 %2314
      %2316 = vrot.lane.b32.xlu0 %v1765, 34
      %v2317 = vpop.permute.xlu0 %2316
      %2318 = vrot.lane.b32.xlu0 %v1760, 34
      %v2319 = vpop.permute.xlu0 %2318
      %2320 = vrot.lane.b32.xlu0 %v1781, 34
      %v2321 = vpop.permute.xlu0 %2320
      %2322 = vrot.lane.b32.xlu0 %v1782, 34
      %v2323 = vpop.permute.xlu0 %2322
      %2324 = vrot.lane.b32.xlu0 %v1783, 34
      %v2325 = vpop.permute.xlu0 %2324
      %2326 = vrot.lane.b32.xlu0 %v1784, 34
      %v2327 = vpop.permute.xlu0 %2326
      %2328 = vrot.lane.b32.xlu0 %v1780, 34
      %v2329 = vpop.permute.xlu0 %2328
      %2330 = vrot.lane.b32.xlu0 %v1800, 34
      %v2331 = vpop.permute.xlu0 %2330
      %2332 = vrot.lane.b32.xlu0 %v1801, 34
      %v2333 = vpop.permute.xlu0 %2332
      %2334 = vrot.lane.b32.xlu0 %v1802, 34
      %v2335 = vpop.permute.xlu0 %2334
      %2336 = vrot.lane.b32.xlu0 %v1803, 34
      %v2337 = vpop.permute.xlu0 %2336
      %2338 = vrot.lane.b32.xlu0 %v1799, 34
      %v2339 = vpop.permute.xlu0 %2338
      %2340 = vrot.lane.b32.xlu0 %v1819, 34
      %v2341 = vpop.permute.xlu0 %2340
      %2342 = vrot.lane.b32.xlu0 %v1820, 34
      %v2343 = vpop.permute.xlu0 %2342
      %2344 = vrot.lane.b32.xlu0 %v1821, 34
      %v2345 = vpop.permute.xlu0 %2344
      %2346 = vrot.lane.b32.xlu0 %v1822, 34
      %v2347 = vpop.permute.xlu0 %2346
      %2348 = vrot.lane.b32.xlu0 %v1818, 34
      %v2349 = vpop.permute.xlu0 %2348
      %2350 = vrot.lane.b32.xlu0 %v1839, 34
      %v2351 = vpop.permute.xlu0 %2350
      %2352 = vrot.lane.b32.xlu0 %v1840, 34
      %v2353 = vpop.permute.xlu0 %2352
      %2354 = vrot.lane.b32.xlu0 %v1841, 34
      %v2355 = vpop.permute.xlu0 %2354
      %2356 = vrot.lane.b32.xlu0 %v1842, 34
      %v2357 = vpop.permute.xlu0 %2356
      %2358 = vrot.lane.b32.xlu0 %v1837, 34
      %v2359 = vpop.permute.xlu0 %2358
      %2360 = vrot.lane.b32.xlu0 %v1859, 34
      %v2361 = vpop.permute.xlu0 %2360
      %2362 = vrot.lane.b32.xlu0 %v1860, 34
      %v2363 = vpop.permute.xlu0 %2362
      %2364 = vrot.lane.b32.xlu0 %v1861, 34
      %v2365 = vpop.permute.xlu0 %2364
      %2366 = vrot.lane.b32.xlu0 %v1862, 34
      %v2367 = vpop.permute.xlu0 %2366
      %2368 = vrot.lane.b32.xlu0 %v1857, 34
      %v2369 = vpop.permute.xlu0 %2368
      %2370 = vrot.lane.b32.xlu0 %v1878, 34
      %v2371 = vpop.permute.xlu0 %2370
      %2372 = vrot.lane.b32.xlu0 %v1879, 34
      %v2373 = vpop.permute.xlu0 %2372
      %2374 = vrot.lane.b32.xlu0 %v1880, 34
      %v2375 = vpop.permute.xlu0 %2374
      %2376 = vrot.lane.b32.xlu0 %v1881, 34
      %v2377 = vpop.permute.xlu0 %2376
      %2378 = vrot.lane.b32.xlu0 %v1877, 34
      %v2379 = vpop.permute.xlu0 %2378
      %2380 = vrot.lane.b32.xlu0 %v1897, 34
      %v2381 = vpop.permute.xlu0 %2380
      %2382 = vrot.lane.b32.xlu0 %v1898, 34
      %v2383 = vpop.permute.xlu0 %2382
      %2384 = vrot.lane.b32.xlu0 %v1899, 34
      %v2385 = vpop.permute.xlu0 %2384
      %2386 = vrot.lane.b32.xlu0 %v1900, 34
      %v2387 = vpop.permute.xlu0 %2386
      %2388 = vrot.lane.b32.xlu0 %v1896, 34
      %v2389 = vpop.permute.xlu0 %2388
      %2390 = vrot.lane.b32.xlu0 %v1906, 34
      %v2391 = vpop.permute.xlu0 %2390
      %2392 = vrot.lane.b32.xlu0 %v1913, 34
      %v2393 = vpop.permute.xlu0 %2392
      %2394 = vrot.lane.b32.xlu0 %v1914, 34
      %v2395 = vpop.permute.xlu0 %2394
      %2396 = vrot.lane.b32.xlu0 %v1915, 34
      %v2397 = vpop.permute.xlu0 %2396
      %2398 = vrot.lane.b32.xlu0 %v1912, 34
      %v2399 = vpop.permute.xlu0 %2398
      %2400 = vrot.lane.b32.xlu0 %v1922, 34
      %v2401 = vpop.permute.xlu0 %2400
      %2402 = vrot.lane.b32.xlu0 %v1932, 34
      %v2403 = vpop.permute.xlu0 %2402
      %2404 = vrot.lane.b32.xlu0 %v1933, 34
      %v2405 = vpop.permute.xlu0 %2404
      %2406 = vrot.lane.b32.xlu0 %v1934, 34
      %v2407 = vpop.permute.xlu0 %2406
      %2408 = vrot.lane.b32.xlu0 %v1935, 34
      %v2409 = vpop.permute.xlu0 %2408
      %2410 = vrot.lane.b32.xlu0 %v1942, 34
      %v2411 = vpop.permute.xlu0 %2410
      %2412 = vrot.lane.b32.xlu0 %v1952, 34
      %v2413 = vpop.permute.xlu0 %2412
      %2414 = vrot.lane.b32.xlu0 %v1953, 34
      %v2415 = vpop.permute.xlu0 %2414
      %2416 = vrot.lane.b32.xlu0 %v1954, 34
      %v2417 = vpop.permute.xlu0 %2416
      %2418 = vrot.lane.b32.xlu0 %v1955, 34
      %v2419 = vpop.permute.xlu0 %2418
      %2420 = vrot.lane.b32.xlu0 %v1962, 34
      %v2421 = vpop.permute.xlu0 %2420
      %2422 = vrot.lane.b32.xlu0 %v1972, 34
      %v2423 = vpop.permute.xlu0 %2422
      %2424 = vrot.lane.b32.xlu0 %v1973, 34
      %v2425 = vpop.permute.xlu0 %2424
      %2426 = vrot.lane.b32.xlu0 %v1974, 34
      %v2427 = vpop.permute.xlu0 %2426
      %2428 = vrot.lane.b32.xlu0 %v1975, 34
      %v2429 = vpop.permute.xlu0 %2428
      %2430 = vrot.lane.b32.xlu0 %v2134, 34
      %v2431 = vpop.permute.xlu0 %2430
      %2432 = vrot.lane.b32.xlu0 %v2224, 34
      %v2433 = vpop.permute.xlu0 %2432
      %2434 = vrot.lane.b32.xlu0 %v2225, 34
      %v2435 = vpop.permute.xlu0 %2434
      %2436 = vrot.lane.b32.xlu0 %v2226, 34
      %v2437 = vpop.permute.xlu0 %2436
      %2438 = vrot.lane.b32.xlu0 %v2227, 34
      %v2439 = vpop.permute.xlu0 %2438
      %2440 = vrot.lane.b32.xlu0 %v2144, 34
      %v2441 = vpop.permute.xlu0 %2440
      %2442 = vrot.lane.b32.xlu0 %v2228, 34
      %v2443 = vpop.permute.xlu0 %2442
      %2444 = vrot.lane.b32.xlu0 %v2229, 34
      %v2445 = vpop.permute.xlu0 %2444
      %2446 = vrot.lane.b32.xlu0 %v2230, 34
      %v2447 = vpop.permute.xlu0 %2446
      %2448 = vrot.lane.b32.xlu0 %v2231, 34
      %v2449 = vpop.permute.xlu0 %2448
      %2450 = vrot.lane.b32.xlu0 %v2154, 34
      %v2451 = vpop.permute.xlu0 %2450
      %2452 = vrot.lane.b32.xlu0 %v2232, 34
      %v2453 = vpop.permute.xlu0 %2452
      %2454 = vrot.lane.b32.xlu0 %v2233, 34
      %v2455 = vpop.permute.xlu0 %2454
      %2456 = vrot.lane.b32.xlu0 %v2234, 34
      %v2457 = vpop.permute.xlu0 %2456
      %2458 = vrot.lane.b32.xlu0 %v2235, 34
      %v2459 = vpop.permute.xlu0 %2458
      %2460 = vrot.lane.b32.xlu0 %v2164, 34
      %v2461 = vpop.permute.xlu0 %2460
      %2462 = vrot.lane.b32.xlu0 %v2236, 34
      %v2463 = vpop.permute.xlu0 %2462
      %2464 = vrot.lane.b32.xlu0 %v2237, 34
      %v2465 = vpop.permute.xlu0 %2464
      %2466 = vrot.lane.b32.xlu0 %v2238, 34
      %v2467 = vpop.permute.xlu0 %2466
      %2468 = vrot.lane.b32.xlu0 %v2239, 34
      %v2469 = vpop.permute.xlu0 %2468
      %2470 = vrot.lane.b32.xlu0 %v2174, 34
      %v2471 = vpop.permute.xlu0 %2470
      %2472 = vrot.lane.b32.xlu0 %v2240, 34
      %v2473 = vpop.permute.xlu0 %2472
      %2474 = vrot.lane.b32.xlu0 %v2241, 34
      %v2475 = vpop.permute.xlu0 %2474
      %2476 = vrot.lane.b32.xlu0 %v2242, 34
      %v2477 = vpop.permute.xlu0 %2476
      %2478 = vrot.lane.b32.xlu0 %v2243, 34
      %v2479 = vpop.permute.xlu0 %2478
      %2480 = vrot.lane.b32.xlu0 %v2184, 34
      %v2481 = vpop.permute.xlu0 %2480
      %2482 = vrot.lane.b32.xlu0 %v2244, 34
      %v2483 = vpop.permute.xlu0 %2482
      %2484 = vrot.lane.b32.xlu0 %v2245, 34
      %v2485 = vpop.permute.xlu0 %2484
      %2486 = vrot.lane.b32.xlu0 %v2246, 34
      %v2487 = vpop.permute.xlu0 %2486
      %2488 = vrot.lane.b32.xlu0 %v2247, 34
      %v2489 = vpop.permute.xlu0 %2488
      %2490 = vrot.lane.b32.xlu0 %v2194, 34
      %v2491 = vpop.permute.xlu0 %2490
      %2492 = vrot.lane.b32.xlu0 %v2248, 34
      %v2493 = vpop.permute.xlu0 %2492
      %2494 = vrot.lane.b32.xlu0 %v2249, 34
      %v2495 = vpop.permute.xlu0 %2494
      %2496 = vrot.lane.b32.xlu0 %v2250, 34
      %v2497 = vpop.permute.xlu0 %2496
      %2498 = vrot.lane.b32.xlu0 %v2251, 34
      %v2499 = vpop.permute.xlu0 %2498
      %2500 = vrot.lane.b32.xlu0 %v2204, 34
      %v2501 = vpop.permute.xlu0 %2500
      %2502 = vrot.lane.b32.xlu0 %v2252, 34
      %v2503 = vpop.permute.xlu0 %2502
      %2504 = vrot.lane.b32.xlu0 %v2253, 34
      %v2505 = vpop.permute.xlu0 %2504
      %2506 = vrot.lane.b32.xlu0 %v2254, 34
      %v2507 = vpop.permute.xlu0 %2506
      %2508 = vrot.lane.b32.xlu0 %v2255, 34
      %v2509 = vpop.permute.xlu0 %2508
      %2510 = vrot.lane.b32.xlu0 %v2214, 34
      %v2511 = vpop.permute.xlu0 %2510
      %2512 = vrot.lane.b32.xlu0 %v2256, 34
      %v2513 = vpop.permute.xlu0 %2512
      %2514 = vrot.lane.b32.xlu0 %v2257, 34
      %v2515 = vpop.permute.xlu0 %2514
      %2516 = vrot.lane.b32.xlu0 %v2258, 34
      %v2517 = vpop.permute.xlu0 %2516
      %2518 = vrot.lane.b32.xlu0 %v2259, 34
      %v2519 = vpop.permute.xlu0 %2518
      %v2520 = vsel %vm1674, %v2271, %v2273
      %v2521 = vsel %vm1674, %v2273, %v2275
      %v2522 = vsel %vm1674, %v2275, %v2277
      %v2523 = vsel %vm1674, %v2277, %v2279
      %v2524 = vsel %vm1674, %v2281, %v2283
      %v2525 = vsel %vm1674, %v2283, %v2285
      %v2526 = vsel %vm1674, %v2285, %v2287
      %v2527 = vsel %vm1674, %v2287, %v2289
      %v2528 = vsel %vm1674, %v2291, %v2293
      %v2529 = vsel %vm1674, %v2293, %v2295
      %v2530 = vsel %vm1674, %v2295, %v2297
      %v2531 = vsel %vm1674, %v2297, %v2299
      %v2532 = vsel %vm1674, %v2301, %v2303
      %v2533 = vsel %vm1674, %v2303, %v2305
      %v2534 = vsel %vm1674, %v2305, %v2307
      %v2535 = vsel %vm1674, %v2307, %v2309
      %v2536 = vsel %vm1674, %v2311, %v2313
      %v2537 = vsel %vm1674, %v2313, %v2315
      %v2538 = vsel %vm1674, %v2315, %v2317
      %v2539 = vsel %vm1674, %v2317, %v2319
      %v2540 = vsel %vm1674, %v2321, %v2323
      %v2541 = vsel %vm1674, %v2323, %v2325
      %v2542 = vsel %vm1674, %v2325, %v2327
      %v2543 = vsel %vm1674, %v2327, %v2329
      %v2544 = vsel %vm1674, %v2331, %v2333
      %v2545 = vsel %vm1674, %v2333, %v2335
      %v2546 = vsel %vm1674, %v2335, %v2337
      %v2547 = vsel %vm1674, %v2337, %v2339
      %v2548 = vsel %vm1674, %v2341, %v2343
      %v2549 = vsel %vm1674, %v2343, %v2345
      %v2550 = vsel %vm1674, %v2345, %v2347
      %v2551 = vsel %vm1674, %v2347, %v2349
      %v2552 = vsel %vm1674, %v2351, %v2353
      %v2553 = vsel %vm1674, %v2353, %v2355
      %v2554 = vsel %vm1674, %v2355, %v2357
      %v2555 = vsel %vm1674, %v2357, %v2359
      %v2556 = vsel %vm1674, %v2361, %v2363
      %v2557 = vsel %vm1674, %v2363, %v2365
      %v2558 = vsel %vm1674, %v2365, %v2367
      %v2559 = vsel %vm1674, %v2367, %v2369
      %v2560 = vsel %vm1674, %v2371, %v2373
      %v2561 = vsel %vm1674, %v2373, %v2375
      %v2562 = vsel %vm1674, %v2375, %v2377
      %v2563 = vsel %vm1674, %v2377, %v2379
      %v2564 = vsel %vm1674, %v2381, %v2383
      %v2565 = vsel %vm1674, %v2383, %v2385
      %v2566 = vsel %vm1674, %v2385, %v2387
      %v2567 = vsel %vm1674, %v2387, %v2389
      %v2568 = vsel %vm1674, %v2391, %v2393
      %v2569 = vsel %vm1674, %v2393, %v2395
      %v2570 = vsel %vm1674, %v2395, %v2397
      %v2571 = vsel %vm1674, %v2397, %v2399
      %v2572 = vsel %vm1674, %v2401, %v2403
      %v2573 = vsel %vm1674, %v2403, %v2405
      %v2574 = vsel %vm1674, %v2405, %v2407
      %v2575 = vsel %vm1674, %v2407, %v2409
      %v2576 = vsel %vm1674, %v2411, %v2413
      %v2577 = vsel %vm1674, %v2413, %v2415
      %v2578 = vsel %vm1674, %v2415, %v2417
      %v2579 = vsel %vm1674, %v2417, %v2419
      %v2580 = vsel %vm1674, %v2421, %v2423
      %v2581 = vsel %vm1674, %v2423, %v2425
      %v2582 = vsel %vm1674, %v2425, %v2427
      %v2583 = vsel %vm1674, %v2427, %v2429
      %v2584 = vsel %vm1674, %v2431, %v2433
      %v2585 = vsel %vm1674, %v2433, %v2435
      %v2586 = vsel %vm1674, %v2435, %v2437
      %v2587 = vsel %vm1674, %v2437, %v2439
      %v2588 = vsel %vm1674, %v2441, %v2443
      %v2589 = vsel %vm1674, %v2443, %v2445
      %v2590 = vsel %vm1674, %v2445, %v2447
      %v2591 = vsel %vm1674, %v2447, %v2449
      %v2592 = vsel %vm1674, %v2451, %v2453
      %v2593 = vsel %vm1674, %v2453, %v2455
      %v2594 = vsel %vm1674, %v2455, %v2457
      %v2595 = vsel %vm1674, %v2457, %v2459
      %v2596 = vsel %vm1674, %v2461, %v2463
      %v2597 = vsel %vm1674, %v2463, %v2465
      %v2598 = vsel %vm1674, %v2465, %v2467
      %v2599 = vsel %vm1674, %v2467, %v2469
      %v2600 = vsel %vm1674, %v2471, %v2473
      %v2601 = vsel %vm1674, %v2473, %v2475
      %v2602 = vsel %vm1674, %v2475, %v2477
      %v2603 = vsel %vm1674, %v2477, %v2479
      %v2604 = vsel %vm1674, %v2481, %v2483
      %v2605 = vsel %vm1674, %v2483, %v2485
      %v2606 = vsel %vm1674, %v2485, %v2487
      %v2607 = vsel %vm1674, %v2487, %v2489
      %v2608 = vsel %vm1674, %v2491, %v2493
      %v2609 = vsel %vm1674, %v2493, %v2495
      %v2610 = vsel %vm1674, %v2495, %v2497
      %v2611 = vsel %vm1674, %v2497, %v2499
      %v2612 = vsel %vm1674, %v2501, %v2503
      %v2613 = vsel %vm1674, %v2503, %v2505
      %v2614 = vsel %vm1674, %v2505, %v2507
      %v2615 = vsel %vm1674, %v2507, %v2509
      %v2616 = vsel %vm1674, %v2511, %v2513
      %v2617 = vsel %vm1674, %v2513, %v2515
      %v2618 = vsel %vm1674, %v2515, %v2517
      %v2619 = vsel %vm1674, %v2517, %v2519
      %v2721 = vsel %vm1086, %v1175, 0
      %2723 = vmatpush.msra.mxu0 %v2580
      %2724 = vmatpush.msra.mxu0 %v2576
      %2725 = vmatpush.msra.mxu0 %v2572
      %2726 = vmatpush.msra.mxu0 %v2568
      %2727 = vmatpush.msra.mxu0 %v2564
      %2728 = vmatpush.msra.mxu0 %v2560
      %2729 = vmatpush.msra.mxu0 %v2556
      %2730 = vmatpush.msra.mxu0 %v2552
      %2731 = vmatpush.msra.mxu0 %v2548
      %2732 = vmatpush.msra.mxu0 %v2544
      %2733 = vmatpush.msra.mxu0 %v2540
      %2734 = vmatpush.msra.mxu0 %v2536
      %2735 = vmatpush.msra.mxu0 %v2532
      %2736 = vmatpush.msra.mxu0 %v2528
      %2737 = vmatpush.msra.mxu0 %v2524
      %2738 = vmatpush.msra.mxu0 %v2520
      %2739 = vmatmul.f32.gmra.mxu0 %v1174
      %v2740 = vpop.f32.mrf.mxu0
      %v2741 = vadd.f32 %v2263, %v2740
      %2742 = vdwg.mxu0
      %2743 = vmatpush.msra.mxu0 0.0
      %2744 = vmatpush.msra.mxu0 0.0
      %2745 = vmatpush.msra.mxu0 0.0
      %2746 = vmatpush.msra.mxu0 0.0
      %2747 = vmatpush.msra.mxu0 0.0
      %2748 = vmatpush.msra.mxu0 0.0
      %2749 = vmatpush.msra.mxu0 0.0
      %2750 = vmatpush.msra.mxu0 %v2616
      %2751 = vmatpush.msra.mxu0 %v2612
      %2752 = vmatpush.msra.mxu0 %v2608
      %2753 = vmatpush.msra.mxu0 %v2604
      %2754 = vmatpush.msra.mxu0 %v2600
      %2755 = vmatpush.msra.mxu0 %v2596
      %2756 = vmatpush.msra.mxu0 %v2592
      %2757 = vmatpush.msra.mxu0 %v2588
      %2758 = vmatpush.msra.mxu0 %v2584
      %2759 = vmatmul.f32.gmra.mxu0 %v2721
      %v2760 = vpop.f32.mrf.mxu0
      %v2761 = vadd.f32 %v2741, %v2760
      %2762 = vdwg.mxu0
      %2763 = vmatpush.msra.mxu0 %v2581
      %2764 = vmatpush.msra.mxu0 %v2577
      %2765 = vmatpush.msra.mxu0 %v2573
      %2766 = vmatpush.msra.mxu0 %v2569
      %2767 = vmatpush.msra.mxu0 %v2565
      %2768 = vmatpush.msra.mxu0 %v2561
      %2769 = vmatpush.msra.mxu0 %v2557
      %2770 = vmatpush.msra.mxu0 %v2553
      %2771 = vmatpush.msra.mxu0 %v2549
      %2772 = vmatpush.msra.mxu0 %v2545
      %2773 = vmatpush.msra.mxu0 %v2541
      %2774 = vmatpush.msra.mxu0 %v2537
      %2775 = vmatpush.msra.mxu0 %v2533
      %2776 = vmatpush.msra.mxu0 %v2529
      %2777 = vmatpush.msra.mxu0 %v2525
      %2778 = vmatpush.msra.mxu0 %v2521
      %2779 = vmatmul.f32.gmra.mxu0 %v1174
      %v2780 = vpop.f32.mrf.mxu0
      %v2781 = vadd.f32 %v2263, %v2780
      %2782 = vdwg.mxu0
      %2783 = vmatpush.msra.mxu0 0.0
      %2784 = vmatpush.msra.mxu0 0.0
      %2785 = vmatpush.msra.mxu0 0.0
      %2786 = vmatpush.msra.mxu0 0.0
      %2787 = vmatpush.msra.mxu0 0.0
      %2788 = vmatpush.msra.mxu0 0.0
      %2789 = vmatpush.msra.mxu0 0.0
      %2790 = vmatpush.msra.mxu0 %v2617
      %2791 = vmatpush.msra.mxu0 %v2613
      %2792 = vmatpush.msra.mxu0 %v2609
      %2793 = vmatpush.msra.mxu0 %v2605
      %2794 = vmatpush.msra.mxu0 %v2601
      %2795 = vmatpush.msra.mxu0 %v2597
      %2796 = vmatpush.msra.mxu0 %v2593
      %2797 = vmatpush.msra.mxu0 %v2589
      %2798 = vmatpush.msra.mxu0 %v2585
      %2799 = vmatmul.f32.gmra.mxu0 %v2721
      %v2800 = vpop.f32.mrf.mxu0
      %v2801 = vadd.f32 %v2781, %v2800
      %2802 = vdwg.mxu0
      %2803 = vmatpush.msra.mxu0 %v2582
      %2804 = vmatpush.msra.mxu0 %v2578
      %2805 = vmatpush.msra.mxu0 %v2574
      %2806 = vmatpush.msra.mxu0 %v2570
      %2807 = vmatpush.msra.mxu0 %v2566
      %2808 = vmatpush.msra.mxu0 %v2562
      %2809 = vmatpush.msra.mxu0 %v2558
      %2810 = vmatpush.msra.mxu0 %v2554
      %2811 = vmatpush.msra.mxu0 %v2550
      %2812 = vmatpush.msra.mxu0 %v2546
      %2813 = vmatpush.msra.mxu0 %v2542
      %2814 = vmatpush.msra.mxu0 %v2538
      %2815 = vmatpush.msra.mxu0 %v2534
      %2816 = vmatpush.msra.mxu0 %v2530
      %2817 = vmatpush.msra.mxu0 %v2526
      %2818 = vmatpush.msra.mxu0 %v2522
      %2819 = vmatmul.f32.gmra.mxu0 %v1174
      %v2820 = vpop.f32.mrf.mxu0
      %v2821 = vadd.f32 %v2263, %v2820
      %2822 = vdwg.mxu0
      %2823 = vmatpush.msra.mxu0 0.0
      %2824 = vmatpush.msra.mxu0 0.0
      %2825 = vmatpush.msra.mxu0 0.0
      %2826 = vmatpush.msra.mxu0 0.0
      %2827 = vmatpush.msra.mxu0 0.0
      %2828 = vmatpush.msra.mxu0 0.0
      %2829 = vmatpush.msra.mxu0 0.0
      %2830 = vmatpush.msra.mxu0 %v2618
      %2831 = vmatpush.msra.mxu0 %v2614
      %2832 = vmatpush.msra.mxu0 %v2610
      %2833 = vmatpush.msra.mxu0 %v2606
      %2834 = vmatpush.msra.mxu0 %v2602
      %2835 = vmatpush.msra.mxu0 %v2598
      %2836 = vmatpush.msra.mxu0 %v2594
      %2837 = vmatpush.msra.mxu0 %v2590
      %2838 = vmatpush.msra.mxu0 %v2586
      %2839 = vmatmul.f32.gmra.mxu0 %v2721
      %v2840 = vpop.f32.mrf.mxu0
      %v2841 = vadd.f32 %v2821, %v2840
      %2842 = vdwg.mxu0
      %2843 = vmatpush.msra.mxu0 %v2583
      %2844 = vmatpush.msra.mxu0 %v2579
      %2845 = vmatpush.msra.mxu0 %v2575
      %2846 = vmatpush.msra.mxu0 %v2571
      %2847 = vmatpush.msra.mxu0 %v2567
      %2848 = vmatpush.msra.mxu0 %v2563
      %2849 = vmatpush.msra.mxu0 %v2559
      %2850 = vmatpush.msra.mxu0 %v2555
      %2851 = vmatpush.msra.mxu0 %v2551
      %2852 = vmatpush.msra.mxu0 %v2547
      %2853 = vmatpush.msra.mxu0 %v2543
      %2854 = vmatpush.msra.mxu0 %v2539
      %2855 = vmatpush.msra.mxu0 %v2535
      %2856 = vmatpush.msra.mxu0 %v2531
      %2857 = vmatpush.msra.mxu0 %v2527
      %2858 = vmatpush.msra.mxu0 %v2523
      %2859 = vmatmul.f32.gmra.mxu0 %v1174
      %v2860 = vpop.f32.mrf.mxu0
      %v2861 = vadd.f32 %v2263, %v2860
      %2862 = vdwg.mxu0
      %2863 = vmatpush.msra.mxu0 0.0
      %2864 = vmatpush.msra.mxu0 0.0
      %2865 = vmatpush.msra.mxu0 0.0
      %2866 = vmatpush.msra.mxu0 0.0
      %2867 = vmatpush.msra.mxu0 0.0
      %2868 = vmatpush.msra.mxu0 0.0
      %2869 = vmatpush.msra.mxu0 0.0
      %2870 = vmatpush.msra.mxu0 %v2619
      %2871 = vmatpush.msra.mxu0 %v2615
      %2872 = vmatpush.msra.mxu0 %v2611
      %2873 = vmatpush.msra.mxu0 %v2607
      %2874 = vmatpush.msra.mxu0 %v2603
      %2875 = vmatpush.msra.mxu0 %v2599
      %2876 = vmatpush.msra.mxu0 %v2595
      %2877 = vmatpush.msra.mxu0 %v2591
      %2878 = vmatpush.msra.mxu0 %v2587
      %2879 = vmatmul.f32.gmra.mxu0 %v2721
      %v2880 = vpop.f32.mrf.mxu0
      %v2881 = vadd.f32 %v2861, %v2880
      %2882 = vdwg.mxu0
      %v2883 = vmax.f32 %v2761, 0.0
      %v2884 = vmax.f32 %v2801, 0.0
      %v2885 = vmax.f32 %v2841, 0.0
      %v2886 = vmax.f32 %v2881, 0.0
      %v2887 = vld [vmem:[#allocation2] sm:$0xff]
      %v2888 = vld [vmem:[#allocation2 + $0x8] sm:$0xff]
      %v2889 = vld [vmem:[#allocation2 + $0x10] sm:$0xf]
      %vm2890 = vcmp.gt.f32.partialorder %v510, 0.0
      %v2891 = vsel %vm2890, 1, 0
      %v2892 = vperm.slane %v2891, 0
      %v2893 = vperm.slane %v2891, 1
      %v2894 = vperm.slane %v2891, 2
      %v2895 = vperm.slane %v2891, 3
      %vm2896 = vcmp.eq.s32.totalorder %v2892, 1
      %vm2897 = vcmp.eq.s32.totalorder %v2893, 1
      %vm2898 = vcmp.eq.s32.totalorder %v2894, 1
      %vm2899 = vcmp.eq.s32.totalorder %v2895, 1
      %2903 = vst [vmem:[#allocation1] ss:$2 sm:$0xff] %v2887
      %s2904 = scalar_lea.vmem [#allocation1], 16
      %2905 = vst [vmem:[%s2904] ss:$2 sm:$0xff] %v2888
      %s2906 = scalar_lea.vmem [#allocation1], 32
      %2907 = vst [vmem:[%s2906] ss:$2 sm:$0xff] %v2889
      %v2908 = vld.sshfl [vmem:[#allocation1] sm:$0xff pattern:$0x75316420]
      %v2909 = vld.sshfl [vmem:[#allocation1 + $0x8] sm:$0xff pattern:$0x75316420]
      %v2910 = vld.sshfl [vmem:[#allocation1 + $0x10] sm:$0xff pattern:$0x75316420]
      %v2911 = vld.sshfl [vmem:[#allocation1 + $0x18] sm:$0xff pattern:$0x75316420]
      %v2912 = vld.sshfl [vmem:[#allocation1 + $0x20] sm:$0xff pattern:$0x75316420]
      %2913 = vrot.lane.b32.xlu0 %v2908, 17
      %v2914 = vpop.permute.xlu0 %2913
      %2915 = vrot.lane.b32.xlu0 %v2909, 17
      %v2916 = vpop.permute.xlu0 %2915
      %2917 = vrot.lane.b32.xlu0 %v2910, 17
      %v2918 = vpop.permute.xlu0 %2917
      %2919 = vrot.lane.b32.xlu0 %v2911, 17
      %v2920 = vpop.permute.xlu0 %2919
      %2921 = vrot.lane.b32.xlu0 %v2912, 17
      %v2922 = vpop.permute.xlu0 %2921
      %v2923 = vsel %vm747, %v2914, %v2916
      %v2924 = vsel %vm747, %v2916, %v2918
      %v2925 = vsel %vm747, %v2918, %v2920
      %v2926 = vsel %vm747, %v2920, %v2922
      %v2931 = vsel %vm2896, %v2923, -inf
      %v2932 = vsel %vm2897, %v2924, -inf
      %v2933 = vsel %vm2898, %v2925, -inf
      %v2934 = vsel %vm2899, %v2926, -inf
      %v2939 = vrot.slane %v2932, 4
      %v2940 = vrot.slane %v2934, 4
      %v2941 = vsel %vm367, %v2931, %v2939
      %v2942 = vsel %vm367, %v2933, %v2940
      %v2945 = vmax.f32 %v325, %v2941
      %v2946 = vmax.f32 %v326, %v2942
      %v2947 = vld [vmem:[#allocation2] sm:$0xff]
      %v2948 = vld [vmem:[#allocation2 + $0x8] sm:$0xff]
      %v2949 = vld [vmem:[#allocation2 + $0x10] sm:$0xf]
      %vm2950 = vcmp.gt.f32.partialorder %v539, 0.0
      %v2951 = vsel %vm2950, 1, 0
      %v2952 = vperm.slane %v2951, 0
      %v2953 = vperm.slane %v2951, 1
      %v2954 = vperm.slane %v2951, 2
      %v2955 = vperm.slane %v2951, 3
      %vm2956 = vcmp.eq.s32.totalorder %v2952, 1
      %vm2957 = vcmp.eq.s32.totalorder %v2953, 1
      %vm2958 = vcmp.eq.s32.totalorder %v2954, 1
      %vm2959 = vcmp.eq.s32.totalorder %v2955, 1
      %2963 = vst [vmem:[#allocation1] ss:$2 sm:$0xff] %v2947
      %s2964 = scalar_lea.vmem [#allocation1], 16
      %2965 = vst [vmem:[%s2964] ss:$2 sm:$0xff] %v2948
      %s2966 = scalar_lea.vmem [#allocation1], 32
      %2967 = vst [vmem:[%s2966] ss:$2 sm:$0xff] %v2949
      %v2968 = vld.sshfl [vmem:[#allocation1] sm:$0xff pattern:$0x75316420]
      %v2969 = vld.sshfl [vmem:[#allocation1 + $0x8] sm:$0xff pattern:$0x75316420]
      %v2970 = vld.sshfl [vmem:[#allocation1 + $0x10] sm:$0xff pattern:$0x75316420]
      %v2971 = vld.sshfl [vmem:[#allocation1 + $0x18] sm:$0xff pattern:$0x75316420]
      %v2972 = vld.sshfl [vmem:[#allocation1 + $0x20] sm:$0xff pattern:$0x75316420]
      %2973 = vrot.lane.b32.xlu0 %v2968, 16
      %v2974 = vpop.permute.xlu0 %2973
      %2975 = vrot.lane.b32.xlu0 %v2969, 16
      %v2976 = vpop.permute.xlu0 %2975
      %2977 = vrot.lane.b32.xlu0 %v2970, 16
      %v2978 = vpop.permute.xlu0 %2977
      %2979 = vrot.lane.b32.xlu0 %v2971, 16
      %v2980 = vpop.permute.xlu0 %2979
      %2981 = vrot.lane.b32.xlu0 %v2972, 16
      %v2982 = vpop.permute.xlu0 %2981
      %v2983 = vsel %vm718, %v2974, %v2976
      %v2984 = vsel %vm718, %v2976, %v2978
      %v2985 = vsel %vm718, %v2978, %v2980
      %v2986 = vsel %vm718, %v2980, %v2982
      %v2991 = vsel %vm2956, %v2983, -inf
      %v2992 = vsel %vm2957, %v2984, -inf
      %v2993 = vsel %vm2958, %v2985, -inf
      %v2994 = vsel %vm2959, %v2986, -inf
      %v2999 = vrot.slane %v2992, 4
      %v3000 = vrot.slane %v2994, 4
      %v3001 = vsel %vm367, %v2991, %v2999
      %v3002 = vsel %vm367, %v2993, %v3000
      %v3005 = vmax.f32 %v2945, %v3001
      %v3006 = vmax.f32 %v2946, %v3002
      %v3007 = vld [vmem:[#allocation2] sm:$0xff]
      %v3008 = vld [vmem:[#allocation2 + $0x8] sm:$0xff]
      %v3009 = vld [vmem:[#allocation2 + $0x10] sm:$0xf]
      %vm3010 = vcmp.gt.f32.partialorder %v568, 0.0
      %v3011 = vsel %vm3010, 1, 0
      %v3012 = vperm.slane %v3011, 0
      %v3013 = vperm.slane %v3011, 1
      %v3014 = vperm.slane %v3011, 2
      %v3015 = vperm.slane %v3011, 3
      %vm3016 = vcmp.eq.s32.totalorder %v3012, 1
      %vm3017 = vcmp.eq.s32.totalorder %v3013, 1
      %vm3018 = vcmp.eq.s32.totalorder %v3014, 1
      %vm3019 = vcmp.eq.s32.totalorder %v3015, 1
      %3023 = vst [vmem:[#allocation1] ss:$2 sm:$0xff] %v3007
      %s3024 = scalar_lea.vmem [#allocation1], 16
      %3025 = vst [vmem:[%s3024] ss:$2 sm:$0xff] %v3008
      %s3026 = scalar_lea.vmem [#allocation1], 32
      %3027 = vst [vmem:[%s3026] ss:$2 sm:$0xff] %v3009
      %v3028 = vld.sshfl [vmem:[#allocation1] sm:$0xff pattern:$0x75316420]
      %v3029 = vld.sshfl [vmem:[#allocation1 + $0x8] sm:$0xff pattern:$0x75316420]
      %v3030 = vld.sshfl [vmem:[#allocation1 + $0x10] sm:$0xff pattern:$0x75316420]
      %v3031 = vld.sshfl [vmem:[#allocation1 + $0x18] sm:$0xff pattern:$0x75316420]
      %v3032 = vld.sshfl [vmem:[#allocation1 + $0x20] sm:$0xff pattern:$0x75316420]
      %3033 = vrot.lane.b32.xlu0 %v3028, 15
      %v3034 = vpop.permute.xlu0 %3033
      %3035 = vrot.lane.b32.xlu0 %v3029, 15
      %v3036 = vpop.permute.xlu0 %3035
      %3037 = vrot.lane.b32.xlu0 %v3030, 15
      %v3038 = vpop.permute.xlu0 %3037
      %3039 = vrot.lane.b32.xlu0 %v3031, 15
      %v3040 = vpop.permute.xlu0 %3039
      %3041 = vrot.lane.b32.xlu0 %v3032, 15
      %v3042 = vpop.permute.xlu0 %3041
      %v3043 = vsel %vm689, %v3034, %v3036
      %v3044 = vsel %vm689, %v3036, %v3038
      %v3045 = vsel %vm689, %v3038, %v3040
      %v3046 = vsel %vm689, %v3040, %v3042
      %v3051 = vsel %vm3016, %v3043, -inf
      %v3052 = vsel %vm3017, %v3044, -inf
      %v3053 = vsel %vm3018, %v3045, -inf
      %v3054 = vsel %vm3019, %v3046, -inf
      %v3059 = vrot.slane %v3052, 4
      %v3060 = vrot.slane %v3054, 4
      %v3061 = vsel %vm367, %v3051, %v3059
      %v3062 = vsel %vm367, %v3053, %v3060
      %v3065 = vmax.f32 %v3005, %v3061
      %v3066 = vmax.f32 %v3006, %v3062
      %v3067 = vld [vmem:[#allocation2] sm:$0xff]
      %v3068 = vld [vmem:[#allocation2 + $0x8] sm:$0xff]
      %v3069 = vld [vmem:[#allocation2 + $0x10] sm:$0xf]
      %vm3070 = vcmp.gt.f32.partialorder %v597, 0.0
      %v3071 = vsel %vm3070, 1, 0
      %v3072 = vperm.slane %v3071, 0
      %v3073 = vperm.slane %v3071, 1
      %v3074 = vperm.slane %v3071, 2
      %v3075 = vperm.slane %v3071, 3
      %vm3076 = vcmp.eq.s32.totalorder %v3072, 1
      %vm3077 = vcmp.eq.s32.totalorder %v3073, 1
      %vm3078 = vcmp.eq.s32.totalorder %v3074, 1
      %vm3079 = vcmp.eq.s32.totalorder %v3075, 1
      %3083 = vst [vmem:[#allocation1] ss:$2 sm:$0xff] %v3067
      %s3084 = scalar_lea.vmem [#allocation1], 16
      %3085 = vst [vmem:[%s3084] ss:$2 sm:$0xff] %v3068
      %s3086 = scalar_lea.vmem [#allocation1], 32
      %3087 = vst [vmem:[%s3086] ss:$2 sm:$0xff] %v3069
      %v3088 = vld.sshfl [vmem:[#allocation1] sm:$0xff pattern:$0x75316420]
      %v3089 = vld.sshfl [vmem:[#allocation1 + $0x8] sm:$0xff pattern:$0x75316420]
      %v3090 = vld.sshfl [vmem:[#allocation1 + $0x10] sm:$0xff pattern:$0x75316420]
      %v3091 = vld.sshfl [vmem:[#allocation1 + $0x18] sm:$0xff pattern:$0x75316420]
      %v3092 = vld.sshfl [vmem:[#allocation1 + $0x20] sm:$0xff pattern:$0x75316420]
      %3093 = vrot.lane.b32.xlu0 %v3088, 1
      %v3094 = vpop.permute.xlu0 %3093
      %3095 = vrot.lane.b32.xlu0 %v3089, 1
      %v3096 = vpop.permute.xlu0 %3095
      %3097 = vrot.lane.b32.xlu0 %v3090, 1
      %v3098 = vpop.permute.xlu0 %3097
      %3099 = vrot.lane.b32.xlu0 %v3091, 1
      %v3100 = vpop.permute.xlu0 %3099
      %3101 = vrot.lane.b32.xlu0 %v3092, 1
      %v3102 = vpop.permute.xlu0 %3101
      %v3103 = vsel %vm660, %v3094, %v3096
      %v3104 = vsel %vm660, %v3096, %v3098
      %v3105 = vsel %vm660, %v3098, %v3100
      %v3106 = vsel %vm660, %v3100, %v3102
      %v3111 = vsel %vm3076, %v3103, -inf
      %v3112 = vsel %vm3077, %v3104, -inf
      %v3113 = vsel %vm3078, %v3105, -inf
      %v3114 = vsel %vm3079, %v3106, -inf
      %v3119 = vrot.slane %v3112, 4
      %v3120 = vrot.slane %v3114, 4
      %v3121 = vsel %vm367, %v3111, %v3119
      %v3122 = vsel %vm367, %v3113, %v3120
      %v3125 = vmax.f32 %v3065, %v3121
      %v3126 = vmax.f32 %v3066, %v3122
      %v3127 = vld [vmem:[#allocation2 + $0x4] sm:$0xff]
      %v3128 = vld [vmem:[#allocation2 + $0xc] sm:$0xff]
      %v3129 = vld [vmem:[#allocation2 + $0x14] sm:$0xf]
      %vm3130 = vcmp.gt.f32.partialorder %v646, 0.0
      %v3131 = vsel %vm3130, 1, 0
      %v3132 = vperm.slane %v3131, 0
      %v3133 = vperm.slane %v3131, 1
      %v3134 = vperm.slane %v3131, 2
      %v3135 = vperm.slane %v3131, 3
      %vm3136 = vcmp.eq.s32.totalorder %v3132, 1
      %vm3137 = vcmp.eq.s32.totalorder %v3133, 1
      %vm3138 = vcmp.eq.s32.totalorder %v3134, 1
      %vm3139 = vcmp.eq.s32.totalorder %v3135, 1
      %3143 = vst [vmem:[#allocation1] ss:$2 sm:$0xff] %v3127
      %s3144 = scalar_lea.vmem [#allocation1], 16
      %3145 = vst [vmem:[%s3144] ss:$2 sm:$0xff] %v3128
      %s3146 = scalar_lea.vmem [#allocation1], 32
      %3147 = vst [vmem:[%s3146] ss:$2 sm:$0xff] %v3129
      %v3148 = vld.sshfl [vmem:[#allocation1] sm:$0xff pattern:$0x75316420]
      %v3149 = vld.sshfl [vmem:[#allocation1 + $0x8] sm:$0xff pattern:$0x75316420]
      %v3150 = vld.sshfl [vmem:[#allocation1 + $0x10] sm:$0xff pattern:$0x75316420]
      %v3151 = vld.sshfl [vmem:[#allocation1 + $0x18] sm:$0xff pattern:$0x75316420]
      %v3152 = vld.sshfl [vmem:[#allocation1 + $0x20] sm:$0xff pattern:$0x75316420]
      %3153 = vrot.lane.b32.xlu0 %v3148, 127
      %v3154 = vpop.permute.xlu0 %3153
      %3155 = vrot.lane.b32.xlu0 %v3149, 127
      %v3156 = vpop.permute.xlu0 %3155
      %3157 = vrot.lane.b32.xlu0 %v3150, 127
      %v3158 = vpop.permute.xlu0 %3157
      %3159 = vrot.lane.b32.xlu0 %v3151, 127
      %v3160 = vpop.permute.xlu0 %3159
      %3161 = vrot.lane.b32.xlu0 %v3152, 127
      %v3162 = vpop.permute.xlu0 %3161
      %v3163 = vsel %vm611, %v3154, %v3156
      %v3164 = vsel %vm611, %v3156, %v3158
      %v3165 = vsel %vm611, %v3158, %v3160
      %v3166 = vsel %vm611, %v3160, %v3162
      %v3171 = vsel %vm3136, %v3163, -inf
      %v3172 = vsel %vm3137, %v3164, -inf
      %v3173 = vsel %vm3138, %v3165, -inf
      %v3174 = vsel %vm3139, %v3166, -inf
      %v3179 = vrot.slane %v3172, 4
      %v3180 = vrot.slane %v3174, 4
      %v3181 = vsel %vm367, %v3171, %v3179
      %v3182 = vsel %vm367, %v3173, %v3180
      %v3185 = vmax.f32 %v3125, %v3181
      %v3186 = vmax.f32 %v3126, %v3182
      %v3187 = vld [vmem:[#allocation2 + $0x4] sm:$0xff]
      %v3188 = vld [vmem:[#allocation2 + $0xc] sm:$0xff]
      %v3189 = vld [vmem:[#allocation2 + $0x14] sm:$0xf]
      %vm3190 = vcmp.gt.f32.partialorder %v675, 0.0
      %v3191 = vsel %vm3190, 1, 0
      %v3192 = vperm.slane %v3191, 0
      %v3193 = vperm.slane %v3191, 1
      %v3194 = vperm.slane %v3191, 2
      %v3195 = vperm.slane %v3191, 3
      %vm3196 = vcmp.eq.s32.totalorder %v3192, 1
      %vm3197 = vcmp.eq.s32.totalorder %v3193, 1
      %vm3198 = vcmp.eq.s32.totalorder %v3194, 1
      %vm3199 = vcmp.eq.s32.totalorder %v3195, 1
      %3203 = vst [vmem:[#allocation1] ss:$2 sm:$0xff] %v3187
      %s3204 = scalar_lea.vmem [#allocation1], 16
      %3205 = vst [vmem:[%s3204] ss:$2 sm:$0xff] %v3188
      %s3206 = scalar_lea.vmem [#allocation1], 32
      %3207 = vst [vmem:[%s3206] ss:$2 sm:$0xff] %v3189
      %v3208 = vld.sshfl [vmem:[#allocation1] sm:$0xff pattern:$0x75316420]
      %v3209 = vld.sshfl [vmem:[#allocation1 + $0x8] sm:$0xff pattern:$0x75316420]
      %v3210 = vld.sshfl [vmem:[#allocation1 + $0x10] sm:$0xff pattern:$0x75316420]
      %v3211 = vld.sshfl [vmem:[#allocation1 + $0x18] sm:$0xff pattern:$0x75316420]
      %v3212 = vld.sshfl [vmem:[#allocation1 + $0x20] sm:$0xff pattern:$0x75316420]
      %3213 = vrot.lane.b32.xlu0 %v3208, 113
      %v3214 = vpop.permute.xlu0 %3213
      %3215 = vrot.lane.b32.xlu0 %v3209, 113
      %v3216 = vpop.permute.xlu0 %3215
      %3217 = vrot.lane.b32.xlu0 %v3210, 113
      %v3218 = vpop.permute.xlu0 %3217
      %3219 = vrot.lane.b32.xlu0 %v3211, 113
      %v3220 = vpop.permute.xlu0 %3219
      %3221 = vrot.lane.b32.xlu0 %v3212, 113
      %v3222 = vpop.permute.xlu0 %3221
      %v3223 = vsel %vm582, %v3214, %v3216
      %v3224 = vsel %vm582, %v3216, %v3218
      %v3225 = vsel %vm582, %v3218, %v3220
      %v3226 = vsel %vm582, %v3220, %v3222
      %v3231 = vsel %vm3196, %v3223, -inf
      %v3232 = vsel %vm3197, %v3224, -inf
      %v3233 = vsel %vm3198, %v3225, -inf
      %v3234 = vsel %vm3199, %v3226, -inf
      %v3239 = vrot.slane %v3232, 4
      %v3240 = vrot.slane %v3234, 4
      %v3241 = vsel %vm367, %v3231, %v3239
      %v3242 = vsel %vm367, %v3233, %v3240
      %v3245 = vmax.f32 %v3185, %v3241
      %v3246 = vmax.f32 %v3186, %v3242
      %v3247 = vld [vmem:[#allocation2 + $0x4] sm:$0xff]
      %v3248 = vld [vmem:[#allocation2 + $0xc] sm:$0xff]
      %v3249 = vld [vmem:[#allocation2 + $0x14] sm:$0xf]
      %vm3250 = vcmp.gt.f32.partialorder %v704, 0.0
      %v3251 = vsel %vm3250, 1, 0
      %v3252 = vperm.slane %v3251, 0
      %v3253 = vperm.slane %v3251, 1
      %v3254 = vperm.slane %v3251, 2
      %v3255 = vperm.slane %v3251, 3
      %vm3256 = vcmp.eq.s32.totalorder %v3252, 1
      %vm3257 = vcmp.eq.s32.totalorder %v3253, 1
      %vm3258 = vcmp.eq.s32.totalorder %v3254, 1
      %vm3259 = vcmp.eq.s32.totalorder %v3255, 1
      %3263 = vst [vmem:[#allocation1] ss:$2 sm:$0xff] %v3247
      %s3264 = scalar_lea.vmem [#allocation1], 16
      %3265 = vst [vmem:[%s3264] ss:$2 sm:$0xff] %v3248
      %s3266 = scalar_lea.vmem [#allocation1], 32
      %3267 = vst [vmem:[%s3266] ss:$2 sm:$0xff] %v3249
      %v3268 = vld.sshfl [vmem:[#allocation1] sm:$0xff pattern:$0x75316420]
      %v3269 = vld.sshfl [vmem:[#allocation1 + $0x8] sm:$0xff pattern:$0x75316420]
      %v3270 = vld.sshfl [vmem:[#allocation1 + $0x10] sm:$0xff pattern:$0x75316420]
      %v3271 = vld.sshfl [vmem:[#allocation1 + $0x18] sm:$0xff pattern:$0x75316420]
      %v3272 = vld.sshfl [vmem:[#allocation1 + $0x20] sm:$0xff pattern:$0x75316420]
      %3273 = vrot.lane.b32.xlu0 %v3268, 112
      %v3274 = vpop.permute.xlu0 %3273
      %3275 = vrot.lane.b32.xlu0 %v3269, 112
      %v3276 = vpop.permute.xlu0 %3275
      %3277 = vrot.lane.b32.xlu0 %v3270, 112
      %v3278 = vpop.permute.xlu0 %3277
      %3279 = vrot.lane.b32.xlu0 %v3271, 112
      %v3280 = vpop.permute.xlu0 %3279
      %3281 = vrot.lane.b32.xlu0 %v3272, 112
      %v3282 = vpop.permute.xlu0 %3281
      %v3283 = vsel %vm553, %v3274, %v3276
      %v3284 = vsel %vm553, %v3276, %v3278
      %v3285 = vsel %vm553, %v3278, %v3280
      %v3286 = vsel %vm553, %v3280, %v3282
      %v3291 = vsel %vm3256, %v3283, -inf
      %v3292 = vsel %vm3257, %v3284, -inf
      %v3293 = vsel %vm3258, %v3285, -inf
      %v3294 = vsel %vm3259, %v3286, -inf
      %v3299 = vrot.slane %v3292, 4
      %v3300 = vrot.slane %v3294, 4
      %v3301 = vsel %vm367, %v3291, %v3299
      %v3302 = vsel %vm367, %v3293, %v3300
      %v3305 = vmax.f32 %v3245, %v3301
      %v3306 = vmax.f32 %v3246, %v3302
      %v3307 = vld [vmem:[#allocation2 + $0x4] sm:$0xff]
      %v3308 = vld [vmem:[#allocation2 + $0xc] sm:$0xff]
      %v3309 = vld [vmem:[#allocation2 + $0x14] sm:$0xf]
      %vm3310 = vcmp.gt.f32.partialorder %v733, 0.0
      %v3311 = vsel %vm3310, 1, 0
      %v3312 = vperm.slane %v3311, 0
      %v3313 = vperm.slane %v3311, 1
      %v3314 = vperm.slane %v3311, 2
      %v3315 = vperm.slane %v3311, 3
      %vm3316 = vcmp.eq.s32.totalorder %v3312, 1
      %vm3317 = vcmp.eq.s32.totalorder %v3313, 1
      %vm3318 = vcmp.eq.s32.totalorder %v3314, 1
      %vm3319 = vcmp.eq.s32.totalorder %v3315, 1
      %3323 = vst [vmem:[#allocation1] ss:$2 sm:$0xff] %v3307
      %s3324 = scalar_lea.vmem [#allocation1], 16
      %3325 = vst [vmem:[%s3324] ss:$2 sm:$0xff] %v3308
      %s3326 = scalar_lea.vmem [#allocation1], 32
      %3327 = vst [vmem:[%s3326] ss:$2 sm:$0xff] %v3309
      %v3328 = vld.sshfl [vmem:[#allocation1] sm:$0xff pattern:$0x75316420]
      %v3329 = vld.sshfl [vmem:[#allocation1 + $0x8] sm:$0xff pattern:$0x75316420]
      %v3330 = vld.sshfl [vmem:[#allocation1 + $0x10] sm:$0xff pattern:$0x75316420]
      %v3331 = vld.sshfl [vmem:[#allocation1 + $0x18] sm:$0xff pattern:$0x75316420]
      %v3332 = vld.sshfl [vmem:[#allocation1 + $0x20] sm:$0xff pattern:$0x75316420]
      %3333 = vrot.lane.b32.xlu0 %v3328, 111
      %v3334 = vpop.permute.xlu0 %3333
      %3335 = vrot.lane.b32.xlu0 %v3329, 111
      %v3336 = vpop.permute.xlu0 %3335
      %3337 = vrot.lane.b32.xlu0 %v3330, 111
      %v3338 = vpop.permute.xlu0 %3337
      %3339 = vrot.lane.b32.xlu0 %v3331, 111
      %v3340 = vpop.permute.xlu0 %3339
      %3341 = vrot.lane.b32.xlu0 %v3332, 111
      %v3342 = vpop.permute.xlu0 %3341
      %v3343 = vsel %vm524, %v3334, %v3336
      %v3344 = vsel %vm524, %v3336, %v3338
      %v3345 = vsel %vm524, %v3338, %v3340
      %v3346 = vsel %vm524, %v3340, %v3342
      %v3351 = vsel %vm3316, %v3343, -inf
      %v3352 = vsel %vm3317, %v3344, -inf
      %v3353 = vsel %vm3318, %v3345, -inf
      %v3354 = vsel %vm3319, %v3346, -inf
      %v3359 = vrot.slane %v3352, 4
      %v3360 = vrot.slane %v3354, 4
      %v3361 = vsel %vm367, %v3351, %v3359
      %v3362 = vsel %vm367, %v3353, %v3360
      %v3365 = vmax.f32 %v3305, %v3361
      %v3366 = vmax.f32 %v3306, %v3362
      %v3367 = vld [vmem:[%s6] sm:$0xff]
      %3369 = vset.pattern.permute.xlu0 0
      %3370 = vperm.xlu0 %3369, %v502
      %v3371 = vpop.permute.xlu0 %3370
      %3375 = vst [vmem:[#allocation1] ss:$2 sm:$0xff] %v3365
      %s3376 = scalar_lea.vmem [#allocation1], 16
      %3377 = vst [vmem:[%s3376] ss:$2 sm:$0xff] %v3366
      %v3378 = vld.sshfl [vmem:[#allocation1] sm:$0xff pattern:$0x75316420]
      %v3379 = vld.sshfl [vmem:[#allocation1 + $0x8] sm:$0xff pattern:$0x75316420]
      %v3380 = vld.sshfl [vmem:[#allocation1 + $0x10] sm:$0xff pattern:$0x75316420]
      %v3381 = vld.sshfl [vmem:[#allocation1 + $0x18] sm:$0xff pattern:$0x75316420]
      %v3383 = vsel %vm357, %v3367, 0
      %v3385 = vsel %vm367, %v3378, 0
      %v3387 = vsel %vm367, %v3379, 0
      %v3389 = vsel %vm367, %v3380, 0
      %v3391 = vsel %vm367, %v3381, 0
      %3393 = vmatpush.msra.mxu0 0.0
      %3394 = vmatpush.msra.mxu0 0.0
      %3395 = vmatpush.msra.mxu0 0.0
      %3396 = vmatpush.msra.mxu0 0.0
      %3397 = vmatpush.msra.mxu0 0.0
      %3398 = vmatpush.msra.mxu0 0.0
      %3399 = vmatpush.msra.mxu0 0.0
      %3400 = vmatpush.msra.mxu0 0.0
      %3401 = vmatpush.msra.mxu0 0.0
      %3402 = vmatpush.msra.mxu0 0.0
      %3403 = vmatpush.msra.mxu0 0.0
      %3404 = vmatpush.msra.mxu0 0.0
      %3405 = vmatpush.msra.mxu0 0.0
      %3406 = vmatpush.msra.mxu0 0.0
      %3407 = vmatpush.msra.mxu0 0.0
      %3408 = vmatpush.msra.mxu0 %v3385
      %3409 = vmatmul.f32.gmra.mxu0 %v3383
      %v3410 = vpop.f32.mrf.mxu0
      %v3411 = vadd.f32 %v3371, %v3410
      %3412 = vdwg.mxu0
      %3413 = vmatpush.msra.mxu0 0.0
      %3414 = vmatpush.msra.mxu0 0.0
      %3415 = vmatpush.msra.mxu0 0.0
      %3416 = vmatpush.msra.mxu0 0.0
      %3417 = vmatpush.msra.mxu0 0.0
      %3418 = vmatpush.msra.mxu0 0.0
      %3419 = vmatpush.msra.mxu0 0.0
      %3420 = vmatpush.msra.mxu0 0.0
      %3421 = vmatpush.msra.mxu0 0.0
      %3422 = vmatpush.msra.mxu0 0.0
      %3423 = vmatpush.msra.mxu0 0.0
      %3424 = vmatpush.msra.mxu0 0.0
      %3425 = vmatpush.msra.mxu0 0.0
      %3426 = vmatpush.msra.mxu0 0.0
      %3427 = vmatpush.msra.mxu0 0.0
      %3428 = vmatpush.msra.mxu0 %v3387
      %3429 = vmatmul.f32.gmra.mxu0 %v3383
      %v3430 = vpop.f32.mrf.mxu0
      %v3431 = vadd.f32 %v3371, %v3430
      %3432 = vdwg.mxu0
      %3433 = vmatpush.msra.mxu0 0.0
      %3434 = vmatpush.msra.mxu0 0.0
      %3435 = vmatpush.msra.mxu0 0.0
      %3436 = vmatpush.msra.mxu0 0.0
      %3437 = vmatpush.msra.mxu0 0.0
      %3438 = vmatpush.msra.mxu0 0.0
      %3439 = vmatpush.msra.mxu0 0.0
      %3440 = vmatpush.msra.mxu0 0.0
      %3441 = vmatpush.msra.mxu0 0.0
      %3442 = vmatpush.msra.mxu0 0.0
      %3443 = vmatpush.msra.mxu0 0.0
      %3444 = vmatpush.msra.mxu0 0.0
      %3445 = vmatpush.msra.mxu0 0.0
      %3446 = vmatpush.msra.mxu0 0.0
      %3447 = vmatpush.msra.mxu0 0.0
      %3448 = vmatpush.msra.mxu0 %v3389
      %3449 = vmatmul.f32.gmra.mxu0 %v3383
      %v3450 = vpop.f32.mrf.mxu0
      %v3451 = vadd.f32 %v3371, %v3450
      %3452 = vdwg.mxu0
      %3453 = vmatpush.msra.mxu0 0.0
      %3454 = vmatpush.msra.mxu0 0.0
      %3455 = vmatpush.msra.mxu0 0.0
      %3456 = vmatpush.msra.mxu0 0.0
      %3457 = vmatpush.msra.mxu0 0.0
      %3458 = vmatpush.msra.mxu0 0.0
      %3459 = vmatpush.msra.mxu0 0.0
      %3460 = vmatpush.msra.mxu0 0.0
      %3461 = vmatpush.msra.mxu0 0.0
      %3462 = vmatpush.msra.mxu0 0.0
      %3463 = vmatpush.msra.mxu0 0.0
      %3464 = vmatpush.msra.mxu0 0.0
      %3465 = vmatpush.msra.mxu0 0.0
      %3466 = vmatpush.msra.mxu0 0.0
      %3467 = vmatpush.msra.mxu0 0.0
      %3468 = vmatpush.msra.mxu0 %v3391
      %3469 = vmatmul.f32.gmra.mxu0 %v3383
      %v3470 = vpop.f32.mrf.mxu0
      %v3471 = vadd.f32 %v3371, %v3470
      %3472 = vdwg.mxu0
      %v3473 = vmax.f32 %v3411, 0.0
      %v3474 = vmax.f32 %v3431, 0.0
      %v3475 = vmax.f32 %v3451, 0.0
      %v3476 = vmax.f32 %v3471, 0.0
      %3477 = vst [vmem:[%s312] sm:$0xff] %v480
      %3478 = vst [vmem:[%s312 + $0x8] sm:$0xff] %v481
      %s3479 = scalar_lea.vmem %s312, 64
      %3480 = vst [vmem:[%s3479] sm:$0xff] %v482
      %3481 = vst [vmem:[%s3479 + $0x8] sm:$0xff] %v483
      %3482 = vst [vmem:[%s312 + $0x10] sm:$0xff] %v1170
      %3483 = vst [vmem:[%s312 + $0x18] sm:$0xff] %v1171
      %3484 = vst [vmem:[%s3479 + $0x10] sm:$0xff] %v1172
      %3485 = vst [vmem:[%s3479 + $0x18] sm:$0xff] %v1173
      %3486 = vst [vmem:[%s312 + $0x20] sm:$0xff] %v2883
      %3487 = vst [vmem:[%s312 + $0x28] sm:$0xff] %v2884
      %3488 = vst [vmem:[%s3479 + $0x20] sm:$0xff] %v2885
      %3489 = vst [vmem:[%s3479 + $0x28] sm:$0xff] %v2886
      %3490 = vst [vmem:[%s312 + $0x30] sm:$0xff] %v3473
      %3491 = vst [vmem:[%s312 + $0x38] sm:$0xff] %v3474
      %3492 = vst [vmem:[%s3479 + $0x30] sm:$0xff] %v3475
      %3493 = vst [vmem:[%s3479 + $0x38] sm:$0xff] %v3476
      %s3494 = smul.u32 2, %s19
      %p3495 = scmp.lt.s32.totalorder %s3494, 3
      %s3496 = scalar_select %p3495, %s3494, 3
      %s3497 = smul.addr %s3496, 8
      %s3498 = smul.addr %s3497, 8
      %s3499 = scalar_lea.vmem %s8, %s3498
      // Predicated region
      $region53: #{inception_block_a.1} parent=51 // pred_check
        %p3500 = pneg %p210
      $region54: #{inception_block_a.1} parent=51 // pred_check_branch
        %3502 = sbr.rel (%p3500) target = $region56
      $region55: #{inception_block_a.1} parent=51 // pred_region
        %s3503 = smul.u32 2, %s19
      $region56: #{inception_block_a.1} parent=51 // pred_fallthru
        _
    $region52: #{inception_block_a.1} parent=5 // pred_fallthru
      _
    %p3504 = scmp.le.s32.totalorder 2, %s14
    // Predicated region
    $region57: #{inception_block_a.1} parent=5 // pred_check
      %p3505 = pneg %p3504
    $region58: #{inception_block_a.1} parent=5 // pred_check_branch
      %3507 = sbr.rel (%p3505) target = $region60
    $region59: #{inception_block_a.1} parent=5 // pred_region
      %s3508 = ssub.s32 %s14, 2
      // Predicated region
      $region61: #{inception_block_a.1} parent=59 // pred_check
        %p3509 = pneg %p216
      $region62: #{inception_block_a.1} parent=59 // pred_check_branch
        %3511 = sbr.rel (%p3509) target = $region64
      $region63: #{inception_block_a.1} parent=59 // pred_region
        %s3512 = smul.u32 2, %s20
        %p3513 = scmp.lt.s32.totalorder %s3512, 3
        %s3514 = scalar_select %p3513, %s3512, 3
        %s3515 = smul.addr %s3514, 8
        %s3516 = smul.addr %s3515, 8
        %s3517 = scalar_lea.vmem %s8, %s3516
      $region64: #{inception_block_a.1} parent=59 // pred_fallthru
        _
    $region60: #{inception_block_a.1} parent=5 // pred_fallthru
      _
  $region6: #{inception_block_a.1} parent=0 // loop_footer
    %s18 = sadd.s32 1, %s14
  $region7: #{inception_block_a.1} parent=0 // loop_footer_branch
    %13 = sbr.rel target = $region3
  $region8: #{inception_block_a.1} parent=0 // loop_exit
    _

</llo_original>
